<compile_context>
chip_gen: v5e
topology: v5e:2x2
jax: 0.10.0
libtpu: 0.0.40
codegen_flags: <defaults>
</compile_context>

<pallas_src>
import numpy as np
import jax
import jax.numpy as jnp
from jax.experimental import pallas as pl
from jax.experimental.pallas import tpu as pltpu

# ---------------- configuration (module defaults, W shrunk for a small test) ---
D = 8
W = 64
INPUT_CH = 3
INPUT_CH_VIEWS = 3
INPUT_CH_TIME = 1
OUTPUT_CH = 4
SKIPS = (4,)
ZERO_CANONICAL = True

N = 256                          # number of sample points
LANES = 128                      # lane-dense output width (out / dx padded to 128 lanes)
IN0 = INPUT_CH + INPUT_CH_TIME   # 4 = [pts | t]


# ---------------- parameter init (deterministic, PyTorch-Linear-like) ----------
def _init_linear(key, fan_in, fan_out):
    kw, kb = jax.random.split(key)
    bound = 1.0 / np.sqrt(fan_in)
    w = jax.random.uniform(kw, (fan_in, fan_out), jnp.float32, -bound, bound)
    b = jax.random.uniform(kb, (fan_out,), jnp.float32, -bound, bound)
    return w, b


def init_time_net(key):
    """create_time_net(): D linears (skip layer widened) + final Linear(W, 3)."""
    keys = jax.random.split(key, D + 1)
    layers = [_init_linear(keys[0], INPUT_CH + INPUT_CH_TIME, W)]
    for i in range(D - 1):
        in_ch = W + (INPUT_CH if i in SKIPS else 0)
        layers.append(_init_linear(keys[i + 1], in_ch, W))
    final = _init_linear(keys[D], W, 3)
    return layers, final


def init_occ_net(key):
    """NeRFOriginal (use_viewdirs=False): pts_linears + output_linear(W, output_ch)."""
    keys = jax.random.split(key, D + 1)
    layers = [_init_linear(keys[0], INPUT_CH, W)]
    for i in range(D - 1):
        in_ch = W + (INPUT_CH if i in SKIPS else 0)
        layers.append(_init_linear(keys[i + 1], in_ch, W))
    final = _init_linear(keys[D], W, OUTPUT_CH)
    return layers, final


# ---------------- one-time parameter packing (hoisted out of forward) -----------
def pack_params(time_params, occ_params):
    """Pack / zero-pad parameters once.

    * hidden weights/biases stacked as (D-1, W, W) / (D-1, 1, W) and indexed
      per layer inside the kernel (keeps only one (W,W) tile live at a time).
    * skip-layer weights are split: rows multiplying the concatenated pts go
      into w_skip*, rows multiplying h stay in w_hid (no lane concats).
    * every "pts" container gets a zero row for the t lane so the kernel can
      always multiply by the single (N, 4) [pts|t] input; every "dx" container
      is zero-padded to 128 rows to match the lane-dense dx slab.
    * output weights/biases are zero-padded to 128 lanes -> lane-dense stores.
    """
    t_layers, t_final = time_params
    o_layers, o_final = occ_params

    def split_hidden(layers):
        w_hid, b_hid, w_skip = [], [], []
        for j in range(1, D):
            w, b = layers[j]
            if (j - 1) in SKIPS:               # concat order is [pts, h]
                w_skip.append(w[:INPUT_CH])
                w_hid.append(w[INPUT_CH:])
            else:
                w_hid.append(w)
            b_hid.append(b[None, :])
        if not w_skip:                         # latent SKIPS=() safety: dummy, never used
            w_skip = [jnp.zeros((INPUT_CH, W), jnp.float32)]
        return jnp.stack(w_hid), jnp.stack(b_hid), jnp.stack(w_skip)

    def pad_axis(a, axis, size):
        cfg = [(0, 0)] * a.ndim
        cfg[axis] = (0, size - a.shape[axis])
        return jnp.pad(a, cfg)

    # ---- time net (query_time) ----
    tw_in, tb_in = t_layers[0]                 # (4, W), (W,)
    tw_hid, tb_hid, tw_skip = split_hidden(t_layers)
    tw_out, tb_out = t_final                   # (W, 3), (3,)
    time_p = dict(
        w_in=tw_in,                            # (4, W)
        b_in=tb_in[None, :],                   # (1, W)
        w_hid=tw_hid,                          # (D-1, W, W)
        b_hid=tb_hid,                          # (D-1, 1, W)
        w_skip=pad_axis(tw_skip, 1, IN0),      # (n_skips, 4, W) — zero t-row
        w_out=pad_axis(tw_out, 1, LANES),      # (W, 128) — dx lands in lanes 0:3
        b_out=pad_axis(tb_out[None, :], 1, LANES),   # (1, 128)
    )

    # ---- occ net (NeRFOriginal, use_viewdirs=False) ----
    ow_in, ob_in = o_layers[0]                 # (3, W), (W,)
    ow_hid, ob_hid, ow_skip = split_hidden(o_layers)
    ow_out, ob_out = o_final                   # (W, OUTPUT_CH), (OUTPUT_CH,)
    occ_p = dict(
        w_in_pts=pad_axis(ow_in, 0, IN0),      # (4, W)   multiplies [pts|t]
        w_in_dx=pad_axis(ow_in, 0, LANES),     # (128, W) multiplies the dx slab
        b_in=ob_in[None, :],                   # (1, W)
        w_hid=ow_hid,                          # (D-1, W, W)
        b_hid=ob_hid,                          # (D-1, 1, W)
        w_skip_pts=pad_axis(ow_skip, 1, IN0),  # (n_skips, 4, W)
        w_skip_dx=pad_axis(ow_skip, 1, LANES), # (n_skips, 128, W)
        w_out=pad_axis(ow_out, 1, LANES),      # (W, 128) — out in lanes 0:OUTPUT_CH
        b_out=pad_axis(ob_out[None, :], 1, LANES),   # (1, 128)
    )
    return dict(time=time_p, occ=occ_p)


# ---------------- Pallas kernels ------------------------------------------------
def _skip_mlp(z0, skip_fns, w_hid_ref, b_hid_ref, w_out_ref, b_out_ref):
    """Shared D-layer skip MLP (layer-0 pre-activation given; static unroll).

    Per-layer weights are indexed out of the stacked refs (w_hid_ref[j-1]) so
    only one (W, W) tile is live at a time — no full-stack vreg footprint.
    skip_fns[k]() lazily computes the k-th skip contribution (TN, W).
    """
    h = jnp.maximum(z0, 0.0)
    skip_k = 0
    for j in range(1, D):
        z = jnp.dot(h, w_hid_ref[j - 1], preferred_element_type=jnp.float32)
        if (j - 1) in SKIPS:                   # previous layer triggered cat([pts, h])
            z = z + skip_fns[skip_k]()
            skip_k += 1
        h = jnp.maximum(z + b_hid_ref[j - 1], 0.0)
    return jnp.dot(h, w_out_ref[...], preferred_element_type=jnp.float32) + b_out_ref[...]


def _fused_kernel(pts_t_ref,
                  tw_in_ref, tb_in_ref, tw_hid_ref, tb_hid_ref, tw_skip_ref,
                  tw_out_ref, tb_out_ref,
                  ow_in_pts_ref, ow_in_dx_ref, ob_in_ref, ow_hid_ref, ob_hid_ref,
                  ow_skip_pts_ref, ow_skip_dx_ref, ow_out_ref, ob_out_ref,
                  out_ref, dx_ref):
    """query_time() -> dx, then NeRFOriginal pts-MLP on (pts + dx), in one kernel."""
    pts_t = pts_t_ref[...]                     # (TN, 4) = [pts | t]
    f32 = jnp.float32

    # ---- time net: dx slab (TN, 128), dx in lanes 0:3 (zero-padded output weight) ----
    z0 = jnp.dot(pts_t, tw_in_ref[...], preferred_element_type=f32) + tb_in_ref[...]
    t_skips = [(lambda k=k: jnp.dot(pts_t, tw_skip_ref[k], preferred_element_type=f32))
               for k in range(len(SKIPS))]
    dx = _skip_mlp(z0, t_skips, tw_hid_ref, tb_hid_ref, tw_out_ref, tb_out_ref)
    dx_ref[...] = dx                           # lane-dense store

    # ---- occ net on pts_for_occ = pts + dx (expressed via zero-padded weights) ----
    z0o = (jnp.dot(pts_t, ow_in_pts_ref[...], preferred_element_type=f32)
           + jnp.dot(dx, ow_in_dx_ref[...], preferred_element_type=f32)
           + ob_in_ref[...])
    o_skips = [(lambda k=k: jnp.dot(pts_t, ow_skip_pts_ref[k], preferred_element_type=f32)
                            + jnp.dot(dx, ow_skip_dx_ref[k], preferred_element_type=f32))
               for k in range(len(SKIPS))]
    out_ref[...] = _skip_mlp(z0o, o_skips, ow_hid_ref, ob_hid_ref, ow_out_ref, ob_out_ref)


def _occ_only_kernel(pts_t_ref, ow_in_pts_ref, ob_in_ref, ow_hid_ref, ob_hid_ref,
                     ow_skip_pts_ref, ow_out_ref, ob_out_ref, out_ref):
    """Canonical-time path: occ MLP only (dx == 0, pts_for_occ == input_pts)."""
    pts_t = pts_t_ref[...]                     # (TN, 4); zero t-row in weights kills t
    f32 = jnp.float32
    z0 = jnp.dot(pts_t, ow_in_pts_ref[...], preferred_element_type=f32) + ob_in_ref[...]
    skips = [(lambda k=k: jnp.dot(pts_t, ow_skip_pts_ref[k], preferred_element_type=f32))
             for k in range(len(SKIPS))]
    out_ref[...] = _skip_mlp(z0, skips, ow_hid_ref, ob_hid_ref, ow_out_ref, ob_out_ref)


# ---------------- pallas_call wrappers -------------------------------------------
def _full_spec(shape):
    return pl.BlockSpec(shape, lambda i, _z=(0,) * len(shape): _z)


def _row_tile(n):
    """Generation-aware row tile: one tile per TensorCore.
    v5e/v6e (single TC) -> grid=1; v7x/v5p/v4 (two TCs) -> grid=2 'parallel'."""
    try:
        kind = jax.devices()[0].device_kind.lower()
    except Exception:
        kind = ""
    single_tc = any(tag in kind for tag in
                    ("v5e", "v5 lite", "v5lite", "v6e", "v6 lite", "v6lite", "lite"))
    tiles = 1 if single_tc else 2
    if n % tiles != 0 or (n // tiles) % 8 != 0:
        tiles = 1
    return n // tiles


@jax.jit
def run_fused(pts_t, packed):
    """Non-canonical time: fused time-MLP + occ-MLP. Returns (out (N,4), dx (N,3))."""
    tp, op = packed["time"], packed["occ"]
    n = pts_t.shape[0]
    tn = _row_tile(n)
    args = (pts_t,
            tp["w_in"], tp["b_in"], tp["w_hid"], tp["b_hid"], tp["w_skip"],
            tp["w_out"], tp["b_out"],
            op["w_in_pts"], op["w_in_dx"], op["b_in"], op["w_hid"], op["b_hid"],
            op["w_skip_pts"], op["w_skip_dx"], op["w_out"], op["b_out"])
    in_specs = [pl.BlockSpec((tn, IN0), lambda i: (i, 0))]
    in_specs += [_full_spec(a.shape) for a in args[1:]]
    out_pad, dx_pad = pl.pallas_call(
        _fused_kernel,
        out_shape=(jax.ShapeDtypeStruct((n, LANES), jnp.float32),
                   jax.ShapeDtypeStruct((n, LANES), jnp.float32)),
        grid=(n // tn,),
        in_specs=in_specs,
        out_specs=(pl.BlockSpec((tn, LANES), lambda i: (i, 0)),
                   pl.BlockSpec((tn, LANES), lambda i: (i, 0))),
        compiler_params=pltpu.CompilerParams(dimension_semantics=("parallel",)),
    )(*args)
    return out_pad[:, :OUTPUT_CH], dx_pad[:, :3]


@jax.jit
def run_occ_only(pts_t, packed):
    """Canonical time (zero_canonical): occ MLP only. Returns out (N, OUTPUT_CH)."""
    op = packed["occ"]
    n = pts_t.shape[0]
    tn = _row_tile(n)
    args = (pts_t, op["w_in_pts"], op["b_in"], op["w_hid"], op["b_hid"],
            op["w_skip_pts"], op["w_out"], op["b_out"])
    in_specs = [pl.BlockSpec((tn, IN0), lambda i: (i, 0))]
    in_specs += [_full_spec(a.shape) for a in args[1:]]
    out_pad = pl.pallas_call(
        _occ_only_kernel,
        out_shape=jax.ShapeDtypeStruct((n, LANES), jnp.float32),
        grid=(n // tn,),
        in_specs=in_specs,
        out_specs=pl.BlockSpec((tn, LANES), lambda i: (i, 0)),
        compiler_params=pltpu.CompilerParams(dimension_semantics=("parallel",)),
    )(*args)
    return out_pad[:, :OUTPUT_CH]


# ---------------- DirectTemporalNeRF.forward ------------------------------------
def direct_temporal_nerf_forward(x, ts, packed, zero_canonical=ZERO_CANONICAL):
    input_pts = x[:, :INPUT_CH]
    # input_views = x[:, INPUT_CH:INPUT_CH + INPUT_CH_VIEWS]  # unused: use_viewdirs=False
    t = ts[0]                                                  # (N, input_ch_time)

    t_np = np.asarray(t[:, :1])
    assert len(np.unique(t_np)) == 1, "Only accepts all points from same time"
    cur_time = float(t_np[0, 0])

    pts_t = jnp.concatenate([input_pts, t[:, :INPUT_CH_TIME]], axis=-1)   # (N, 4)

    if cur_time == 0.0 and zero_canonical:
        dx = jnp.zeros((x.shape[0], 3), jnp.float32)
        out = run_occ_only(pts_t, packed)
    else:
        out, dx = run_fused(pts_t, packed)     # fused: time MLP -> pts+dx -> occ MLP
    return out, dx


# ---------------- pure-JAX reference (for correctness check) --------------------
def _ref_mlp(h0, pts, layers, final):
    h = h0
    hp = jax.lax.Precision.HIGHEST
    for i, (w, b) in enumerate(layers):
        h = jnp.maximum(jnp.dot(h, w, precision=hp) + b, 0.0)
        if i in SKIPS:
            h = jnp.concatenate([pts, h], axis=-1)
    w, b = final
    return jnp.dot(h, w, precision=hp) + b


def ref_forward(x, ts, raw_params, zero_canonical=ZERO_CANONICAL):
    input_pts = x[:, :INPUT_CH]
    t = ts[0]
    cur_time = float(np.asarray(t)[0, 0])
    if cur_time == 0.0 and zero_canonical:
        dx = jnp.zeros_like(input_pts[:, :3])
        pts_for_occ = input_pts
    else:
        layers, final = raw_params["time"]
        dx = _ref_mlp(jnp.concatenate([input_pts, t], axis=-1), input_pts, layers, final)
        pts_for_occ = input_pts[:, :3] + dx          # embed_fn == identity
    layers, final = raw_params["occ"]
    out = _ref_mlp(pts_for_occ, pts_for_occ, layers, final)
    return out, dx


# ---------------- main ----------------------------------------------------------
if __name__ == "__main__":
    key = jax.random.PRNGKey(0)
    k_x, k_time, k_occ = jax.random.split(key, 3)

    raw_params = {"time": init_time_net(k_time), "occ": init_occ_net(k_occ)}
    packed = pack_params(raw_params["time"], raw_params["occ"])   # packed ONCE at init

    x = jax.random.normal(k_x, (N, INPUT_CH + INPUT_CH_VIEWS), jnp.float32)
    ts = jnp.full((1, N, INPUT_CH_TIME), 0.5, jnp.float32)        # non-canonical time
    ts0 = jnp.zeros((1, N, INPUT_CH_TIME), jnp.float32)           # canonical time

    # non-canonical path: single fused Pallas kernel (time MLP + occ MLP)
    out, dx = direct_temporal_nerf_forward(x, ts, packed)
    out = jax.block_until_ready(out)
    dx = jax.block_until_ready(dx)

    out_ref, dx_ref = ref_forward(x, ts, raw_params)
    # kernel uses default MXU precision; reference uses Precision.HIGHEST
    np.testing.assert_allclose(np.asarray(dx), np.asarray(dx_ref), rtol=2e-2, atol=2e-2)
    np.testing.assert_allclose(np.asarray(out), np.asarray(out_ref), rtol=2e-2, atol=2e-2)

    # canonical (zero-time) path: occ-only kernel, dx must be exactly zero
    out0, dx0 = direct_temporal_nerf_forward(x, ts0, packed)
    out0 = jax.block_until_ready(out0)
    dx0 = jax.block_until_ready(dx0)
    assert np.all(np.asarray(dx0) == 0.0)
    out0_ref, _ = ref_forward(x, ts0, raw_params)
    np.testing.assert_allclose(np.asarray(out0), np.asarray(out0_ref), rtol=2e-2, atol=2e-2)

    assert out.shape == (N, OUTPUT_CH) and dx.shape == (N, 3)
    print("KERNEL_OK")
</pallas_src>

<mosaic_0001>
module attributes {stable_mosaic.version = 11 : i64} {
  func.func @_fused_kernel(%arg0: i32, %arg1: memref<128x4xf32, #tpu.memory_space<vmem>>, %arg2: memref<4x64xf32, #tpu.memory_space<vmem>>, %arg3: memref<1x64xf32, #tpu.memory_space<vmem>>, %arg4: memref<7x64x64xf32, #tpu.memory_space<vmem>>, %arg5: memref<7x1x64xf32, #tpu.memory_space<vmem>>, %arg6: memref<1x4x64xf32, #tpu.memory_space<vmem>>, %arg7: memref<64x128xf32, #tpu.memory_space<vmem>>, %arg8: memref<1x128xf32, #tpu.memory_space<vmem>>, %arg9: memref<4x64xf32, #tpu.memory_space<vmem>>, %arg10: memref<128x64xf32, #tpu.memory_space<vmem>>, %arg11: memref<1x64xf32, #tpu.memory_space<vmem>>, %arg12: memref<7x64x64xf32, #tpu.memory_space<vmem>>, %arg13: memref<7x1x64xf32, #tpu.memory_space<vmem>>, %arg14: memref<1x4x64xf32, #tpu.memory_space<vmem>>, %arg15: memref<1x128x64xf32, #tpu.memory_space<vmem>>, %arg16: memref<64x128xf32, #tpu.memory_space<vmem>>, %arg17: memref<1x128xf32, #tpu.memory_space<vmem>>, %arg18: memref<128x128xf32, #tpu.memory_space<vmem>>, %arg19: memref<128x128xf32, #tpu.memory_space<vmem>>) attributes {dimension_semantics = [#tpu.dimension_semantics<parallel>], iteration_bounds = array<i64: 2>, scalar_prefetch = 0 : i64, scratch_operands = 0 : i64, tpu.core_type = #tpu.core_type<tc>, window_params = [{transform_indices = @transform_0, window_bounds = array<i64: 128, 4>}, {pipeline_mode = #tpu.pipeline_mode<synchronous>, transform_indices = @transform_1, window_bounds = array<i64: 4, 64>}, {pipeline_mode = #tpu.pipeline_mode<synchronous>, transform_indices = @transform_2, window_bounds = array<i64: 1, 64>}, {pipeline_mode = #tpu.pipeline_mode<synchronous>, transform_indices = @transform_3, window_bounds = array<i64: 7, 64, 64>}, {pipeline_mode = #tpu.pipeline_mode<synchronous>, transform_indices = @transform_4, window_bounds = array<i64: 7, 1, 64>}, {pipeline_mode = #tpu.pipeline_mode<synchronous>, transform_indices = @transform_5, window_bounds = array<i64: 1, 4, 64>}, {pipeline_mode = #tpu.pipeline_mode<synchronous>, transform_indices = @transform_6, window_bounds = array<i64: 64, 128>}, {pipeline_mode = #tpu.pipeline_mode<synchronous>, transform_indices = @transform_7, window_bounds = array<i64: 1, 128>}, {pipeline_mode = #tpu.pipeline_mode<synchronous>, transform_indices = @transform_8, window_bounds = array<i64: 4, 64>}, {pipeline_mode = #tpu.pipeline_mode<synchronous>, transform_indices = @transform_9, window_bounds = array<i64: 128, 64>}, {pipeline_mode = #tpu.pipeline_mode<synchronous>, transform_indices = @transform_10, window_bounds = array<i64: 1, 64>}, {pipeline_mode = #tpu.pipeline_mode<synchronous>, transform_indices = @transform_11, window_bounds = array<i64: 7, 64, 64>}, {pipeline_mode = #tpu.pipeline_mode<synchronous>, transform_indices = @transform_12, window_bounds = array<i64: 7, 1, 64>}, {pipeline_mode = #tpu.pipeline_mode<synchronous>, transform_indices = @transform_13, window_bounds = array<i64: 1, 4, 64>}, {pipeline_mode = #tpu.pipeline_mode<synchronous>, transform_indices = @transform_14, window_bounds = array<i64: 1, 128, 64>}, {pipeline_mode = #tpu.pipeline_mode<synchronous>, transform_indices = @transform_15, window_bounds = array<i64: 64, 128>}, {pipeline_mode = #tpu.pipeline_mode<synchronous>, transform_indices = @transform_16, window_bounds = array<i64: 1, 128>}, {transform_indices = @transform_17, window_bounds = array<i64: 128, 128>}, {transform_indices = @transform_18, window_bounds = array<i64: 128, 128>}]} {
    %c0 = arith.constant 0 : index
    %c0_0 = arith.constant 0 : index
    %0 = vector.load %arg1[%c0, %c0_0] : memref<128x4xf32, #tpu.memory_space<vmem>>, vector<128x4xf32>
    %c0_1 = arith.constant 0 : index
    %c0_2 = arith.constant 0 : index
    %1 = vector.load %arg2[%c0_1, %c0_2] : memref<4x64xf32, #tpu.memory_space<vmem>>, vector<4x64xf32>
    %cst = arith.constant dense<0.000000e+00> : vector<128x64xf32>
    %2 = tpu.matmul %0, %1, %cst {dimension_numbers = #tpu.dot_dimension_numbers<[1], [0], [0], [1], [0, 0, 1, 1], [], []>} : vector<128x4xf32>, vector<4x64xf32>, vector<128x64xf32> -> vector<128x64xf32>
    %c0_3 = arith.constant 0 : index
    %c0_4 = arith.constant 0 : index
    %3 = vector.load %arg3[%c0_3, %c0_4] : memref<1x64xf32, #tpu.memory_space<vmem>>, vector<1x64xf32>
    %4 = vector.broadcast %3 : vector<1x64xf32> to vector<128x64xf32>
    %5 = arith.addf %2, %4 : vector<128x64xf32>
    %cst_5 = arith.constant 0.000000e+00 : f32
    %6 = vector.broadcast %cst_5 : f32 to vector<128x64xf32>
    %7 = arith.maximumf %5, %6 : vector<128x64xf32>
    %c0_6 = arith.constant 0 : index
    %c0_7 = arith.constant 0 : index
    %c0_8 = arith.constant 0 : index
    %8 = vector.load %arg4[%c0_6, %c0_7, %c0_8] : memref<7x64x64xf32, #tpu.memory_space<vmem>>, vector<1x64x64xf32>
    %9 = vector.shape_cast %8 : vector<1x64x64xf32> to vector<64x64xf32>
    %cst_9 = arith.constant dense<0.000000e+00> : vector<128x64xf32>
    %10 = tpu.matmul %7, %9, %cst_9 {dimension_numbers = #tpu.dot_dimension_numbers<[1], [0], [0], [1], [0, 0, 1, 1], [], []>} : vector<128x64xf32>, vector<64x64xf32>, vector<128x64xf32> -> vector<128x64xf32>
    %c0_10 = arith.constant 0 : index
    %c0_11 = arith.constant 0 : index
    %c0_12 = arith.constant 0 : index
    %11 = vector.load %arg5[%c0_10, %c0_11, %c0_12] : memref<7x1x64xf32, #tpu.memory_space<vmem>>, vector<1x1x64xf32>
    %12 = vector.shape_cast %11 : vector<1x1x64xf32> to vector<1x64xf32>
    %13 = vector.broadcast %12 : vector<1x64xf32> to vector<128x64xf32>
    %14 = arith.addf %10, %13 : vector<128x64xf32>
    %cst_13 = arith.constant 0.000000e+00 : f32
    %15 = vector.broadcast %cst_13 : f32 to vector<128x64xf32>
    %16 = arith.maximumf %14, %15 : vector<128x64xf32>
    %c1 = arith.constant 1 : index
    %c0_14 = arith.constant 0 : index
    %c0_15 = arith.constant 0 : index
    %17 = vector.load %arg4[%c1, %c0_14, %c0_15] : memref<7x64x64xf32, #tpu.memory_space<vmem>>, vector<1x64x64xf32>
    %18 = vector.shape_cast %17 : vector<1x64x64xf32> to vector<64x64xf32>
    %cst_16 = arith.constant dense<0.000000e+00> : vector<128x64xf32>
    %19 = tpu.matmul %16, %18, %cst_16 {dimension_numbers = #tpu.dot_dimension_numbers<[1], [0], [0], [1], [0, 0, 1, 1], [], []>} : vector<128x64xf32>, vector<64x64xf32>, vector<128x64xf32> -> vector<128x64xf32>
    %c1_17 = arith.constant 1 : index
    %c0_18 = arith.constant 0 : index
    %c0_19 = arith.constant 0 : index
    %20 = vector.load %arg5[%c1_17, %c0_18, %c0_19] : memref<7x1x64xf32, #tpu.memory_space<vmem>>, vector<1x1x64xf32>
    %21 = vector.shape_cast %20 : vector<1x1x64xf32> to vector<1x64xf32>
    %22 = vector.broadcast %21 : vector<1x64xf32> to vector<128x64xf32>
    %23 = arith.addf %19, %22 : vector<128x64xf32>
    %cst_20 = arith.constant 0.000000e+00 : f32
    %24 = vector.broadcast %cst_20 : f32 to vector<128x64xf32>
    %25 = arith.maximumf %23, %24 : vector<128x64xf32>
    %c2 = arith.constant 2 : index
    %c0_21 = arith.constant 0 : index
    %c0_22 = arith.constant 0 : index
    %26 = vector.load %arg4[%c2, %c0_21, %c0_22] : memref<7x64x64xf32, #tpu.memory_space<vmem>>, vector<1x64x64xf32>
    %27 = vector.shape_cast %26 : vector<1x64x64xf32> to vector<64x64xf32>
    %cst_23 = arith.constant dense<0.000000e+00> : vector<128x64xf32>
    %28 = tpu.matmul %25, %27, %cst_23 {dimension_numbers = #tpu.dot_dimension_numbers<[1], [0], [0], [1], [0, 0, 1, 1], [], []>} : vector<128x64xf32>, vector<64x64xf32>, vector<128x64xf32> -> vector<128x64xf32>
    %c2_24 = arith.constant 2 : index
    %c0_25 = arith.constant 0 : index
    %c0_26 = arith.constant 0 : index
    %29 = vector.load %arg5[%c2_24, %c0_25, %c0_26] : memref<7x1x64xf32, #tpu.memory_space<vmem>>, vector<1x1x64xf32>
    %30 = vector.shape_cast %29 : vector<1x1x64xf32> to vector<1x64xf32>
    %31 = vector.broadcast %30 : vector<1x64xf32> to vector<128x64xf32>
    %32 = arith.addf %28, %31 : vector<128x64xf32>
    %cst_27 = arith.constant 0.000000e+00 : f32
    %33 = vector.broadcast %cst_27 : f32 to vector<128x64xf32>
    %34 = arith.maximumf %32, %33 : vector<128x64xf32>
    %c3 = arith.constant 3 : index
    %c0_28 = arith.constant 0 : index
    %c0_29 = arith.constant 0 : index
    %35 = vector.load %arg4[%c3, %c0_28, %c0_29] : memref<7x64x64xf32, #tpu.memory_space<vmem>>, vector<1x64x64xf32>
    %36 = vector.shape_cast %35 : vector<1x64x64xf32> to vector<64x64xf32>
    %cst_30 = arith.constant dense<0.000000e+00> : vector<128x64xf32>
    %37 = tpu.matmul %34, %36, %cst_30 {dimension_numbers = #tpu.dot_dimension_numbers<[1], [0], [0], [1], [0, 0, 1, 1], [], []>} : vector<128x64xf32>, vector<64x64xf32>, vector<128x64xf32> -> vector<128x64xf32>
    %c3_31 = arith.constant 3 : index
    %c0_32 = arith.constant 0 : index
    %c0_33 = arith.constant 0 : index
    %38 = vector.load %arg5[%c3_31, %c0_32, %c0_33] : memref<7x1x64xf32, #tpu.memory_space<vmem>>, vector<1x1x64xf32>
    %39 = vector.shape_cast %38 : vector<1x1x64xf32> to vector<1x64xf32>
    %40 = vector.broadcast %39 : vector<1x64xf32> to vector<128x64xf32>
    %41 = arith.addf %37, %40 : vector<128x64xf32>
    %cst_34 = arith.constant 0.000000e+00 : f32
    %42 = vector.broadcast %cst_34 : f32 to vector<128x64xf32>
    %43 = arith.maximumf %41, %42 : vector<128x64xf32>
    %c4 = arith.constant 4 : index
    %c0_35 = arith.constant 0 : index
    %c0_36 = arith.constant 0 : index
    %44 = vector.load %arg4[%c4, %c0_35, %c0_36] : memref<7x64x64xf32, #tpu.memory_space<vmem>>, vector<1x64x64xf32>
    %45 = vector.shape_cast %44 : vector<1x64x64xf32> to vector<64x64xf32>
    %cst_37 = arith.constant dense<0.000000e+00> : vector<128x64xf32>
    %46 = tpu.matmul %43, %45, %cst_37 {dimension_numbers = #tpu.dot_dimension_numbers<[1], [0], [0], [1], [0, 0, 1, 1], [], []>} : vector<128x64xf32>, vector<64x64xf32>, vector<128x64xf32> -> vector<128x64xf32>
    %c0_38 = arith.constant 0 : index
    %c0_39 = arith.constant 0 : index
    %c0_40 = arith.constant 0 : index
    %47 = vector.load %arg6[%c0_38, %c0_39, %c0_40] : memref<1x4x64xf32, #tpu.memory_space<vmem>>, vector<1x4x64xf32>
    %48 = vector.shape_cast %47 : vector<1x4x64xf32> to vector<4x64xf32>
    %cst_41 = arith.constant dense<0.000000e+00> : vector<128x64xf32>
    %49 = tpu.matmul %0, %48, %cst_41 {dimension_numbers = #tpu.dot_dimension_numbers<[1], [0], [0], [1], [0, 0, 1, 1], [], []>} : vector<128x4xf32>, vector<4x64xf32>, vector<128x64xf32> -> vector<128x64xf32>
    %50 = arith.addf %46, %49 : vector<128x64xf32>
    %c4_42 = arith.constant 4 : index
    %c0_43 = arith.constant 0 : index
    %c0_44 = arith.constant 0 : index
    %51 = vector.load %arg5[%c4_42, %c0_43, %c0_44] : memref<7x1x64xf32, #tpu.memory_space<vmem>>, vector<1x1x64xf32>
    %52 = vector.shape_cast %51 : vector<1x1x64xf32> to vector<1x64xf32>
    %53 = vector.broadcast %52 : vector<1x64xf32> to vector<128x64xf32>
    %54 = arith.addf %50, %53 : vector<128x64xf32>
    %cst_45 = arith.constant 0.000000e+00 : f32
    %55 = vector.broadcast %cst_45 : f32 to vector<128x64xf32>
    %56 = arith.maximumf %54, %55 : vector<128x64xf32>
    %c5 = arith.constant 5 : index
    %c0_46 = arith.constant 0 : index
    %c0_47 = arith.constant 0 : index
    %57 = vector.load %arg4[%c5, %c0_46, %c0_47] : memref<7x64x64xf32, #tpu.memory_space<vmem>>, vector<1x64x64xf32>
    %58 = vector.shape_cast %57 : vector<1x64x64xf32> to vector<64x64xf32>
    %cst_48 = arith.constant dense<0.000000e+00> : vector<128x64xf32>
    %59 = tpu.matmul %56, %58, %cst_48 {dimension_numbers = #tpu.dot_dimension_numbers<[1], [0], [0], [1], [0, 0, 1, 1], [], []>} : vector<128x64xf32>, vector<64x64xf32>, vector<128x64xf32> -> vector<128x64xf32>
    %c5_49 = arith.constant 5 : index
    %c0_50 = arith.constant 0 : index
    %c0_51 = arith.constant 0 : index
    %60 = vector.load %arg5[%c5_49, %c0_50, %c0_51] : memref<7x1x64xf32, #tpu.memory_space<vmem>>, vector<1x1x64xf32>
    %61 = vector.shape_cast %60 : vector<1x1x64xf32> to vector<1x64xf32>
    %62 = vector.broadcast %61 : vector<1x64xf32> to vector<128x64xf32>
    %63 = arith.addf %59, %62 : vector<128x64xf32>
    %cst_52 = arith.constant 0.000000e+00 : f32
    %64 = vector.broadcast %cst_52 : f32 to vector<128x64xf32>
    %65 = arith.maximumf %63, %64 : vector<128x64xf32>
    %c6 = arith.constant 6 : index
    %c0_53 = arith.constant 0 : index
    %c0_54 = arith.constant 0 : index
    %66 = vector.load %arg4[%c6, %c0_53, %c0_54] : memref<7x64x64xf32, #tpu.memory_space<vmem>>, vector<1x64x64xf32>
    %67 = vector.shape_cast %66 : vector<1x64x64xf32> to vector<64x64xf32>
    %cst_55 = arith.constant dense<0.000000e+00> : vector<128x64xf32>
    %68 = tpu.matmul %65, %67, %cst_55 {dimension_numbers = #tpu.dot_dimension_numbers<[1], [0], [0], [1], [0, 0, 1, 1], [], []>} : vector<128x64xf32>, vector<64x64xf32>, vector<128x64xf32> -> vector<128x64xf32>
    %c6_56 = arith.constant 6 : index
    %c0_57 = arith.constant 0 : index
    %c0_58 = arith.constant 0 : index
    %69 = vector.load %arg5[%c6_56, %c0_57, %c0_58] : memref<7x1x64xf32, #tpu.memory_space<vmem>>, vector<1x1x64xf32>
    %70 = vector.shape_cast %69 : vector<1x1x64xf32> to vector<1x64xf32>
    %71 = vector.broadcast %70 : vector<1x64xf32> to vector<128x64xf32>
    %72 = arith.addf %68, %71 : vector<128x64xf32>
    %cst_59 = arith.constant 0.000000e+00 : f32
    %73 = vector.broadcast %cst_59 : f32 to vector<128x64xf32>
    %74 = arith.maximumf %72, %73 : vector<128x64xf32>
    %c0_60 = arith.constant 0 : index
    %c0_61 = arith.constant 0 : index
    %75 = vector.load %arg7[%c0_60, %c0_61] : memref<64x128xf32, #tpu.memory_space<vmem>>, vector<64x128xf32>
    %cst_62 = arith.constant dense<0.000000e+00> : vector<128x128xf32>
    %76 = tpu.matmul %74, %75, %cst_62 {dimension_numbers = #tpu.dot_dimension_numbers<[1], [0], [0], [1], [0, 0, 1, 1], [], []>} : vector<128x64xf32>, vector<64x128xf32>, vector<128x128xf32> -> vector<128x128xf32>
    %c0_63 = arith.constant 0 : index
    %c0_64 = arith.constant 0 : index
    %77 = vector.load %arg8[%c0_63, %c0_64] : memref<1x128xf32, #tpu.memory_space<vmem>>, vector<1x128xf32>
    %78 = vector.broadcast %77 : vector<1x128xf32> to vector<128x128xf32>
    %79 = arith.addf %76, %78 : vector<128x128xf32>
    %c0_65 = arith.constant 0 : index
    %c0_66 = arith.constant 0 : index
    %80 = vector.load %arg19[%c0_65, %c0_66] : memref<128x128xf32, #tpu.memory_space<vmem>>, vector<128x128xf32>
    tpu.vector_store %arg19[%c0_65, %c0_66], %79 {strides = array<i32>} : memref<128x128xf32, #tpu.memory_space<vmem>>, vector<128x128xf32>,
    %c0_67 = arith.constant 0 : index
    %c0_68 = arith.constant 0 : index
    %81 = vector.load %arg9[%c0_67, %c0_68] : memref<4x64xf32, #tpu.memory_space<vmem>>, vector<4x64xf32>
    %cst_69 = arith.constant dense<0.000000e+00> : vector<128x64xf32>
    %82 = tpu.matmul %0, %81, %cst_69 {dimension_numbers = #tpu.dot_dimension_numbers<[1], [0], [0], [1], [0, 0, 1, 1], [], []>} : vector<128x4xf32>, vector<4x64xf32>, vector<128x64xf32> -> vector<128x64xf32>
    %c0_70 = arith.constant 0 : index
    %c0_71 = arith.constant 0 : index
    %83 = vector.load %arg10[%c0_70, %c0_71] : memref<128x64xf32, #tpu.memory_space<vmem>>, vector<128x64xf32>
    %cst_72 = arith.constant dense<0.000000e+00> : vector<128x64xf32>
    %84 = tpu.matmul %79, %83, %cst_72 {dimension_numbers = #tpu.dot_dimension_numbers<[1], [0], [0], [1], [0, 0, 1, 1], [], []>} : vector<128x128xf32>, vector<128x64xf32>, vector<128x64xf32> -> vector<128x64xf32>
    %85 = arith.addf %82, %84 : vector<128x64xf32>
    %c0_73 = arith.constant 0 : index
    %c0_74 = arith.constant 0 : index
    %86 = vector.load %arg11[%c0_73, %c0_74] : memref<1x64xf32, #tpu.memory_space<vmem>>, vector<1x64xf32>
    %87 = vector.broadcast %86 : vector<1x64xf32> to vector<128x64xf32>
    %88 = arith.addf %85, %87 : vector<128x64xf32>
    %cst_75 = arith.constant 0.000000e+00 : f32
    %89 = vector.broadcast %cst_75 : f32 to vector<128x64xf32>
    %90 = arith.maximumf %88, %89 : vector<128x64xf32>
    %c0_76 = arith.constant 0 : index
    %c0_77 = arith.constant 0 : index
    %c0_78 = arith.constant 0 : index
    %91 = vector.load %arg12[%c0_76, %c0_77, %c0_78] : memref<7x64x64xf32, #tpu.memory_space<vmem>>, vector<1x64x64xf32>
    %92 = vector.shape_cast %91 : vector<1x64x64xf32> to vector<64x64xf32>
    %cst_79 = arith.constant dense<0.000000e+00> : vector<128x64xf32>
    %93 = tpu.matmul %90, %92, %cst_79 {dimension_numbers = #tpu.dot_dimension_numbers<[1], [0], [0], [1], [0, 0, 1, 1], [], []>} : vector<128x64xf32>, vector<64x64xf32>, vector<128x64xf32> -> vector<128x64xf32>
    %c0_80 = arith.constant 0 : index
    %c0_81 = arith.constant 0 : index
    %c0_82 = arith.constant 0 : index
    %94 = vector.load %arg13[%c0_80, %c0_81, %c0_82] : memref<7x1x64xf32, #tpu.memory_space<vmem>>, vector<1x1x64xf32>
    %95 = vector.shape_cast %94 : vector<1x1x64xf32> to vector<1x64xf32>
    %96 = vector.broadcast %95 : vector<1x64xf32> to vector<128x64xf32>
    %97 = arith.addf %93, %96 : vector<128x64xf32>
    %cst_83 = arith.constant 0.000000e+00 : f32
    %98 = vector.broadcast %cst_83 : f32 to vector<128x64xf32>
    %99 = arith.maximumf %97, %98 : vector<128x64xf32>
    %c1_84 = arith.constant 1 : index
    %c0_85 = arith.constant 0 : index
    %c0_86 = arith.constant 0 : index
    %100 = vector.load %arg12[%c1_84, %c0_85, %c0_86] : memref<7x64x64xf32, #tpu.memory_space<vmem>>, vector<1x64x64xf32>
    %101 = vector.shape_cast %100 : vector<1x64x64xf32> to vector<64x64xf32>
    %cst_87 = arith.constant dense<0.000000e+00> : vector<128x64xf32>
    %102 = tpu.matmul %99, %101, %cst_87 {dimension_numbers = #tpu.dot_dimension_numbers<[1], [0], [0], [1], [0, 0, 1, 1], [], []>} : vector<128x64xf32>, vector<64x64xf32>, vector<128x64xf32> -> vector<128x64xf32>
    %c1_88 = arith.constant 1 : index
    %c0_89 = arith.constant 0 : index
    %c0_90 = arith.constant 0 : index
    %103 = vector.load %arg13[%c1_88, %c0_89, %c0_90] : memref<7x1x64xf32, #tpu.memory_space<vmem>>, vector<1x1x64xf32>
    %104 = vector.shape_cast %103 : vector<1x1x64xf32> to vector<1x64xf32>
    %105 = vector.broadcast %104 : vector<1x64xf32> to vector<128x64xf32>
    %106 = arith.addf %102, %105 : vector<128x64xf32>
    %cst_91 = arith.constant 0.000000e+00 : f32
    %107 = vector.broadcast %cst_91 : f32 to vector<128x64xf32>
    %108 = arith.maximumf %106, %107 : vector<128x64xf32>
    %c2_92 = arith.constant 2 : index
    %c0_93 = arith.constant 0 : index
    %c0_94 = arith.constant 0 : index
    %109 = vector.load %arg12[%c2_92, %c0_93, %c0_94] : memref<7x64x64xf32, #tpu.memory_space<vmem>>, vector<1x64x64xf32>
    %110 = vector.shape_cast %109 : vector<1x64x64xf32> to vector<64x64xf32>
    %cst_95 = arith.constant dense<0.000000e+00> : vector<128x64xf32>
    %111 = tpu.matmul %108, %110, %cst_95 {dimension_numbers = #tpu.dot_dimension_numbers<[1], [0], [0], [1], [0, 0, 1, 1], [], []>} : vector<128x64xf32>, vector<64x64xf32>, vector<128x64xf32> -> vector<128x64xf32>
    %c2_96 = arith.constant 2 : index
    %c0_97 = arith.constant 0 : index
    %c0_98 = arith.constant 0 : index
    %112 = vector.load %arg13[%c2_96, %c0_97, %c0_98] : memref<7x1x64xf32, #tpu.memory_space<vmem>>, vector<1x1x64xf32>
    %113 = vector.shape_cast %112 : vector<1x1x64xf32> to vector<1x64xf32>
    %114 = vector.broadcast %113 : vector<1x64xf32> to vector<128x64xf32>
    %115 = arith.addf %111, %114 : vector<128x64xf32>
    %cst_99 = arith.constant 0.000000e+00 : f32
    %116 = vector.broadcast %cst_99 : f32 to vector<128x64xf32>
    %117 = arith.maximumf %115, %116 : vector<128x64xf32>
    %c3_100 = arith.constant 3 : index
    %c0_101 = arith.constant 0 : index
    %c0_102 = arith.constant 0 : index
    %118 = vector.load %arg12[%c3_100, %c0_101, %c0_102] : memref<7x64x64xf32, #tpu.memory_space<vmem>>, vector<1x64x64xf32>
    %119 = vector.shape_cast %118 : vector<1x64x64xf32> to vector<64x64xf32>
    %cst_103 = arith.constant dense<0.000000e+00> : vector<128x64xf32>
    %120 = tpu.matmul %117, %119, %cst_103 {dimension_numbers = #tpu.dot_dimension_numbers<[1], [0], [0], [1], [0, 0, 1, 1], [], []>} : vector<128x64xf32>, vector<64x64xf32>, vector<128x64xf32> -> vector<128x64xf32>
    %c3_104 = arith.constant 3 : index
    %c0_105 = arith.constant 0 : index
    %c0_106 = arith.constant 0 : index
    %121 = vector.load %arg13[%c3_104, %c0_105, %c0_106] : memref<7x1x64xf32, #tpu.memory_space<vmem>>, vector<1x1x64xf32>
    %122 = vector.shape_cast %121 : vector<1x1x64xf32> to vector<1x64xf32>
    %123 = vector.broadcast %122 : vector<1x64xf32> to vector<128x64xf32>
    %124 = arith.addf %120, %123 : vector<128x64xf32>
    %cst_107 = arith.constant 0.000000e+00 : f32
    %125 = vector.broadcast %cst_107 : f32 to vector<128x64xf32>
    %126 = arith.maximumf %124, %125 : vector<128x64xf32>
    %c4_108 = arith.constant 4 : index
    %c0_109 = arith.constant 0 : index
    %c0_110 = arith.constant 0 : index
    %127 = vector.load %arg12[%c4_108, %c0_109, %c0_110] : memref<7x64x64xf32, #tpu.memory_space<vmem>>, vector<1x64x64xf32>
    %128 = vector.shape_cast %127 : vector<1x64x64xf32> to vector<64x64xf32>
    %cst_111 = arith.constant dense<0.000000e+00> : vector<128x64xf32>
    %129 = tpu.matmul %126, %128, %cst_111 {dimension_numbers = #tpu.dot_dimension_numbers<[1], [0], [0], [1], [0, 0, 1, 1], [], []>} : vector<128x64xf32>, vector<64x64xf32>, vector<128x64xf32> -> vector<128x64xf32>
    %c0_112 = arith.constant 0 : index
    %c0_113 = arith.constant 0 : index
    %c0_114 = arith.constant 0 : index
    %130 = vector.load %arg14[%c0_112, %c0_113, %c0_114] : memref<1x4x64xf32, #tpu.memory_space<vmem>>, vector<1x4x64xf32>
    %131 = vector.shape_cast %130 : vector<1x4x64xf32> to vector<4x64xf32>
    %cst_115 = arith.constant dense<0.000000e+00> : vector<128x64xf32>
    %132 = tpu.matmul %0, %131, %cst_115 {dimension_numbers = #tpu.dot_dimension_numbers<[1], [0], [0], [1], [0, 0, 1, 1], [], []>} : vector<128x4xf32>, vector<4x64xf32>, vector<128x64xf32> -> vector<128x64xf32>
    %c0_116 = arith.constant 0 : index
    %c0_117 = arith.constant 0 : index
    %c0_118 = arith.constant 0 : index
    %133 = vector.load %arg15[%c0_116, %c0_117, %c0_118] : memref<1x128x64xf32, #tpu.memory_space<vmem>>, vector<1x128x64xf32>
    %134 = vector.shape_cast %133 : vector<1x128x64xf32> to vector<128x64xf32>
    %cst_119 = arith.constant dense<0.000000e+00> : vector<128x64xf32>
    %135 = tpu.matmul %79, %134, %cst_119 {dimension_numbers = #tpu.dot_dimension_numbers<[1], [0], [0], [1], [0, 0, 1, 1], [], []>} : vector<128x128xf32>, vector<128x64xf32>, vector<128x64xf32> -> vector<128x64xf32>
    %136 = arith.addf %132, %135 : vector<128x64xf32>
    %137 = arith.addf %129, %136 : vector<128x64xf32>
    %c4_120 = arith.constant 4 : index
    %c0_121 = arith.constant 0 : index
    %c0_122 = arith.constant 0 : index
    %138 = vector.load %arg13[%c4_120, %c0_121, %c0_122] : memref<7x1x64xf32, #tpu.memory_space<vmem>>, vector<1x1x64xf32>
    %139 = vector.shape_cast %138 : vector<1x1x64xf32> to vector<1x64xf32>
    %140 = vector.broadcast %139 : vector<1x64xf32> to vector<128x64xf32>
    %141 = arith.addf %137, %140 : vector<128x64xf32>
    %cst_123 = arith.constant 0.000000e+00 : f32
    %142 = vector.broadcast %cst_123 : f32 to vector<128x64xf32>
    %143 = arith.maximumf %141, %142 : vector<128x64xf32>
    %c5_124 = arith.constant 5 : index
    %c0_125 = arith.constant 0 : index
    %c0_126 = arith.constant 0 : index
    %144 = vector.load %arg12[%c5_124, %c0_125, %c0_126] : memref<7x64x64xf32, #tpu.memory_space<vmem>>, vector<1x64x64xf32>
    %145 = vector.shape_cast %144 : vector<1x64x64xf32> to vector<64x64xf32>
    %cst_127 = arith.constant dense<0.000000e+00> : vector<128x64xf32>
    %146 = tpu.matmul %143, %145, %cst_127 {dimension_numbers = #tpu.dot_dimension_numbers<[1], [0], [0], [1], [0, 0, 1, 1], [], []>} : vector<128x64xf32>, vector<64x64xf32>, vector<128x64xf32> -> vector<128x64xf32>
    %c5_128 = arith.constant 5 : index
    %c0_129 = arith.constant 0 : index
    %c0_130 = arith.constant 0 : index
    %147 = vector.load %arg13[%c5_128, %c0_129, %c0_130] : memref<7x1x64xf32, #tpu.memory_space<vmem>>, vector<1x1x64xf32>
    %148 = vector.shape_cast %147 : vector<1x1x64xf32> to vector<1x64xf32>
    %149 = vector.broadcast %148 : vector<1x64xf32> to vector<128x64xf32>
    %150 = arith.addf %146, %149 : vector<128x64xf32>
    %cst_131 = arith.constant 0.000000e+00 : f32
    %151 = vector.broadcast %cst_131 : f32 to vector<128x64xf32>
    %152 = arith.maximumf %150, %151 : vector<128x64xf32>
    %c6_132 = arith.constant 6 : index
    %c0_133 = arith.constant 0 : index
    %c0_134 = arith.constant 0 : index
    %153 = vector.load %arg12[%c6_132, %c0_133, %c0_134] : memref<7x64x64xf32, #tpu.memory_space<vmem>>, vector<1x64x64xf32>
    %154 = vector.shape_cast %153 : vector<1x64x64xf32> to vector<64x64xf32>
    %cst_135 = arith.constant dense<0.000000e+00> : vector<128x64xf32>
    %155 = tpu.matmul %152, %154, %cst_135 {dimension_numbers = #tpu.dot_dimension_numbers<[1], [0], [0], [1], [0, 0, 1, 1], [], []>} : vector<128x64xf32>, vector<64x64xf32>, vector<128x64xf32> -> vector<128x64xf32>
    %c6_136 = arith.constant 6 : index
    %c0_137 = arith.constant 0 : index
    %c0_138 = arith.constant 0 : index
    %156 = vector.load %arg13[%c6_136, %c0_137, %c0_138] : memref<7x1x64xf32, #tpu.memory_space<vmem>>, vector<1x1x64xf32>
    %157 = vector.shape_cast %156 : vector<1x1x64xf32> to vector<1x64xf32>
    %158 = vector.broadcast %157 : vector<1x64xf32> to vector<128x64xf32>
    %159 = arith.addf %155, %158 : vector<128x64xf32>
    %cst_139 = arith.constant 0.000000e+00 : f32
    %160 = vector.broadcast %cst_139 : f32 to vector<128x64xf32>
    %161 = arith.maximumf %159, %160 : vector<128x64xf32>
    %c0_140 = arith.constant 0 : index
    %c0_141 = arith.constant 0 : index
    %162 = vector.load %arg16[%c0_140, %c0_141] : memref<64x128xf32, #tpu.memory_space<vmem>>, vector<64x128xf32>
    %cst_142 = arith.constant dense<0.000000e+00> : vector<128x128xf32>
    %163 = tpu.matmul %161, %162, %cst_142 {dimension_numbers = #tpu.dot_dimension_numbers<[1], [0], [0], [1], [0, 0, 1, 1], [], []>} : vector<128x64xf32>, vector<64x128xf32>, vector<128x128xf32> -> vector<128x128xf32>
    %c0_143 = arith.constant 0 : index
    %c0_144 = arith.constant 0 : index
    %164 = vector.load %arg17[%c0_143, %c0_144] : memref<1x128xf32, #tpu.memory_space<vmem>>, vector<1x128xf32>
    %165 = vector.broadcast %164 : vector<1x128xf32> to vector<128x128xf32>
    %166 = arith.addf %163, %165 : vector<128x128xf32>
    %c0_145 = arith.constant 0 : index
    %c0_146 = arith.constant 0 : index
    %167 = vector.load %arg18[%c0_145, %c0_146] : memref<128x128xf32, #tpu.memory_space<vmem>>, vector<128x128xf32>
    tpu.vector_store %arg18[%c0_145, %c0_146], %166 {strides = array<i32>} : memref<128x128xf32, #tpu.memory_space<vmem>>, vector<128x128xf32>,
    return
  }
  func.func @transform_0(%arg0: i32) -> (i32, i32) {
    %c0_i32 = arith.constant 0 : i32
    %c0_i32_0 = arith.constant 0 : i32
    return %arg0, %c0_i32 : i32, i32
  }
  func.func @transform_1(%arg0: i32) -> (i32, i32) {
    %c0_i32 = arith.constant 0 : i32
    %c0_i32_0 = arith.constant 0 : i32
    %c0_i32_1 = arith.constant 0 : i32
    return %c0_i32, %c0_i32_0 : i32, i32
  }
  func.func @transform_2(%arg0: i32) -> (i32, i32) {
    %c0_i32 = arith.constant 0 : i32
    %c0_i32_0 = arith.constant 0 : i32
    %c0_i32_1 = arith.constant 0 : i32
    return %c0_i32, %c0_i32_0 : i32, i32
  }
  func.func @transform_3(%arg0: i32) -> (i32, i32, i32) {
    %c0_i32 = arith.constant 0 : i32
    %c0_i32_0 = arith.constant 0 : i32
    %c0_i32_1 = arith.constant 0 : i32
    %c0_i32_2 = arith.constant 0 : i32
    return %c0_i32, %c0_i32_0, %c0_i32_1 : i32, i32, i32
  }
  func.func @transform_4(%arg0: i32) -> (i32, i32, i32) {
    %c0_i32 = arith.constant 0 : i32
    %c0_i32_0 = arith.constant 0 : i32
    %c0_i32_1 = arith.constant 0 : i32
    %c0_i32_2 = arith.constant 0 : i32
    return %c0_i32, %c0_i32_0, %c0_i32_1 : i32, i32, i32
  }
  func.func @transform_5(%arg0: i32) -> (i32, i32, i32) {
    %c0_i32 = arith.constant 0 : i32
    %c0_i32_0 = arith.constant 0 : i32
    %c0_i32_1 = arith.constant 0 : i32
    %c0_i32_2 = arith.constant 0 : i32
    return %c0_i32, %c0_i32_0, %c0_i32_1 : i32, i32, i32
  }
  func.func @transform_6(%arg0: i32) -> (i32, i32) {
    %c0_i32 = arith.constant 0 : i32
    %c0_i32_0 = arith.constant 0 : i32
    %c0_i32_1 = arith.constant 0 : i32
    return %c0_i32, %c0_i32_0 : i32, i32
  }
  func.func @transform_7(%arg0: i32) -> (i32, i32) {
    %c0_i32 = arith.constant 0 : i32
    %c0_i32_0 = arith.constant 0 : i32
    %c0_i32_1 = arith.constant 0 : i32
    return %c0_i32, %c0_i32_0 : i32, i32
  }
  func.func @transform_8(%arg0: i32) -> (i32, i32) {
    %c0_i32 = arith.constant 0 : i32
    %c0_i32_0 = arith.constant 0 : i32
    %c0_i32_1 = arith.constant 0 : i32
    return %c0_i32, %c0_i32_0 : i32, i32
  }
  func.func @transform_9(%arg0: i32) -> (i32, i32) {
    %c0_i32 = arith.constant 0 : i32
    %c0_i32_0 = arith.constant 0 : i32
    %c0_i32_1 = arith.constant 0 : i32
    return %c0_i32, %c0_i32_0 : i32, i32
  }
  func.func @transform_10(%arg0: i32) -> (i32, i32) {
    %c0_i32 = arith.constant 0 : i32
    %c0_i32_0 = arith.constant 0 : i32
    %c0_i32_1 = arith.constant 0 : i32
    return %c0_i32, %c0_i32_0 : i32, i32
  }
  func.func @transform_11(%arg0: i32) -> (i32, i32, i32) {
    %c0_i32 = arith.constant 0 : i32
    %c0_i32_0 = arith.constant 0 : i32
    %c0_i32_1 = arith.constant 0 : i32
    %c0_i32_2 = arith.constant 0 : i32
    return %c0_i32, %c0_i32_0, %c0_i32_1 : i32, i32, i32
  }
  func.func @transform_12(%arg0: i32) -> (i32, i32, i32) {
    %c0_i32 = arith.constant 0 : i32
    %c0_i32_0 = arith.constant 0 : i32
    %c0_i32_1 = arith.constant 0 : i32
    %c0_i32_2 = arith.constant 0 : i32
    return %c0_i32, %c0_i32_0, %c0_i32_1 : i32, i32, i32
  }
  func.func @transform_13(%arg0: i32) -> (i32, i32, i32) {
    %c0_i32 = arith.constant 0 : i32
    %c0_i32_0 = arith.constant 0 : i32
    %c0_i32_1 = arith.constant 0 : i32
    %c0_i32_2 = arith.constant 0 : i32
    return %c0_i32, %c0_i32_0, %c0_i32_1 : i32, i32, i32
  }
  func.func @transform_14(%arg0: i32) -> (i32, i32, i32) {
    %c0_i32 = arith.constant 0 : i32
    %c0_i32_0 = arith.constant 0 : i32
    %c0_i32_1 = arith.constant 0 : i32
    %c0_i32_2 = arith.constant 0 : i32
    return %c0_i32, %c0_i32_0, %c0_i32_1 : i32, i32, i32
  }
  func.func @transform_15(%arg0: i32) -> (i32, i32) {
    %c0_i32 = arith.constant 0 : i32
    %c0_i32_0 = arith.constant 0 : i32
    %c0_i32_1 = arith.constant 0 : i32
    return %c0_i32, %c0_i32_0 : i32, i32
  }
  func.func @transform_16(%arg0: i32) -> (i32, i32) {
    %c0_i32 = arith.constant 0 : i32
    %c0_i32_0 = arith.constant 0 : i32
    %c0_i32_1 = arith.constant 0 : i32
    return %c0_i32, %c0_i32_0 : i32, i32
  }
  func.func @transform_17(%arg0: i32) -> (i32, i32) {
    %c0_i32 = arith.constant 0 : i32
    %c0_i32_0 = arith.constant 0 : i32
    return %arg0, %c0_i32 : i32, i32
  }
  func.func @transform_18(%arg0: i32) -> (i32, i32) {
    %c0_i32 = arith.constant 0 : i32
    %c0_i32_0 = arith.constant 0 : i32
    return %arg0, %c0_i32 : i32, i32
  }
}

</mosaic_0001>

<llo_original>
// kernel: run_fused.1
$region0: #{run_fused.1}
  #allocation0 [shape = 'u32[]', space=smem, size = 0x4, offset = 0x4, fixed_abs, tag = 'smem constant byte address 0x4 - core index']
  #allocation1 [shape = 'u32[72,128]{1,0:T(1,128)}', space=vmem, size = 0x9000, scoped, tag = 'internal scratch']
  %s0 = inlined_call_operand.vmem [shape: f32[256,4], index: 0, kind: input, shape index: {}]
  %s1 = inlined_call_operand.vmem [shape: f32[4,64], index: 1, kind: input, shape index: {}]
  %s2 = inlined_call_operand.vmem [shape: f32[1,64], index: 2, kind: input, shape index: {}]
  %s3 = inlined_call_operand.vmem [shape: f32[7,64,64], index: 3, kind: input, shape index: {}]
  %s4 = inlined_call_operand.hbm [shape: f32[7,1,64], index: 4, kind: input, shape index: {}]
  %s5 = inlined_call_operand.vmem [shape: f32[1,4,64], index: 5, kind: input, shape index: {}]
  %s6 = inlined_call_operand.vmem [shape: f32[64,128], index: 6, kind: input, shape index: {}]
  %s7 = inlined_call_operand.vmem [shape: f32[1,128], index: 7, kind: input, shape index: {}]
  %s8 = inlined_call_operand.hbm [shape: f32[4,64], index: 8, kind: input, shape index: {}]
  %s9 = inlined_call_operand.vmem [shape: f32[128,64], index: 9, kind: input, shape index: {}]
  %s10 = inlined_call_operand.hbm [shape: f32[1,64], index: 10, kind: input, shape index: {}]
  %s11 = inlined_call_operand.hbm [shape: f32[7,64,64], index: 11, kind: input, shape index: {}]
  %s12 = inlined_call_operand.hbm [shape: f32[7,1,64], index: 12, kind: input, shape index: {}]
  %s13 = inlined_call_operand.hbm [shape: f32[1,4,64], index: 13, kind: input, shape index: {}]
  %s14 = inlined_call_operand.vmem [shape: f32[1,128,64], index: 14, kind: input, shape index: {}]
  %s15 = inlined_call_operand.vmem [shape: f32[64,128], index: 15, kind: input, shape index: {}]
  %s16 = inlined_call_operand.hbm [shape: f32[1,128], index: 16, kind: input, shape index: {}]
  %s17 = inlined_call_operand.vmem [shape: f32[256,128], index: 17, kind: output, shape index: {0}]
  %s18 = inlined_call_operand.vmem [shape: f32[256,128], index: 18, kind: output, shape index: {1}]
  %19 = xla_tuple %s17, %s18
  %s20 = sld [smem:[#allocation0]]
  $region137: #{run_fused.1} parent=0
    _
  %s22 = ssub.s32 1, %s20
  %s23 = scalar_select 0, %s22, %s20
  $region1: #{run_fused.1} parent=0
    #allocation2 [shape = 'u8[3584]{0}', space=vmem, size = 0x1000, scoped, tag = 'input window, operand 4, single buffered']
    #allocation3 [shape = 's32[2]{0}', space=sflag, size = 0x8, scoped, tag = 'scoped memory for run_fused.1']
    #allocation4 [shape = 'u8[2048]{0}', space=vmem, size = 0x800, scoped, tag = 'input window, operand 8, single buffered']
    #allocation5 [shape = 's32[1]{0}', space=sflag, size = 0x4, scoped, tag = 'scoped memory for run_fused.1']
    #allocation6 [shape = 'u8[512]{0}', space=vmem, size = 0x400, scoped, tag = 'input window, operand 10, single buffered']
    #allocation7 [shape = 'u8[229376]{0}', space=vmem, size = 0x38000, scoped, tag = 'input window, operand 11, single buffered']
    #allocation8 [shape = 's32[1]{0}', space=sflag, size = 0x4, scoped, tag = 'scoped memory for run_fused.1']
    #allocation9 [shape = 'u8[3584]{0}', space=vmem, size = 0x1000, scoped, tag = 'input window, operand 12, single buffered']
    #allocation10 [shape = 'u8[2048]{0}', space=vmem, size = 0x800, scoped, tag = 'input window, operand 13, single buffered']
    #allocation11 [shape = 's32[1]{0}', space=sflag, size = 0x4, scoped, tag = 'scoped memory for run_fused.1']
    #allocation12 [shape = 'u8[512]{0}', space=vmem, size = 0x400, scoped, tag = 'input window, operand 16, single buffered']
    %24 = vsyncpa [#allocation3], 0
    %25 = vsyncpa [#allocation5], 0
    %26 = vsyncpa [#allocation8], 0
    %27 = vsyncpa [#allocation11], 0
    loop: start=0, step=1, limit=4
    $region2: #{run_fused.1} parent=1 // loop_pre_header
      _
    $region3: #{run_fused.1} parent=1 // loop_header
      %s29 = sphi 0, %s33
      %p30 = scmp.ge.s32.totalorder %s29, 4
      %s39 = sphi 0, %s41
      %s42 = sphi 0, %s39
      %s43 = sphi 0, %s42
      %s59 = sphi 0, %s43
      %s63 = sphi 0, %s63
      %s65 = sphi 0, %s63
      %s66 = sphi 0, %s65
      %s80 = sphi 0, %s66
      %s84 = sphi 0, %s84
      %s86 = sphi 0, %s84
      %s87 = sphi 0, %s86
      %s101 = sphi 0, %s87
      %s105 = sphi 0, %s105
      %s107 = sphi 0, %s105
      %s108 = sphi 0, %s107
      %s122 = sphi 0, %s108
      %s126 = sphi 0, %s126
      %s128 = sphi 0, %s126
      %s129 = sphi 0, %s128
      %s143 = sphi 0, %s129
      %s147 = sphi 0, %s147
      %s149 = sphi 0, %s147
      %s150 = sphi 0, %s149
      %s164 = sphi 0, %s150
      %s168 = sphi 0, %s168
      %s170 = sphi 0, %s168
      %s171 = sphi 0, %s170
      %s185 = sphi 0, %s171
      %s189 = sphi 0, %s189
      %s191 = sphi 0, %s189
      %s192 = sphi 0, %s191
      %s206 = sphi 0, %s192
      %s210 = sphi 0, %s210
      %s212 = sphi 0, %s210
      %s213 = sphi 0, %s212
      %s227 = sphi 0, %s213
      %s231 = sphi 0, %s231
      %s233 = sphi 0, %s231
      %s234 = sphi 0, %s233
      %s248 = sphi 0, %s234
      %s252 = sphi 0, %s252
      %s254 = sphi 0, %s252
      %s255 = sphi 0, %s254
      %s269 = sphi 0, %s255
      %s273 = sphi 0, %s273
      %s275 = sphi 0, %s273
      %s276 = sphi 0, %s275
      %s290 = sphi 0, %s276
      %s294 = sphi 0, %s294
      %s296 = sphi 0, %s294
      %s297 = sphi 0, %s296
      %s311 = sphi 0, %s297
      %s315 = sphi 0, %s315
      %s317 = sphi 0, %s315
      %s318 = sphi 0, %s317
      %s332 = sphi 0, %s318
      %s336 = sphi 0, %s336
      %s338 = sphi 0, %s336
      %s339 = sphi 0, %s338
      %s353 = sphi 0, %s339
      %s357 = sphi 0, %s357
      %s359 = sphi 0, %s357
      %s360 = sphi 0, %s359
      %s374 = sphi 0, %s360
      %s378 = sphi 0, %s378
      %s380 = sphi 0, %s378
      %s381 = sphi 0, %s380
      %s395 = sphi 0, %s381
      %s401 = sphi 0, %s403
      %s404 = sphi 0, %s401
      %s405 = sphi 0, %s404
      %s421 = sphi 0, %s405
      %s427 = sphi 0, %s429
      %s430 = sphi 0, %s427
      %s431 = sphi 0, %s430
      %s447 = sphi 0, %s431
    $region4: #{run_fused.1} parent=1 // loop_header_branch
      %32 = sbr.rel (%p30) target = $region8
    $region5: #{run_fused.1} parent=1 // loop_body
      %s34 = ssub.s32 %s29, 1
      %s35 = ssub.s32 %s29, 2
      %s36 = sadd.s32 %s29, 1
      %s37 = ssub.s32 %s29, %s36
      %p38 = scmp.eq.s32.totalorder %s37, 0
      %s40 = sadd.s32 %s39, 1
      %s41 = scalar_select %p38, %s39, %s40
      %p44 = pneg %p38
      %p45 = scmp.eq.s32.totalorder %s29, 1
      %p46 = por %p44, %p45
      %p47 = scmp.ne.s32.totalorder %s39, %s42
      %p48 = scmp.eq.s32.totalorder %s29, 0
      %p49 = por %p47, %p48
      %p50 = scmp.ne.s32.totalorder %s39, %s42
      %p51 = scmp.eq.s32.totalorder %s34, 1
      %p52 = por %p50, %p51
      %p53 = scmp.ne.s32.totalorder %s42, %s43
      %p54 = scmp.eq.s32.totalorder %s34, 0
      %p55 = por %p53, %p54
      %p56 = scmp.ne.s32.totalorder %s42, %s43
      %p57 = scmp.eq.s32.totalorder %s35, 1
      %p58 = por %p56, %p57
      %p60 = scmp.ne.s32.totalorder %s43, %s59
      %p61 = scmp.eq.s32.totalorder %s35, 0
      %p62 = por %p60, %p61
      %s64 = sadd.s32 %s63, 1
      %p67 = scmp.eq.s32.totalorder %s29, 1
      %p68 = scmp.ne.s32.totalorder %s63, %s65
      %p69 = scmp.eq.s32.totalorder %s29, 0
      %p70 = por %p68, %p69
      %p71 = scmp.ne.s32.totalorder %s63, %s65
      %p72 = scmp.eq.s32.totalorder %s34, 1
      %p73 = por %p71, %p72
      %p74 = scmp.ne.s32.totalorder %s65, %s66
      %p75 = scmp.eq.s32.totalorder %s34, 0
      %p76 = por %p74, %p75
      %p77 = scmp.ne.s32.totalorder %s65, %s66
      %p78 = scmp.eq.s32.totalorder %s35, 1
      %p79 = por %p77, %p78
      %p81 = scmp.ne.s32.totalorder %s66, %s80
      %p82 = scmp.eq.s32.totalorder %s35, 0
      %p83 = por %p81, %p82
      %s85 = sadd.s32 %s84, 1
      %p88 = scmp.eq.s32.totalorder %s29, 1
      %p89 = scmp.ne.s32.totalorder %s84, %s86
      %p90 = scmp.eq.s32.totalorder %s29, 0
      %p91 = por %p89, %p90
      %p92 = scmp.ne.s32.totalorder %s84, %s86
      %p93 = scmp.eq.s32.totalorder %s34, 1
      %p94 = por %p92, %p93
      %p95 = scmp.ne.s32.totalorder %s86, %s87
      %p96 = scmp.eq.s32.totalorder %s34, 0
      %p97 = por %p95, %p96
      %p98 = scmp.ne.s32.totalorder %s86, %s87
      %p99 = scmp.eq.s32.totalorder %s35, 1
      %p100 = por %p98, %p99
      %p102 = scmp.ne.s32.totalorder %s87, %s101
      %p103 = scmp.eq.s32.totalorder %s35, 0
      %p104 = por %p102, %p103
      %s106 = sadd.s32 %s105, 1
      %p109 = scmp.eq.s32.totalorder %s29, 1
      %p110 = scmp.ne.s32.totalorder %s105, %s107
      %p111 = scmp.eq.s32.totalorder %s29, 0
      %p112 = por %p110, %p111
      %p113 = scmp.ne.s32.totalorder %s105, %s107
      %p114 = scmp.eq.s32.totalorder %s34, 1
      %p115 = por %p113, %p114
      %p116 = scmp.ne.s32.totalorder %s107, %s108
      %p117 = scmp.eq.s32.totalorder %s34, 0
      %p118 = por %p116, %p117
      %p119 = scmp.ne.s32.totalorder %s107, %s108
      %p120 = scmp.eq.s32.totalorder %s35, 1
      %p121 = por %p119, %p120
      %p123 = scmp.ne.s32.totalorder %s108, %s122
      %p124 = scmp.eq.s32.totalorder %s35, 0
      %p125 = por %p123, %p124
      %s127 = sadd.s32 %s126, 1
      %p130 = scmp.eq.s32.totalorder %s29, 1
      %p131 = scmp.ne.s32.totalorder %s126, %s128
      %p132 = scmp.eq.s32.totalorder %s29, 0
      %p133 = por %p131, %p132
      %p134 = scmp.ne.s32.totalorder %s126, %s128
      %p135 = scmp.eq.s32.totalorder %s34, 1
      %p136 = por %p134, %p135
      %p137 = scmp.ne.s32.totalorder %s128, %s129
      %p138 = scmp.eq.s32.totalorder %s34, 0
      %p139 = por %p137, %p138
      %p140 = scmp.ne.s32.totalorder %s128, %s129
      %p141 = scmp.eq.s32.totalorder %s35, 1
      %p142 = por %p140, %p141
      %p144 = scmp.ne.s32.totalorder %s129, %s143
      %p145 = scmp.eq.s32.totalorder %s35, 0
      %p146 = por %p144, %p145
      %s148 = sadd.s32 %s147, 1
      %p151 = scmp.eq.s32.totalorder %s29, 1
      %p152 = scmp.ne.s32.totalorder %s147, %s149
      %p153 = scmp.eq.s32.totalorder %s29, 0
      %p154 = por %p152, %p153
      %p155 = scmp.ne.s32.totalorder %s147, %s149
      %p156 = scmp.eq.s32.totalorder %s34, 1
      %p157 = por %p155, %p156
      %p158 = scmp.ne.s32.totalorder %s149, %s150
      %p159 = scmp.eq.s32.totalorder %s34, 0
      %p160 = por %p158, %p159
      %p161 = scmp.ne.s32.totalorder %s149, %s150
      %p162 = scmp.eq.s32.totalorder %s35, 1
      %p163 = por %p161, %p162
      %p165 = scmp.ne.s32.totalorder %s150, %s164
      %p166 = scmp.eq.s32.totalorder %s35, 0
      %p167 = por %p165, %p166
      %s169 = sadd.s32 %s168, 1
      %p172 = scmp.eq.s32.totalorder %s29, 1
      %p173 = scmp.ne.s32.totalorder %s168, %s170
      %p174 = scmp.eq.s32.totalorder %s29, 0
      %p175 = por %p173, %p174
      %p176 = scmp.ne.s32.totalorder %s168, %s170
      %p177 = scmp.eq.s32.totalorder %s34, 1
      %p178 = por %p176, %p177
      %p179 = scmp.ne.s32.totalorder %s170, %s171
      %p180 = scmp.eq.s32.totalorder %s34, 0
      %p181 = por %p179, %p180
      %p182 = scmp.ne.s32.totalorder %s170, %s171
      %p183 = scmp.eq.s32.totalorder %s35, 1
      %p184 = por %p182, %p183
      %p186 = scmp.ne.s32.totalorder %s171, %s185
      %p187 = scmp.eq.s32.totalorder %s35, 0
      %p188 = por %p186, %p187
      %s190 = sadd.s32 %s189, 1
      %p193 = scmp.eq.s32.totalorder %s29, 1
      %p194 = scmp.ne.s32.totalorder %s189, %s191
      %p195 = scmp.eq.s32.totalorder %s29, 0
      %p196 = por %p194, %p195
      %p197 = scmp.ne.s32.totalorder %s189, %s191
      %p198 = scmp.eq.s32.totalorder %s34, 1
      %p199 = por %p197, %p198
      %p200 = scmp.ne.s32.totalorder %s191, %s192
      %p201 = scmp.eq.s32.totalorder %s34, 0
      %p202 = por %p200, %p201
      %p203 = scmp.ne.s32.totalorder %s191, %s192
      %p204 = scmp.eq.s32.totalorder %s35, 1
      %p205 = por %p203, %p204
      %p207 = scmp.ne.s32.totalorder %s192, %s206
      %p208 = scmp.eq.s32.totalorder %s35, 0
      %p209 = por %p207, %p208
      %s211 = sadd.s32 %s210, 1
      %p214 = scmp.eq.s32.totalorder %s29, 1
      %p215 = scmp.ne.s32.totalorder %s210, %s212
      %p216 = scmp.eq.s32.totalorder %s29, 0
      %p217 = por %p215, %p216
      %p218 = scmp.ne.s32.totalorder %s210, %s212
      %p219 = scmp.eq.s32.totalorder %s34, 1
      %p220 = por %p218, %p219
      %p221 = scmp.ne.s32.totalorder %s212, %s213
      %p222 = scmp.eq.s32.totalorder %s34, 0
      %p223 = por %p221, %p222
      %p224 = scmp.ne.s32.totalorder %s212, %s213
      %p225 = scmp.eq.s32.totalorder %s35, 1
      %p226 = por %p224, %p225
      %p228 = scmp.ne.s32.totalorder %s213, %s227
      %p229 = scmp.eq.s32.totalorder %s35, 0
      %p230 = por %p228, %p229
      %s232 = sadd.s32 %s231, 1
      %p235 = scmp.eq.s32.totalorder %s29, 1
      %p236 = scmp.ne.s32.totalorder %s231, %s233
      %p237 = scmp.eq.s32.totalorder %s29, 0
      %p238 = por %p236, %p237
      %p239 = scmp.ne.s32.totalorder %s231, %s233
      %p240 = scmp.eq.s32.totalorder %s34, 1
      %p241 = por %p239, %p240
      %p242 = scmp.ne.s32.totalorder %s233, %s234
      %p243 = scmp.eq.s32.totalorder %s34, 0
      %p244 = por %p242, %p243
      %p245 = scmp.ne.s32.totalorder %s233, %s234
      %p246 = scmp.eq.s32.totalorder %s35, 1
      %p247 = por %p245, %p246
      %p249 = scmp.ne.s32.totalorder %s234, %s248
      %p250 = scmp.eq.s32.totalorder %s35, 0
      %p251 = por %p249, %p250
      %s253 = sadd.s32 %s252, 1
      %p256 = scmp.eq.s32.totalorder %s29, 1
      %p257 = scmp.ne.s32.totalorder %s252, %s254
      %p258 = scmp.eq.s32.totalorder %s29, 0
      %p259 = por %p257, %p258
      %p260 = scmp.ne.s32.totalorder %s252, %s254
      %p261 = scmp.eq.s32.totalorder %s34, 1
      %p262 = por %p260, %p261
      %p263 = scmp.ne.s32.totalorder %s254, %s255
      %p264 = scmp.eq.s32.totalorder %s34, 0
      %p265 = por %p263, %p264
      %p266 = scmp.ne.s32.totalorder %s254, %s255
      %p267 = scmp.eq.s32.totalorder %s35, 1
      %p268 = por %p266, %p267
      %p270 = scmp.ne.s32.totalorder %s255, %s269
      %p271 = scmp.eq.s32.totalorder %s35, 0
      %p272 = por %p270, %p271
      %s274 = sadd.s32 %s273, 1
      %p277 = scmp.eq.s32.totalorder %s29, 1
      %p278 = scmp.ne.s32.totalorder %s273, %s275
      %p279 = scmp.eq.s32.totalorder %s29, 0
      %p280 = por %p278, %p279
      %p281 = scmp.ne.s32.totalorder %s273, %s275
      %p282 = scmp.eq.s32.totalorder %s34, 1
      %p283 = por %p281, %p282
      %p284 = scmp.ne.s32.totalorder %s275, %s276
      %p285 = scmp.eq.s32.totalorder %s34, 0
      %p286 = por %p284, %p285
      %p287 = scmp.ne.s32.totalorder %s275, %s276
      %p288 = scmp.eq.s32.totalorder %s35, 1
      %p289 = por %p287, %p288
      %p291 = scmp.ne.s32.totalorder %s276, %s290
      %p292 = scmp.eq.s32.totalorder %s35, 0
      %p293 = por %p291, %p292
      %s295 = sadd.s32 %s294, 1
      %p298 = scmp.eq.s32.totalorder %s29, 1
      %p299 = scmp.ne.s32.totalorder %s294, %s296
      %p300 = scmp.eq.s32.totalorder %s29, 0
      %p301 = por %p299, %p300
      %p302 = scmp.ne.s32.totalorder %s294, %s296
      %p303 = scmp.eq.s32.totalorder %s34, 1
      %p304 = por %p302, %p303
      %p305 = scmp.ne.s32.totalorder %s296, %s297
      %p306 = scmp.eq.s32.totalorder %s34, 0
      %p307 = por %p305, %p306
      %p308 = scmp.ne.s32.totalorder %s296, %s297
      %p309 = scmp.eq.s32.totalorder %s35, 1
      %p310 = por %p308, %p309
      %p312 = scmp.ne.s32.totalorder %s297, %s311
      %p313 = scmp.eq.s32.totalorder %s35, 0
      %p314 = por %p312, %p313
      %s316 = sadd.s32 %s315, 1
      %p319 = scmp.eq.s32.totalorder %s29, 1
      %p320 = scmp.ne.s32.totalorder %s315, %s317
      %p321 = scmp.eq.s32.totalorder %s29, 0
      %p322 = por %p320, %p321
      %p323 = scmp.ne.s32.totalorder %s315, %s317
      %p324 = scmp.eq.s32.totalorder %s34, 1
      %p325 = por %p323, %p324
      %p326 = scmp.ne.s32.totalorder %s317, %s318
      %p327 = scmp.eq.s32.totalorder %s34, 0
      %p328 = por %p326, %p327
      %p329 = scmp.ne.s32.totalorder %s317, %s318
      %p330 = scmp.eq.s32.totalorder %s35, 1
      %p331 = por %p329, %p330
      %p333 = scmp.ne.s32.totalorder %s318, %s332
      %p334 = scmp.eq.s32.totalorder %s35, 0
      %p335 = por %p333, %p334
      %s337 = sadd.s32 %s336, 1
      %p340 = scmp.eq.s32.totalorder %s29, 1
      %p341 = scmp.ne.s32.totalorder %s336, %s338
      %p342 = scmp.eq.s32.totalorder %s29, 0
      %p343 = por %p341, %p342
      %p344 = scmp.ne.s32.totalorder %s336, %s338
      %p345 = scmp.eq.s32.totalorder %s34, 1
      %p346 = por %p344, %p345
      %p347 = scmp.ne.s32.totalorder %s338, %s339
      %p348 = scmp.eq.s32.totalorder %s34, 0
      %p349 = por %p347, %p348
      %p350 = scmp.ne.s32.totalorder %s338, %s339
      %p351 = scmp.eq.s32.totalorder %s35, 1
      %p352 = por %p350, %p351
      %p354 = scmp.ne.s32.totalorder %s339, %s353
      %p355 = scmp.eq.s32.totalorder %s35, 0
      %p356 = por %p354, %p355
      %s358 = sadd.s32 %s357, 1
      %p361 = scmp.eq.s32.totalorder %s29, 1
      %p362 = scmp.ne.s32.totalorder %s357, %s359
      %p363 = scmp.eq.s32.totalorder %s29, 0
      %p364 = por %p362, %p363
      %p365 = scmp.ne.s32.totalorder %s357, %s359
      %p366 = scmp.eq.s32.totalorder %s34, 1
      %p367 = por %p365, %p366
      %p368 = scmp.ne.s32.totalorder %s359, %s360
      %p369 = scmp.eq.s32.totalorder %s34, 0
      %p370 = por %p368, %p369
      %p371 = scmp.ne.s32.totalorder %s359, %s360
      %p372 = scmp.eq.s32.totalorder %s35, 1
      %p373 = por %p371, %p372
      %p375 = scmp.ne.s32.totalorder %s360, %s374
      %p376 = scmp.eq.s32.totalorder %s35, 0
      %p377 = por %p375, %p376
      %s379 = sadd.s32 %s378, 1
      %p382 = scmp.eq.s32.totalorder %s29, 1
      %p383 = scmp.ne.s32.totalorder %s378, %s380
      %p384 = scmp.eq.s32.totalorder %s29, 0
      %p385 = por %p383, %p384
      %p386 = scmp.ne.s32.totalorder %s378, %s380
      %p387 = scmp.eq.s32.totalorder %s34, 1
      %p388 = por %p386, %p387
      %p389 = scmp.ne.s32.totalorder %s380, %s381
      %p390 = scmp.eq.s32.totalorder %s34, 0
      %p391 = por %p389, %p390
      %p392 = scmp.ne.s32.totalorder %s380, %s381
      %p393 = scmp.eq.s32.totalorder %s35, 1
      %p394 = por %p392, %p393
      %p396 = scmp.ne.s32.totalorder %s381, %s395
      %p397 = scmp.eq.s32.totalorder %s35, 0
      %p398 = por %p396, %p397
      %s399 = ssub.s32 %s29, %s36
      %p400 = scmp.eq.s32.totalorder %s399, 0
      %s402 = sadd.s32 %s401, 1
      %s403 = scalar_select %p400, %s401, %s402
      %p406 = pneg %p400
      %p407 = scmp.eq.s32.totalorder %s29, 1
      %p408 = por %p406, %p407
      %p409 = scmp.ne.s32.totalorder %s401, %s404
      %p410 = scmp.eq.s32.totalorder %s29, 0
      %p411 = por %p409, %p410
      %p412 = scmp.ne.s32.totalorder %s401, %s404
      %p413 = scmp.eq.s32.totalorder %s34, 1
      %p414 = por %p412, %p413
      %p415 = scmp.ne.s32.totalorder %s404, %s405
      %p416 = scmp.eq.s32.totalorder %s34, 0
      %p417 = por %p415, %p416
      %p418 = scmp.ne.s32.totalorder %s404, %s405
      %p419 = scmp.eq.s32.totalorder %s35, 1
      %p420 = por %p418, %p419
      %p422 = scmp.ne.s32.totalorder %s405, %s421
      %p423 = scmp.eq.s32.totalorder %s35, 0
      %p424 = por %p422, %p423
      %s425 = ssub.s32 %s29, %s36
      %p426 = scmp.eq.s32.totalorder %s425, 0
      %s428 = sadd.s32 %s427, 1
      %s429 = scalar_select %p426, %s427, %s428
      %p432 = pneg %p426
      %p433 = scmp.eq.s32.totalorder %s29, 1
      %p434 = por %p432, %p433
      %p435 = scmp.ne.s32.totalorder %s427, %s430
      %p436 = scmp.eq.s32.totalorder %s29, 0
      %p437 = por %p435, %p436
      %p438 = scmp.ne.s32.totalorder %s427, %s430
      %p439 = scmp.eq.s32.totalorder %s34, 1
      %p440 = por %p438, %p439
      %p441 = scmp.ne.s32.totalorder %s430, %s431
      %p442 = scmp.eq.s32.totalorder %s34, 0
      %p443 = por %p441, %p442
      %p444 = scmp.ne.s32.totalorder %s430, %s431
      %p445 = scmp.eq.s32.totalorder %s35, 1
      %p446 = por %p444, %p445
      %p448 = scmp.ne.s32.totalorder %s431, %s447
      %p449 = scmp.eq.s32.totalorder %s35, 0
      %p450 = por %p448, %p449
      %p451 = scmp.le.s32.totalorder 1, %s29
      %p452 = scmp.lt.s32.totalorder %s29, 3
      %p453 = pnand %p451, %p452
      %p454 = pneg %p453
      // Predicated region
      $region9: #{run_fused.1} parent=5 // pred_check
        _
      $region10: #{run_fused.1} parent=5 // pred_check_branch
        %456 = sbr.rel (%p453) target = $region12
      $region11: #{run_fused.1} parent=5 // pred_region
        %s457 = ssub.s32 %s29, 1
        // Predicated region
        $region13: #{run_fused.1} parent=11 // pred_check
          %p458 = pneg %p76
        $region14: #{run_fused.1} parent=11 // pred_check_branch
          %460 = sbr.rel (%p458) target = $region16
        $region15: #{run_fused.1} parent=11 // pred_region
          _
        $region16: #{run_fused.1} parent=11 // pred_fallthru
          _
        // Predicated region
        $region17: #{run_fused.1} parent=11 // pred_check
          %p461 = pneg %p97
        $region18: #{run_fused.1} parent=11 // pred_check_branch
          %463 = sbr.rel (%p461) target = $region20
        $region19: #{run_fused.1} parent=11 // pred_region
          _
        $region20: #{run_fused.1} parent=11 // pred_fallthru
          _
        // Predicated region
        $region21: #{run_fused.1} parent=11 // pred_check
          %p464 = pneg %p118
        $region22: #{run_fused.1} parent=11 // pred_check_branch
          %466 = sbr.rel (%p464) target = $region24
        $region23: #{run_fused.1} parent=11 // pred_region
          _
        $region24: #{run_fused.1} parent=11 // pred_fallthru
          _
        // Predicated region
        $region25: #{run_fused.1} parent=11 // pred_check
          %p467 = pneg %p139
        $region26: #{run_fused.1} parent=11 // pred_check_branch
          %469 = sbr.rel (%p467) target = $region28
        $region27: #{run_fused.1} parent=11 // pred_region
          %471 = vsyncadd [#allocation3], 0
          %s472 = sshll.u32 %s4, 4
          %s473 = int_to_ptr.hbm [resolvable:$true] %s472
          %s474 = sshll.u32 [#allocation2], 4
          %s475 = int_to_ptr.vmem [resolvable:$true] %s474
          %480 = dma.hbm_to_vmem [thread:$0]  %s473, 112, %s475, [#allocation3], 16, 16, 1
        $region28: #{run_fused.1} parent=11 // pred_fallthru
          _
        // Predicated region
        $region29: #{run_fused.1} parent=11 // pred_check
          %p481 = pneg %p160
        $region30: #{run_fused.1} parent=11 // pred_check_branch
          %483 = sbr.rel (%p481) target = $region32
        $region31: #{run_fused.1} parent=11 // pred_region
          _
        $region32: #{run_fused.1} parent=11 // pred_fallthru
          _
        // Predicated region
        $region33: #{run_fused.1} parent=11 // pred_check
          %p484 = pneg %p181
        $region34: #{run_fused.1} parent=11 // pred_check_branch
          %486 = sbr.rel (%p484) target = $region36
        $region35: #{run_fused.1} parent=11 // pred_region
          _
        $region36: #{run_fused.1} parent=11 // pred_fallthru
          _
        // Predicated region
        $region37: #{run_fused.1} parent=11 // pred_check
          %p487 = pneg %p202
        $region38: #{run_fused.1} parent=11 // pred_check_branch
          %489 = sbr.rel (%p487) target = $region40
        $region39: #{run_fused.1} parent=11 // pred_region
          _
        $region40: #{run_fused.1} parent=11 // pred_fallthru
          _
        // Predicated region
        $region41: #{run_fused.1} parent=11 // pred_check
          %p490 = pneg %p223
        $region42: #{run_fused.1} parent=11 // pred_check_branch
          %492 = sbr.rel (%p490) target = $region44
        $region43: #{run_fused.1} parent=11 // pred_region
          %494 = vsyncadd [#allocation5], 0
          %s496 = sshll.u32 %s8, 4
          %s497 = int_to_ptr.hbm [resolvable:$true] %s496
          %s498 = sshll.u32 [#allocation4], 4
          %s499 = int_to_ptr.vmem [resolvable:$true] %s498
          %501 = dma.hbm_to_vmem [thread:$0]  %s497, 64, %s499, [#allocation5]
        $region44: #{run_fused.1} parent=11 // pred_fallthru
          _
        // Predicated region
        $region45: #{run_fused.1} parent=11 // pred_check
          %p502 = pneg %p244
        $region46: #{run_fused.1} parent=11 // pred_check_branch
          %504 = sbr.rel (%p502) target = $region48
        $region47: #{run_fused.1} parent=11 // pred_region
          _
        $region48: #{run_fused.1} parent=11 // pred_fallthru
          _
        // Predicated region
        $region49: #{run_fused.1} parent=11 // pred_check
          %p505 = pneg %p265
        $region50: #{run_fused.1} parent=11 // pred_check_branch
          %507 = sbr.rel (%p505) target = $region52
        $region51: #{run_fused.1} parent=11 // pred_region
          %509 = vsyncadd [#allocation5], 0
          %s511 = sshll.u32 %s10, 4
          %s512 = int_to_ptr.hbm [resolvable:$true] %s511
          %s513 = sshll.u32 [#allocation6], 4
          %s514 = int_to_ptr.vmem [resolvable:$true] %s513
          %516 = dma.hbm_to_vmem [thread:$0]  %s512, 16, %s514, [#allocation5]
        $region52: #{run_fused.1} parent=11 // pred_fallthru
          _
        // Predicated region
        $region53: #{run_fused.1} parent=11 // pred_check
          %p517 = pneg %p286
        $region54: #{run_fused.1} parent=11 // pred_check_branch
          %519 = sbr.rel (%p517) target = $region56
        $region55: #{run_fused.1} parent=11 // pred_region
          %521 = vsyncadd [#allocation8], 0
          %s522 = sshll.u32 %s11, 4
          %s523 = int_to_ptr.hbm [resolvable:$true] %s522
          %s524 = sshll.u32 [#allocation7], 4
          %s525 = int_to_ptr.vmem [resolvable:$true] %s524
          %530 = dma.hbm_to_vmem [thread:$0]  %s523, 7168, %s525, [#allocation8], 128, 128, 8
        $region56: #{run_fused.1} parent=11 // pred_fallthru
          _
        // Predicated region
        $region57: #{run_fused.1} parent=11 // pred_check
          %p531 = pneg %p307
        $region58: #{run_fused.1} parent=11 // pred_check_branch
          %533 = sbr.rel (%p531) target = $region60
        $region59: #{run_fused.1} parent=11 // pred_region
          %535 = vsyncadd [#allocation8], 0
          %s536 = sshll.u32 %s12, 4
          %s537 = int_to_ptr.hbm [resolvable:$true] %s536
          %s538 = sshll.u32 [#allocation9], 4
          %s539 = int_to_ptr.vmem [resolvable:$true] %s538
          %544 = dma.hbm_to_vmem [thread:$0]  %s537, 112, %s539, [#allocation8], 16, 16, 1
        $region60: #{run_fused.1} parent=11 // pred_fallthru
          _
        // Predicated region
        $region61: #{run_fused.1} parent=11 // pred_check
          %p545 = pneg %p328
        $region62: #{run_fused.1} parent=11 // pred_check_branch
          %547 = sbr.rel (%p545) target = $region64
        $region63: #{run_fused.1} parent=11 // pred_region
          %549 = vsyncadd [#allocation11], 0
          %s551 = sshll.u32 %s13, 4
          %s552 = int_to_ptr.hbm [resolvable:$true] %s551
          %s553 = sshll.u32 [#allocation10], 4
          %s554 = int_to_ptr.vmem [resolvable:$true] %s553
          %556 = dma.hbm_to_vmem [thread:$0]  %s552, 64, %s554, [#allocation11]
        $region64: #{run_fused.1} parent=11 // pred_fallthru
          _
        // Predicated region
        $region65: #{run_fused.1} parent=11 // pred_check
          %p557 = pneg %p349
        $region66: #{run_fused.1} parent=11 // pred_check_branch
          %559 = sbr.rel (%p557) target = $region68
        $region67: #{run_fused.1} parent=11 // pred_region
          _
        $region68: #{run_fused.1} parent=11 // pred_fallthru
          _
        // Predicated region
        $region69: #{run_fused.1} parent=11 // pred_check
          %p560 = pneg %p370
        $region70: #{run_fused.1} parent=11 // pred_check_branch
          %562 = sbr.rel (%p560) target = $region72
        $region71: #{run_fused.1} parent=11 // pred_region
          _
        $region72: #{run_fused.1} parent=11 // pred_fallthru
          _
        // Predicated region
        $region73: #{run_fused.1} parent=11 // pred_check
          %p563 = pneg %p391
        $region74: #{run_fused.1} parent=11 // pred_check_branch
          %565 = sbr.rel (%p563) target = $region76
        $region75: #{run_fused.1} parent=11 // pred_region
          %567 = vsyncadd [#allocation11], 0
          %s569 = sshll.u32 %s16, 4
          %s570 = int_to_ptr.hbm [resolvable:$true] %s569
          %s571 = sshll.u32 [#allocation12], 4
          %s572 = int_to_ptr.vmem [resolvable:$true] %s571
          %574 = dma.hbm_to_vmem [thread:$0]  %s570, 16, %s572, [#allocation11]
        $region76: #{run_fused.1} parent=11 // pred_fallthru
          _
      $region12: #{run_fused.1} parent=5 // pred_fallthru
        _
      %p575 = scmp.lt.s32.totalorder %s29, 2
      // Predicated region
      $region77: #{run_fused.1} parent=5 // pred_check
        %p576 = pneg %p575
      $region78: #{run_fused.1} parent=5 // pred_check_branch
        %578 = sbr.rel (%p576) target = $region80
      $region79: #{run_fused.1} parent=5 // pred_region
        // Predicated region
        $region81: #{run_fused.1} parent=79 // pred_check
          %p579 = pneg %p49
        $region82: #{run_fused.1} parent=79 // pred_check_branch
          %581 = sbr.rel (%p579) target = $region84
        $region83: #{run_fused.1} parent=79 // pred_region
          %s582 = smul.u32 16, %s29
          %p583 = scmp.lt.s32.totalorder %s582, 31
          %s584 = scalar_select %p583, %s582, 31
          %s585 = smul.addr %s584, 8
          %s586 = scalar_lea.vmem %s0, %s585
          %s587 = smul.u32 16, %s29
        $region84: #{run_fused.1} parent=79 // pred_fallthru
          _
      $region80: #{run_fused.1} parent=5 // pred_fallthru
        _
      %p588 = scmp.le.s32.totalorder 1, %s29
      %p589 = scmp.lt.s32.totalorder %s29, 3
      %p590 = pnand %p588, %p589
      %p591 = pneg %p590
      // Predicated region
      $region85: #{run_fused.1} parent=5 // pred_check
        _
      $region86: #{run_fused.1} parent=5 // pred_check_branch
        %593 = sbr.rel (%p590) target = $region88
      $region87: #{run_fused.1} parent=5 // pred_region
        %s594 = ssub.s32 %s29, 1
        // Predicated region
        $region89: #{run_fused.1} parent=87 // pred_check
          %p595 = pneg %p139
        $region90: #{run_fused.1} parent=87 // pred_check_branch
          %597 = sbr.rel (%p595) target = $region92
        $region91: #{run_fused.1} parent=87 // pred_region
          %599 = dma.done [#allocation3], 112
        $region92: #{run_fused.1} parent=87 // pred_fallthru
          _
        // Predicated region
        $region93: #{run_fused.1} parent=87 // pred_check
          %p600 = pneg %p223
        $region94: #{run_fused.1} parent=87 // pred_check_branch
          %602 = sbr.rel (%p600) target = $region96
        $region95: #{run_fused.1} parent=87 // pred_region
          %604 = dma.done [#allocation5], 64
        $region96: #{run_fused.1} parent=87 // pred_fallthru
          _
        // Predicated region
        $region97: #{run_fused.1} parent=87 // pred_check
          %p605 = pneg %p265
        $region98: #{run_fused.1} parent=87 // pred_check_branch
          %607 = sbr.rel (%p605) target = $region100
        $region99: #{run_fused.1} parent=87 // pred_region
          %609 = dma.done [#allocation5], 16
        $region100: #{run_fused.1} parent=87 // pred_fallthru
          _
        // Predicated region
        $region101: #{run_fused.1} parent=87 // pred_check
          %p610 = pneg %p286
        $region102: #{run_fused.1} parent=87 // pred_check_branch
          %612 = sbr.rel (%p610) target = $region104
        $region103: #{run_fused.1} parent=87 // pred_region
          %614 = dma.done [#allocation8], 7168
        $region104: #{run_fused.1} parent=87 // pred_fallthru
          _
        // Predicated region
        $region105: #{run_fused.1} parent=87 // pred_check
          %p615 = pneg %p307
        $region106: #{run_fused.1} parent=87 // pred_check_branch
          %617 = sbr.rel (%p615) target = $region108
        $region107: #{run_fused.1} parent=87 // pred_region
          %619 = dma.done [#allocation8], 112
        $region108: #{run_fused.1} parent=87 // pred_fallthru
          _
        // Predicated region
        $region109: #{run_fused.1} parent=87 // pred_check
          %p620 = pneg %p328
        $region110: #{run_fused.1} parent=87 // pred_check_branch
          %622 = sbr.rel (%p620) target = $region112
        $region111: #{run_fused.1} parent=87 // pred_region
          %624 = dma.done [#allocation11], 64
        $region112: #{run_fused.1} parent=87 // pred_fallthru
          _
        // Predicated region
        $region113: #{run_fused.1} parent=87 // pred_check
          %p625 = pneg %p391
        $region114: #{run_fused.1} parent=87 // pred_check_branch
          %627 = sbr.rel (%p625) target = $region116
        $region115: #{run_fused.1} parent=87 // pred_region
          %629 = dma.done [#allocation11], 16
        $region116: #{run_fused.1} parent=87 // pred_fallthru
          _
        %s630 = smul.u32 16, %s34
        %p631 = scmp.lt.s32.totalorder %s630, 31
        %s632 = scalar_select %p631, %s630, 31
        %s633 = smul.addr %s632, 8
        %s634 = scalar_lea.vmem %s0, %s633
        %p635 = pneg %p55
        %p636 = pneg %p52
        %p637 = pneg %p76
        %p638 = pneg %p73
        %p639 = pneg %p97
        %p640 = pneg %p94
        %p641 = pneg %p118
        %p642 = pneg %p115
        %p643 = pneg %p139
        %p644 = pneg %p136
        %p645 = pneg %p160
        %p646 = pneg %p157
        %p647 = pneg %p181
        %p648 = pneg %p178
        %p649 = pneg %p202
        %p650 = pneg %p199
        %p651 = pneg %p223
        %p652 = pneg %p220
        %p653 = pneg %p244
        %p654 = pneg %p241
        %p655 = pneg %p265
        %p656 = pneg %p262
        %p657 = pneg %p286
        %p658 = pneg %p283
        %p659 = pneg %p307
        %p660 = pneg %p304
        %p661 = pneg %p328
        %p662 = pneg %p325
        %p663 = pneg %p349
        %p664 = pneg %p346
        %p665 = pneg %p370
        %p666 = pneg %p367
        %p667 = pneg %p391
        %p668 = pneg %p388
        %p669 = pneg %p417
        %p670 = pneg %p414
        %s671 = smul.u32 16, %s34
        %p672 = scmp.lt.s32.totalorder %s671, 31
        %s673 = scalar_select %p672, %s671, 31
        %s674 = smul.addr %s673, 8
        %s675 = scalar_lea.vmem %s17, %s674
        %p676 = pneg %p443
        %p677 = pneg %p440
        %s678 = smul.u32 16, %s34
        %p679 = scmp.lt.s32.totalorder %s678, 31
        %s680 = scalar_select %p679, %s678, 31
        %s681 = smul.addr %s680, 8
        %s682 = scalar_lea.vmem %s18, %s681
        %s683 = smul.u32 16, %s34
        %p684 = scmp.lt.s32.totalorder %s683, 31
        %s685 = scalar_select %p684, %s683, 31
        %s686 = smul.addr %s685, 8
        %s687 = scalar_lea.vmem %s0, %s686
        %s688 = smul.u32 16, %s34
        %s689 = smul.u32 16, %s34
        %p690 = scmp.lt.s32.totalorder %s689, 31
        %s691 = scalar_select %p690, %s689, 31
        %s692 = smul.addr %s691, 8
        %s693 = scalar_lea.vmem %s17, %s692
        %s694 = smul.u32 16, %s34
        %s695 = smul.u32 16, %s34
        %p696 = scmp.lt.s32.totalorder %s695, 31
        %s697 = scalar_select %p696, %s695, 31
        %s698 = smul.addr %s697, 8
        %s699 = scalar_lea.vmem %s18, %s698
        %s700 = smul.u32 16, %s34
        %v701 = vld [vmem:[%s687] sm:$0xff]
        %v702 = vld [vmem:[%s687 + $0x8] sm:$0xff]
        %v703 = vld [vmem:[%s687 + $0x10] sm:$0xff]
        %v704 = vld [vmem:[%s687 + $0x18] sm:$0xff]
        %v705 = vld [vmem:[%s687 + $0x20] sm:$0xff]
        %v706 = vld [vmem:[%s687 + $0x28] sm:$0xff]
        %v707 = vld [vmem:[%s687 + $0x30] sm:$0xff]
        %v708 = vld [vmem:[%s687 + $0x38] sm:$0xff]
        %v709 = vld [vmem:[%s687 + $0x40] sm:$0xff]
        %v710 = vld [vmem:[%s687 + $0x48] sm:$0xff]
        %v711 = vld [vmem:[%s687 + $0x50] sm:$0xff]
        %v712 = vld [vmem:[%s687 + $0x58] sm:$0xff]
        %v713 = vld [vmem:[%s687 + $0x60] sm:$0xff]
        %v714 = vld [vmem:[%s687 + $0x68] sm:$0xff]
        %v715 = vld [vmem:[%s687 + $0x70] sm:$0xff]
        %v716 = vld [vmem:[%s687 + $0x78] sm:$0xff]
        %v717 = vld [vmem:[%s1] sm:$0xf]
        %v718 = vld [vmem:[%s2] sm:$0x1]
        %v720 = vperm.slane %v718, 0
        %vm722 = vcmask 31744
        %v724 = vsel %vm722, %v701, 0
        %v727 = vsel %vm722, %v702, 0
        %v730 = vsel %vm722, %v703, 0
        %v733 = vsel %vm722, %v704, 0
        %v736 = vsel %vm722, %v705, 0
        %v739 = vsel %vm722, %v706, 0
        %v742 = vsel %vm722, %v707, 0
        %v745 = vsel %vm722, %v708, 0
        %v748 = vsel %vm722, %v709, 0
        %v751 = vsel %vm722, %v710, 0
        %v754 = vsel %vm722, %v711, 0
        %v757 = vsel %vm722, %v712, 0
        %v760 = vsel %vm722, %v713, 0
        %v763 = vsel %vm722, %v714, 0
        %v766 = vsel %vm722, %v715, 0
        %v769 = vsel %vm722, %v716, 0
        %vm771 = vcmask 1043456
        %v773 = vsel %vm771, %v717, 0
        %775 = vmatpush.msra.mxu0 0.0
        %776 = vmatpush.msra.mxu0 0.0
        %777 = vmatpush.msra.mxu0 0.0
        %778 = vmatpush.msra.mxu0 0.0
        %779 = vmatpush.msra.mxu0 0.0
        %780 = vmatpush.msra.mxu0 0.0
        %781 = vmatpush.msra.mxu0 0.0
        %782 = vmatpush.msra.mxu0 0.0
        %783 = vmatpush.msra.mxu0 0.0
        %784 = vmatpush.msra.mxu0 0.0
        %785 = vmatpush.msra.mxu0 0.0
        %786 = vmatpush.msra.mxu0 0.0
        %787 = vmatpush.msra.mxu0 0.0
        %788 = vmatpush.msra.mxu0 0.0
        %789 = vmatpush.msra.mxu0 0.0
        %790 = vmatpush.msra.mxu0 %v773
        %791 = vmatmul.f32.gmra.mxu0 %v724
        %v792 = vpop.f32.mrf.mxu0
        %v793 = vadd.f32 %v720, %v792
        %794 = vmatmul.f32.gmra.mxu0 %v727
        %v795 = vpop.f32.mrf.mxu0
        %v796 = vadd.f32 %v720, %v795
        %797 = vmatmul.f32.gmra.mxu0 %v730
        %v798 = vpop.f32.mrf.mxu0
        %v799 = vadd.f32 %v720, %v798
        %800 = vmatmul.f32.gmra.mxu0 %v733
        %v801 = vpop.f32.mrf.mxu0
        %v802 = vadd.f32 %v720, %v801
        %803 = vmatmul.f32.gmra.mxu0 %v736
        %v804 = vpop.f32.mrf.mxu0
        %v805 = vadd.f32 %v720, %v804
        %806 = vmatmul.f32.gmra.mxu0 %v739
        %v807 = vpop.f32.mrf.mxu0
        %v808 = vadd.f32 %v720, %v807
        %809 = vmatmul.f32.gmra.mxu0 %v742
        %v810 = vpop.f32.mrf.mxu0
        %v811 = vadd.f32 %v720, %v810
        %812 = vmatmul.f32.gmra.mxu0 %v745
        %v813 = vpop.f32.mrf.mxu0
        %v814 = vadd.f32 %v720, %v813
        %815 = vmatmul.f32.gmra.mxu0 %v748
        %v816 = vpop.f32.mrf.mxu0
        %v817 = vadd.f32 %v720, %v816
        %818 = vmatmul.f32.gmra.mxu0 %v751
        %v819 = vpop.f32.mrf.mxu0
        %v820 = vadd.f32 %v720, %v819
        %821 = vmatmul.f32.gmra.mxu0 %v754
        %v822 = vpop.f32.mrf.mxu0
        %v823 = vadd.f32 %v720, %v822
        %824 = vmatmul.f32.gmra.mxu0 %v757
        %v825 = vpop.f32.mrf.mxu0
        %v826 = vadd.f32 %v720, %v825
        %827 = vmatmul.f32.gmra.mxu0 %v760
        %v828 = vpop.f32.mrf.mxu0
        %v829 = vadd.f32 %v720, %v828
        %830 = vmatmul.f32.gmra.mxu0 %v763
        %v831 = vpop.f32.mrf.mxu0
        %v832 = vadd.f32 %v720, %v831
        %833 = vmatmul.f32.gmra.mxu0 %v766
        %v834 = vpop.f32.mrf.mxu0
        %v835 = vadd.f32 %v720, %v834
        %836 = vmatmul.f32.gmra.mxu0 %v769
        %v837 = vpop.f32.mrf.mxu0
        %v838 = vadd.f32 %v720, %v837
        %839 = vdwg.mxu0
        %v840 = vmax.f32 %v793, 0.0
        %v841 = vmax.f32 %v796, 0.0
        %v842 = vmax.f32 %v799, 0.0
        %v843 = vmax.f32 %v802, 0.0
        %v844 = vmax.f32 %v805, 0.0
        %v845 = vmax.f32 %v808, 0.0
        %v846 = vmax.f32 %v811, 0.0
        %v847 = vmax.f32 %v814, 0.0
        %v848 = vmax.f32 %v817, 0.0
        %v849 = vmax.f32 %v820, 0.0
        %v850 = vmax.f32 %v823, 0.0
        %v851 = vmax.f32 %v826, 0.0
        %v852 = vmax.f32 %v829, 0.0
        %v853 = vmax.f32 %v832, 0.0
        %v854 = vmax.f32 %v835, 0.0
        %v855 = vmax.f32 %v838, 0.0
        %v856 = vld [vmem:[%s3] sm:$0xff]
        %v857 = vld [vmem:[%s3 + $0x8] sm:$0xff]
        %v858 = vld [vmem:[%s3 + $0x10] sm:$0xff]
        %v859 = vld [vmem:[%s3 + $0x18] sm:$0xff]
        %v860 = vld [vmem:[%s3 + $0x20] sm:$0xff]
        %v861 = vld [vmem:[%s3 + $0x28] sm:$0xff]
        %v862 = vld [vmem:[%s3 + $0x30] sm:$0xff]
        %v863 = vld [vmem:[%s3 + $0x38] sm:$0xff]
        %v864 = vld [vmem:[#allocation2] sm:$0x1]
        %v866 = vperm.slane %v864, 0
        %vm868 = vcmask 523264
        %v870 = vsel %vm868, %v840, 0
        %v873 = vsel %vm868, %v841, 0
        %v876 = vsel %vm868, %v842, 0
        %v879 = vsel %vm868, %v843, 0
        %v882 = vsel %vm868, %v844, 0
        %v885 = vsel %vm868, %v845, 0
        %v888 = vsel %vm868, %v846, 0
        %v891 = vsel %vm868, %v847, 0
        %v894 = vsel %vm868, %v848, 0
        %v897 = vsel %vm868, %v849, 0
        %v900 = vsel %vm868, %v850, 0
        %v903 = vsel %vm868, %v851, 0
        %v906 = vsel %vm868, %v852, 0
        %v909 = vsel %vm868, %v853, 0
        %v912 = vsel %vm868, %v854, 0
        %v915 = vsel %vm868, %v855, 0
        %917 = vmatpush.msra.mxu0 0.0
        %918 = vmatpush.msra.mxu0 0.0
        %919 = vmatpush.msra.mxu0 0.0
        %920 = vmatpush.msra.mxu0 0.0
        %921 = vmatpush.msra.mxu0 0.0
        %922 = vmatpush.msra.mxu0 0.0
        %923 = vmatpush.msra.mxu0 0.0
        %924 = vmatpush.msra.mxu0 0.0
        %925 = vmatpush.msra.mxu0 %v863
        %926 = vmatpush.msra.mxu0 %v862
        %927 = vmatpush.msra.mxu0 %v861
        %928 = vmatpush.msra.mxu0 %v860
        %929 = vmatpush.msra.mxu0 %v859
        %930 = vmatpush.msra.mxu0 %v858
        %931 = vmatpush.msra.mxu0 %v857
        %932 = vmatpush.msra.mxu0 %v856
        %933 = vmatmul.f32.gmra.mxu0 %v870
        %v934 = vpop.f32.mrf.mxu0
        %v935 = vadd.f32 %v866, %v934
        %936 = vmatmul.f32.gmra.mxu0 %v873
        %v937 = vpop.f32.mrf.mxu0
        %v938 = vadd.f32 %v866, %v937
        %939 = vmatmul.f32.gmra.mxu0 %v876
        %v940 = vpop.f32.mrf.mxu0
        %v941 = vadd.f32 %v866, %v940
        %942 = vmatmul.f32.gmra.mxu0 %v879
        %v943 = vpop.f32.mrf.mxu0
        %v944 = vadd.f32 %v866, %v943
        %945 = vmatmul.f32.gmra.mxu0 %v882
        %v946 = vpop.f32.mrf.mxu0
        %v947 = vadd.f32 %v866, %v946
        %948 = vmatmul.f32.gmra.mxu0 %v885
        %v949 = vpop.f32.mrf.mxu0
        %v950 = vadd.f32 %v866, %v949
        %951 = vmatmul.f32.gmra.mxu0 %v888
        %v952 = vpop.f32.mrf.mxu0
        %v953 = vadd.f32 %v866, %v952
        %954 = vmatmul.f32.gmra.mxu0 %v891
        %v955 = vpop.f32.mrf.mxu0
        %v956 = vadd.f32 %v866, %v955
        %957 = vmatmul.f32.gmra.mxu0 %v894
        %v958 = vpop.f32.mrf.mxu0
        %v959 = vadd.f32 %v866, %v958
        %960 = vmatmul.f32.gmra.mxu0 %v897
        %v961 = vpop.f32.mrf.mxu0
        %v962 = vadd.f32 %v866, %v961
        %963 = vmatmul.f32.gmra.mxu0 %v900
        %v964 = vpop.f32.mrf.mxu0
        %v965 = vadd.f32 %v866, %v964
        %966 = vmatmul.f32.gmra.mxu0 %v903
        %v967 = vpop.f32.mrf.mxu0
        %v968 = vadd.f32 %v866, %v967
        %969 = vmatmul.f32.gmra.mxu0 %v906
        %v970 = vpop.f32.mrf.mxu0
        %v971 = vadd.f32 %v866, %v970
        %972 = vmatmul.f32.gmra.mxu0 %v909
        %v973 = vpop.f32.mrf.mxu0
        %v974 = vadd.f32 %v866, %v973
        %975 = vmatmul.f32.gmra.mxu0 %v912
        %v976 = vpop.f32.mrf.mxu0
        %v977 = vadd.f32 %v866, %v976
        %978 = vmatmul.f32.gmra.mxu0 %v915
        %v979 = vpop.f32.mrf.mxu0
        %v980 = vadd.f32 %v866, %v979
        %981 = vdwg.mxu0
        %v982 = vmax.f32 %v935, 0.0
        %v983 = vmax.f32 %v938, 0.0
        %v984 = vmax.f32 %v941, 0.0
        %v985 = vmax.f32 %v944, 0.0
        %v986 = vmax.f32 %v947, 0.0
        %v987 = vmax.f32 %v950, 0.0
        %v988 = vmax.f32 %v953, 0.0
        %v989 = vmax.f32 %v956, 0.0
        %v990 = vmax.f32 %v959, 0.0
        %v991 = vmax.f32 %v962, 0.0
        %v992 = vmax.f32 %v965, 0.0
        %v993 = vmax.f32 %v968, 0.0
        %v994 = vmax.f32 %v971, 0.0
        %v995 = vmax.f32 %v974, 0.0
        %v996 = vmax.f32 %v977, 0.0
        %v997 = vmax.f32 %v980, 0.0
        %s998 = scalar_lea.vmem %s3, 64
        %v999 = vld [vmem:[%s998] sm:$0xff]
        %v1000 = vld [vmem:[%s998 + $0x8] sm:$0xff]
        %v1001 = vld [vmem:[%s998 + $0x10] sm:$0xff]
        %v1002 = vld [vmem:[%s998 + $0x18] sm:$0xff]
        %v1003 = vld [vmem:[%s998 + $0x20] sm:$0xff]
        %v1004 = vld [vmem:[%s998 + $0x28] sm:$0xff]
        %v1005 = vld [vmem:[%s998 + $0x30] sm:$0xff]
        %v1006 = vld [vmem:[%s998 + $0x38] sm:$0xff]
        %s1007 = scalar_lea.vmem [#allocation2], 1
        %v1008 = vld [vmem:[%s1007] sm:$0x1]
        %v1010 = vperm.slane %v1008, 0
        %v1013 = vsel %vm868, %v982, 0
        %v1016 = vsel %vm868, %v983, 0
        %v1019 = vsel %vm868, %v984, 0
        %v1022 = vsel %vm868, %v985, 0
        %v1025 = vsel %vm868, %v986, 0
        %v1028 = vsel %vm868, %v987, 0
        %v1031 = vsel %vm868, %v988, 0
        %v1034 = vsel %vm868, %v989, 0
        %v1037 = vsel %vm868, %v990, 0
        %v1040 = vsel %vm868, %v991, 0
        %v1043 = vsel %vm868, %v992, 0
        %v1046 = vsel %vm868, %v993, 0
        %v1049 = vsel %vm868, %v994, 0
        %v1052 = vsel %vm868, %v995, 0
        %v1055 = vsel %vm868, %v996, 0
        %v1058 = vsel %vm868, %v997, 0
        %1060 = vmatpush.msra.mxu0 0.0
        %1061 = vmatpush.msra.mxu0 0.0
        %1062 = vmatpush.msra.mxu0 0.0
        %1063 = vmatpush.msra.mxu0 0.0
        %1064 = vmatpush.msra.mxu0 0.0
        %1065 = vmatpush.msra.mxu0 0.0
        %1066 = vmatpush.msra.mxu0 0.0
        %1067 = vmatpush.msra.mxu0 0.0
        %1068 = vmatpush.msra.mxu0 %v1006
        %1069 = vmatpush.msra.mxu0 %v1005
        %1070 = vmatpush.msra.mxu0 %v1004
        %1071 = vmatpush.msra.mxu0 %v1003
        %1072 = vmatpush.msra.mxu0 %v1002
        %1073 = vmatpush.msra.mxu0 %v1001
        %1074 = vmatpush.msra.mxu0 %v1000
        %1075 = vmatpush.msra.mxu0 %v999
        %1076 = vmatmul.f32.gmra.mxu0 %v1013
        %v1077 = vpop.f32.mrf.mxu0
        %v1078 = vadd.f32 %v1010, %v1077
        %1079 = vmatmul.f32.gmra.mxu0 %v1016
        %v1080 = vpop.f32.mrf.mxu0
        %v1081 = vadd.f32 %v1010, %v1080
        %1082 = vmatmul.f32.gmra.mxu0 %v1019
        %v1083 = vpop.f32.mrf.mxu0
        %v1084 = vadd.f32 %v1010, %v1083
        %1085 = vmatmul.f32.gmra.mxu0 %v1022
        %v1086 = vpop.f32.mrf.mxu0
        %v1087 = vadd.f32 %v1010, %v1086
        %1088 = vmatmul.f32.gmra.mxu0 %v1025
        %v1089 = vpop.f32.mrf.mxu0
        %v1090 = vadd.f32 %v1010, %v1089
        %1091 = vmatmul.f32.gmra.mxu0 %v1028
        %v1092 = vpop.f32.mrf.mxu0
        %v1093 = vadd.f32 %v1010, %v1092
        %1094 = vmatmul.f32.gmra.mxu0 %v1031
        %v1095 = vpop.f32.mrf.mxu0
        %v1096 = vadd.f32 %v1010, %v1095
        %1097 = vmatmul.f32.gmra.mxu0 %v1034
        %v1098 = vpop.f32.mrf.mxu0
        %v1099 = vadd.f32 %v1010, %v1098
        %1100 = vmatmul.f32.gmra.mxu0 %v1037
        %v1101 = vpop.f32.mrf.mxu0
        %v1102 = vadd.f32 %v1010, %v1101
        %1103 = vmatmul.f32.gmra.mxu0 %v1040
        %v1104 = vpop.f32.mrf.mxu0
        %v1105 = vadd.f32 %v1010, %v1104
        %1106 = vmatmul.f32.gmra.mxu0 %v1043
        %v1107 = vpop.f32.mrf.mxu0
        %v1108 = vadd.f32 %v1010, %v1107
        %1109 = vmatmul.f32.gmra.mxu0 %v1046
        %v1110 = vpop.f32.mrf.mxu0
        %v1111 = vadd.f32 %v1010, %v1110
        %1112 = vmatmul.f32.gmra.mxu0 %v1049
        %v1113 = vpop.f32.mrf.mxu0
        %v1114 = vadd.f32 %v1010, %v1113
        %1115 = vmatmul.f32.gmra.mxu0 %v1052
        %v1116 = vpop.f32.mrf.mxu0
        %v1117 = vadd.f32 %v1010, %v1116
        %1118 = vmatmul.f32.gmra.mxu0 %v1055
        %v1119 = vpop.f32.mrf.mxu0
        %v1120 = vadd.f32 %v1010, %v1119
        %1121 = vmatmul.f32.gmra.mxu0 %v1058
        %v1122 = vpop.f32.mrf.mxu0
        %v1123 = vadd.f32 %v1010, %v1122
        %1124 = vdwg.mxu0
        %v1125 = vmax.f32 %v1078, 0.0
        %v1126 = vmax.f32 %v1081, 0.0
        %v1127 = vmax.f32 %v1084, 0.0
        %v1128 = vmax.f32 %v1087, 0.0
        %v1129 = vmax.f32 %v1090, 0.0
        %v1130 = vmax.f32 %v1093, 0.0
        %v1131 = vmax.f32 %v1096, 0.0
        %v1132 = vmax.f32 %v1099, 0.0
        %v1133 = vmax.f32 %v1102, 0.0
        %v1134 = vmax.f32 %v1105, 0.0
        %v1135 = vmax.f32 %v1108, 0.0
        %v1136 = vmax.f32 %v1111, 0.0
        %v1137 = vmax.f32 %v1114, 0.0
        %v1138 = vmax.f32 %v1117, 0.0
        %v1139 = vmax.f32 %v1120, 0.0
        %v1140 = vmax.f32 %v1123, 0.0
        %s1141 = scalar_lea.vmem %s3, 128
        %v1142 = vld [vmem:[%s1141] sm:$0xff]
        %v1143 = vld [vmem:[%s1141 + $0x8] sm:$0xff]
        %v1144 = vld [vmem:[%s1141 + $0x10] sm:$0xff]
        %v1145 = vld [vmem:[%s1141 + $0x18] sm:$0xff]
        %v1146 = vld [vmem:[%s1141 + $0x20] sm:$0xff]
        %v1147 = vld [vmem:[%s1141 + $0x28] sm:$0xff]
        %v1148 = vld [vmem:[%s1141 + $0x30] sm:$0xff]
        %v1149 = vld [vmem:[%s1141 + $0x38] sm:$0xff]
        %s1150 = scalar_lea.vmem [#allocation2], 2
        %v1151 = vld [vmem:[%s1150] sm:$0x1]
        %v1153 = vperm.slane %v1151, 0
        %v1156 = vsel %vm868, %v1125, 0
        %v1159 = vsel %vm868, %v1126, 0
        %v1162 = vsel %vm868, %v1127, 0
        %v1165 = vsel %vm868, %v1128, 0
        %v1168 = vsel %vm868, %v1129, 0
        %v1171 = vsel %vm868, %v1130, 0
        %v1174 = vsel %vm868, %v1131, 0
        %v1177 = vsel %vm868, %v1132, 0
        %v1180 = vsel %vm868, %v1133, 0
        %v1183 = vsel %vm868, %v1134, 0
        %v1186 = vsel %vm868, %v1135, 0
        %v1189 = vsel %vm868, %v1136, 0
        %v1192 = vsel %vm868, %v1137, 0
        %v1195 = vsel %vm868, %v1138, 0
        %v1198 = vsel %vm868, %v1139, 0
        %v1201 = vsel %vm868, %v1140, 0
        %1203 = vmatpush.msra.mxu0 0.0
        %1204 = vmatpush.msra.mxu0 0.0
        %1205 = vmatpush.msra.mxu0 0.0
        %1206 = vmatpush.msra.mxu0 0.0
        %1207 = vmatpush.msra.mxu0 0.0
        %1208 = vmatpush.msra.mxu0 0.0
        %1209 = vmatpush.msra.mxu0 0.0
        %1210 = vmatpush.msra.mxu0 0.0
        %1211 = vmatpush.msra.mxu0 %v1149
        %1212 = vmatpush.msra.mxu0 %v1148
        %1213 = vmatpush.msra.mxu0 %v1147
        %1214 = vmatpush.msra.mxu0 %v1146
        %1215 = vmatpush.msra.mxu0 %v1145
        %1216 = vmatpush.msra.mxu0 %v1144
        %1217 = vmatpush.msra.mxu0 %v1143
        %1218 = vmatpush.msra.mxu0 %v1142
        %1219 = vmatmul.f32.gmra.mxu0 %v1156
        %v1220 = vpop.f32.mrf.mxu0
        %v1221 = vadd.f32 %v1153, %v1220
        %1222 = vmatmul.f32.gmra.mxu0 %v1159
        %v1223 = vpop.f32.mrf.mxu0
        %v1224 = vadd.f32 %v1153, %v1223
        %1225 = vmatmul.f32.gmra.mxu0 %v1162
        %v1226 = vpop.f32.mrf.mxu0
        %v1227 = vadd.f32 %v1153, %v1226
        %1228 = vmatmul.f32.gmra.mxu0 %v1165
        %v1229 = vpop.f32.mrf.mxu0
        %v1230 = vadd.f32 %v1153, %v1229
        %1231 = vmatmul.f32.gmra.mxu0 %v1168
        %v1232 = vpop.f32.mrf.mxu0
        %v1233 = vadd.f32 %v1153, %v1232
        %1234 = vmatmul.f32.gmra.mxu0 %v1171
        %v1235 = vpop.f32.mrf.mxu0
        %v1236 = vadd.f32 %v1153, %v1235
        %1237 = vmatmul.f32.gmra.mxu0 %v1174
        %v1238 = vpop.f32.mrf.mxu0
        %v1239 = vadd.f32 %v1153, %v1238
        %1240 = vmatmul.f32.gmra.mxu0 %v1177
        %v1241 = vpop.f32.mrf.mxu0
        %v1242 = vadd.f32 %v1153, %v1241
        %1243 = vmatmul.f32.gmra.mxu0 %v1180
        %v1244 = vpop.f32.mrf.mxu0
        %v1245 = vadd.f32 %v1153, %v1244
        %1246 = vmatmul.f32.gmra.mxu0 %v1183
        %v1247 = vpop.f32.mrf.mxu0
        %v1248 = vadd.f32 %v1153, %v1247
        %1249 = vmatmul.f32.gmra.mxu0 %v1186
        %v1250 = vpop.f32.mrf.mxu0
        %v1251 = vadd.f32 %v1153, %v1250
        %1252 = vmatmul.f32.gmra.mxu0 %v1189
        %v1253 = vpop.f32.mrf.mxu0
        %v1254 = vadd.f32 %v1153, %v1253
        %1255 = vmatmul.f32.gmra.mxu0 %v1192
        %v1256 = vpop.f32.mrf.mxu0
        %v1257 = vadd.f32 %v1153, %v1256
        %1258 = vmatmul.f32.gmra.mxu0 %v1195
        %v1259 = vpop.f32.mrf.mxu0
        %v1260 = vadd.f32 %v1153, %v1259
        %1261 = vmatmul.f32.gmra.mxu0 %v1198
        %v1262 = vpop.f32.mrf.mxu0
        %v1263 = vadd.f32 %v1153, %v1262
        %1264 = vmatmul.f32.gmra.mxu0 %v1201
        %v1265 = vpop.f32.mrf.mxu0
        %v1266 = vadd.f32 %v1153, %v1265
        %1267 = vdwg.mxu0
        %v1268 = vmax.f32 %v1221, 0.0
        %v1269 = vmax.f32 %v1224, 0.0
        %v1270 = vmax.f32 %v1227, 0.0
        %v1271 = vmax.f32 %v1230, 0.0
        %v1272 = vmax.f32 %v1233, 0.0
        %v1273 = vmax.f32 %v1236, 0.0
        %v1274 = vmax.f32 %v1239, 0.0
        %v1275 = vmax.f32 %v1242, 0.0
        %v1276 = vmax.f32 %v1245, 0.0
        %v1277 = vmax.f32 %v1248, 0.0
        %v1278 = vmax.f32 %v1251, 0.0
        %v1279 = vmax.f32 %v1254, 0.0
        %v1280 = vmax.f32 %v1257, 0.0
        %v1281 = vmax.f32 %v1260, 0.0
        %v1282 = vmax.f32 %v1263, 0.0
        %v1283 = vmax.f32 %v1266, 0.0
        %s1284 = scalar_lea.vmem %s3, 192
        %v1285 = vld [vmem:[%s1284] sm:$0xff]
        %v1286 = vld [vmem:[%s1284 + $0x8] sm:$0xff]
        %v1287 = vld [vmem:[%s1284 + $0x10] sm:$0xff]
        %v1288 = vld [vmem:[%s1284 + $0x18] sm:$0xff]
        %v1289 = vld [vmem:[%s1284 + $0x20] sm:$0xff]
        %v1290 = vld [vmem:[%s1284 + $0x28] sm:$0xff]
        %v1291 = vld [vmem:[%s1284 + $0x30] sm:$0xff]
        %v1292 = vld [vmem:[%s1284 + $0x38] sm:$0xff]
        %s1293 = scalar_lea.vmem [#allocation2], 3
        %v1294 = vld [vmem:[%s1293] sm:$0x1]
        %v1296 = vperm.slane %v1294, 0
        %v1299 = vsel %vm868, %v1268, 0
        %v1302 = vsel %vm868, %v1269, 0
        %v1305 = vsel %vm868, %v1270, 0
        %v1308 = vsel %vm868, %v1271, 0
        %v1311 = vsel %vm868, %v1272, 0
        %v1314 = vsel %vm868, %v1273, 0
        %v1317 = vsel %vm868, %v1274, 0
        %v1320 = vsel %vm868, %v1275, 0
        %v1323 = vsel %vm868, %v1276, 0
        %v1326 = vsel %vm868, %v1277, 0
        %v1329 = vsel %vm868, %v1278, 0
        %v1332 = vsel %vm868, %v1279, 0
        %v1335 = vsel %vm868, %v1280, 0
        %v1338 = vsel %vm868, %v1281, 0
        %v1341 = vsel %vm868, %v1282, 0
        %v1344 = vsel %vm868, %v1283, 0
        %1346 = vmatpush.msra.mxu0 0.0
        %1347 = vmatpush.msra.mxu0 0.0
        %1348 = vmatpush.msra.mxu0 0.0
        %1349 = vmatpush.msra.mxu0 0.0
        %1350 = vmatpush.msra.mxu0 0.0
        %1351 = vmatpush.msra.mxu0 0.0
        %1352 = vmatpush.msra.mxu0 0.0
        %1353 = vmatpush.msra.mxu0 0.0
        %1354 = vmatpush.msra.mxu0 %v1292
        %1355 = vmatpush.msra.mxu0 %v1291
        %1356 = vmatpush.msra.mxu0 %v1290
        %1357 = vmatpush.msra.mxu0 %v1289
        %1358 = vmatpush.msra.mxu0 %v1288
        %1359 = vmatpush.msra.mxu0 %v1287
        %1360 = vmatpush.msra.mxu0 %v1286
        %1361 = vmatpush.msra.mxu0 %v1285
        %1362 = vmatmul.f32.gmra.mxu0 %v1299
        %v1363 = vpop.f32.mrf.mxu0
        %v1364 = vadd.f32 %v1296, %v1363
        %1365 = vmatmul.f32.gmra.mxu0 %v1302
        %v1366 = vpop.f32.mrf.mxu0
        %v1367 = vadd.f32 %v1296, %v1366
        %1368 = vmatmul.f32.gmra.mxu0 %v1305
        %v1369 = vpop.f32.mrf.mxu0
        %v1370 = vadd.f32 %v1296, %v1369
        %1371 = vmatmul.f32.gmra.mxu0 %v1308
        %v1372 = vpop.f32.mrf.mxu0
        %v1373 = vadd.f32 %v1296, %v1372
        %1374 = vmatmul.f32.gmra.mxu0 %v1311
        %v1375 = vpop.f32.mrf.mxu0
        %v1376 = vadd.f32 %v1296, %v1375
        %1377 = vmatmul.f32.gmra.mxu0 %v1314
        %v1378 = vpop.f32.mrf.mxu0
        %v1379 = vadd.f32 %v1296, %v1378
        %1380 = vmatmul.f32.gmra.mxu0 %v1317
        %v1381 = vpop.f32.mrf.mxu0
        %v1382 = vadd.f32 %v1296, %v1381
        %1383 = vmatmul.f32.gmra.mxu0 %v1320
        %v1384 = vpop.f32.mrf.mxu0
        %v1385 = vadd.f32 %v1296, %v1384
        %1386 = vmatmul.f32.gmra.mxu0 %v1323
        %v1387 = vpop.f32.mrf.mxu0
        %v1388 = vadd.f32 %v1296, %v1387
        %1389 = vmatmul.f32.gmra.mxu0 %v1326
        %v1390 = vpop.f32.mrf.mxu0
        %v1391 = vadd.f32 %v1296, %v1390
        %1392 = vmatmul.f32.gmra.mxu0 %v1329
        %v1393 = vpop.f32.mrf.mxu0
        %v1394 = vadd.f32 %v1296, %v1393
        %1395 = vmatmul.f32.gmra.mxu0 %v1332
        %v1396 = vpop.f32.mrf.mxu0
        %v1397 = vadd.f32 %v1296, %v1396
        %1398 = vmatmul.f32.gmra.mxu0 %v1335
        %v1399 = vpop.f32.mrf.mxu0
        %v1400 = vadd.f32 %v1296, %v1399
        %1401 = vmatmul.f32.gmra.mxu0 %v1338
        %v1402 = vpop.f32.mrf.mxu0
        %v1403 = vadd.f32 %v1296, %v1402
        %1404 = vmatmul.f32.gmra.mxu0 %v1341
        %v1405 = vpop.f32.mrf.mxu0
        %v1406 = vadd.f32 %v1296, %v1405
        %1407 = vmatmul.f32.gmra.mxu0 %v1344
        %v1408 = vpop.f32.mrf.mxu0
        %v1409 = vadd.f32 %v1296, %v1408
        %1410 = vdwg.mxu0
        %v1411 = vmax.f32 %v1364, 0.0
        %v1412 = vmax.f32 %v1367, 0.0
        %v1413 = vmax.f32 %v1370, 0.0
        %v1414 = vmax.f32 %v1373, 0.0
        %v1415 = vmax.f32 %v1376, 0.0
        %v1416 = vmax.f32 %v1379, 0.0
        %v1417 = vmax.f32 %v1382, 0.0
        %v1418 = vmax.f32 %v1385, 0.0
        %v1419 = vmax.f32 %v1388, 0.0
        %v1420 = vmax.f32 %v1391, 0.0
        %v1421 = vmax.f32 %v1394, 0.0
        %v1422 = vmax.f32 %v1397, 0.0
        %v1423 = vmax.f32 %v1400, 0.0
        %v1424 = vmax.f32 %v1403, 0.0
        %v1425 = vmax.f32 %v1406, 0.0
        %v1426 = vmax.f32 %v1409, 0.0
        %s1427 = scalar_lea.vmem %s3, 256
        %v1428 = vld [vmem:[%s1427] sm:$0xff]
        %v1429 = vld [vmem:[%s1427 + $0x8] sm:$0xff]
        %v1430 = vld [vmem:[%s1427 + $0x10] sm:$0xff]
        %v1431 = vld [vmem:[%s1427 + $0x18] sm:$0xff]
        %v1432 = vld [vmem:[%s1427 + $0x20] sm:$0xff]
        %v1433 = vld [vmem:[%s1427 + $0x28] sm:$0xff]
        %v1434 = vld [vmem:[%s1427 + $0x30] sm:$0xff]
        %v1435 = vld [vmem:[%s1427 + $0x38] sm:$0xff]
        %v1436 = vld [vmem:[%s5] sm:$0xf]
        %v1438 = vsel %vm771, %v1436, 0
        %1440 = vmatpush.msra.mxu0 0.0
        %1441 = vmatpush.msra.mxu0 0.0
        %1442 = vmatpush.msra.mxu0 0.0
        %1443 = vmatpush.msra.mxu0 0.0
        %1444 = vmatpush.msra.mxu0 0.0
        %1445 = vmatpush.msra.mxu0 0.0
        %1446 = vmatpush.msra.mxu0 0.0
        %1447 = vmatpush.msra.mxu0 0.0
        %1448 = vmatpush.msra.mxu0 0.0
        %1449 = vmatpush.msra.mxu0 0.0
        %1450 = vmatpush.msra.mxu0 0.0
        %1451 = vmatpush.msra.mxu0 0.0
        %1452 = vmatpush.msra.mxu0 0.0
        %1453 = vmatpush.msra.mxu0 0.0
        %1454 = vmatpush.msra.mxu0 0.0
        %1455 = vmatpush.msra.mxu0 %v1438
        %1456 = vmatmul.f32.gmra.mxu0 %v724
        %v1457 = vpop.f32.mrf.mxu0
        %v1458 = vadd.f32 0.0, %v1457
        %1459 = vmatmul.f32.gmra.mxu0 %v727
        %v1460 = vpop.f32.mrf.mxu0
        %v1461 = vadd.f32 0.0, %v1460
        %1462 = vmatmul.f32.gmra.mxu0 %v730
        %v1463 = vpop.f32.mrf.mxu0
        %v1464 = vadd.f32 0.0, %v1463
        %1465 = vmatmul.f32.gmra.mxu0 %v733
        %v1466 = vpop.f32.mrf.mxu0
        %v1467 = vadd.f32 0.0, %v1466
        %1468 = vmatmul.f32.gmra.mxu0 %v736
        %v1469 = vpop.f32.mrf.mxu0
        %v1470 = vadd.f32 0.0, %v1469
        %1471 = vmatmul.f32.gmra.mxu0 %v739
        %v1472 = vpop.f32.mrf.mxu0
        %v1473 = vadd.f32 0.0, %v1472
        %1474 = vmatmul.f32.gmra.mxu0 %v742
        %v1475 = vpop.f32.mrf.mxu0
        %v1476 = vadd.f32 0.0, %v1475
        %1477 = vmatmul.f32.gmra.mxu0 %v745
        %v1478 = vpop.f32.mrf.mxu0
        %v1479 = vadd.f32 0.0, %v1478
        %1480 = vmatmul.f32.gmra.mxu0 %v748
        %v1481 = vpop.f32.mrf.mxu0
        %v1482 = vadd.f32 0.0, %v1481
        %1483 = vmatmul.f32.gmra.mxu0 %v751
        %v1484 = vpop.f32.mrf.mxu0
        %v1485 = vadd.f32 0.0, %v1484
        %1486 = vmatmul.f32.gmra.mxu0 %v754
        %v1487 = vpop.f32.mrf.mxu0
        %v1488 = vadd.f32 0.0, %v1487
        %1489 = vmatmul.f32.gmra.mxu0 %v757
        %v1490 = vpop.f32.mrf.mxu0
        %v1491 = vadd.f32 0.0, %v1490
        %1492 = vmatmul.f32.gmra.mxu0 %v760
        %v1493 = vpop.f32.mrf.mxu0
        %v1494 = vadd.f32 0.0, %v1493
        %1495 = vmatmul.f32.gmra.mxu0 %v763
        %v1496 = vpop.f32.mrf.mxu0
        %v1497 = vadd.f32 0.0, %v1496
        %1498 = vmatmul.f32.gmra.mxu0 %v766
        %v1499 = vpop.f32.mrf.mxu0
        %v1500 = vadd.f32 0.0, %v1499
        %1501 = vmatmul.f32.gmra.mxu0 %v769
        %v1502 = vpop.f32.mrf.mxu0
        %v1503 = vadd.f32 0.0, %v1502
        %1504 = vdwg.mxu0
        %v1506 = vsel %vm868, %v1411, 0
        %v1509 = vsel %vm868, %v1412, 0
        %v1512 = vsel %vm868, %v1413, 0
        %v1515 = vsel %vm868, %v1414, 0
        %v1518 = vsel %vm868, %v1415, 0
        %v1521 = vsel %vm868, %v1416, 0
        %v1524 = vsel %vm868, %v1417, 0
        %v1527 = vsel %vm868, %v1418, 0
        %v1530 = vsel %vm868, %v1419, 0
        %v1533 = vsel %vm868, %v1420, 0
        %v1536 = vsel %vm868, %v1421, 0
        %v1539 = vsel %vm868, %v1422, 0
        %v1542 = vsel %vm868, %v1423, 0
        %v1545 = vsel %vm868, %v1424, 0
        %v1548 = vsel %vm868, %v1425, 0
        %v1551 = vsel %vm868, %v1426, 0
        %1553 = vmatpush.msra.mxu0 0.0
        %1554 = vmatpush.msra.mxu0 0.0
        %1555 = vmatpush.msra.mxu0 0.0
        %1556 = vmatpush.msra.mxu0 0.0
        %1557 = vmatpush.msra.mxu0 0.0
        %1558 = vmatpush.msra.mxu0 0.0
        %1559 = vmatpush.msra.mxu0 0.0
        %1560 = vmatpush.msra.mxu0 0.0
        %1561 = vmatpush.msra.mxu0 %v1435
        %1562 = vmatpush.msra.mxu0 %v1434
        %1563 = vmatpush.msra.mxu0 %v1433
        %1564 = vmatpush.msra.mxu0 %v1432
        %1565 = vmatpush.msra.mxu0 %v1431
        %1566 = vmatpush.msra.mxu0 %v1430
        %1567 = vmatpush.msra.mxu0 %v1429
        %1568 = vmatpush.msra.mxu0 %v1428
        %1569 = vmatmul.f32.gmra.mxu0 %v1506
        %v1570 = vpop.f32.mrf.mxu0
        %v1571 = vadd.f32 %v1458, %v1570
        %1572 = vmatmul.f32.gmra.mxu0 %v1509
        %v1573 = vpop.f32.mrf.mxu0
        %v1574 = vadd.f32 %v1461, %v1573
        %1575 = vmatmul.f32.gmra.mxu0 %v1512
        %v1576 = vpop.f32.mrf.mxu0
        %v1577 = vadd.f32 %v1464, %v1576
        %1578 = vmatmul.f32.gmra.mxu0 %v1515
        %v1579 = vpop.f32.mrf.mxu0
        %v1580 = vadd.f32 %v1467, %v1579
        %1581 = vmatmul.f32.gmra.mxu0 %v1518
        %v1582 = vpop.f32.mrf.mxu0
        %v1583 = vadd.f32 %v1470, %v1582
        %1584 = vmatmul.f32.gmra.mxu0 %v1521
        %v1585 = vpop.f32.mrf.mxu0
        %v1586 = vadd.f32 %v1473, %v1585
        %1587 = vmatmul.f32.gmra.mxu0 %v1524
        %v1588 = vpop.f32.mrf.mxu0
        %v1589 = vadd.f32 %v1476, %v1588
        %1590 = vmatmul.f32.gmra.mxu0 %v1527
        %v1591 = vpop.f32.mrf.mxu0
        %v1592 = vadd.f32 %v1479, %v1591
        %1593 = vmatmul.f32.gmra.mxu0 %v1530
        %v1594 = vpop.f32.mrf.mxu0
        %v1595 = vadd.f32 %v1482, %v1594
        %1596 = vmatmul.f32.gmra.mxu0 %v1533
        %v1597 = vpop.f32.mrf.mxu0
        %v1598 = vadd.f32 %v1485, %v1597
        %1599 = vmatmul.f32.gmra.mxu0 %v1536
        %v1600 = vpop.f32.mrf.mxu0
        %v1601 = vadd.f32 %v1488, %v1600
        %1602 = vmatmul.f32.gmra.mxu0 %v1539
        %v1603 = vpop.f32.mrf.mxu0
        %v1604 = vadd.f32 %v1491, %v1603
        %1605 = vmatmul.f32.gmra.mxu0 %v1542
        %v1606 = vpop.f32.mrf.mxu0
        %v1607 = vadd.f32 %v1494, %v1606
        %1608 = vmatmul.f32.gmra.mxu0 %v1545
        %v1609 = vpop.f32.mrf.mxu0
        %v1610 = vadd.f32 %v1497, %v1609
        %1611 = vmatmul.f32.gmra.mxu0 %v1548
        %v1612 = vpop.f32.mrf.mxu0
        %v1613 = vadd.f32 %v1500, %v1612
        %1614 = vmatmul.f32.gmra.mxu0 %v1551
        %v1615 = vpop.f32.mrf.mxu0
        %v1616 = vadd.f32 %v1503, %v1615
        %1617 = vdwg.mxu0
        %s1618 = scalar_lea.vmem [#allocation2], 4
        %v1619 = vld [vmem:[%s1618] sm:$0x1]
        %v1621 = vperm.slane %v1619, 0
        %v1623 = vadd.f32 %v1571, %v1621
        %v1624 = vadd.f32 %v1574, %v1621
        %v1625 = vadd.f32 %v1577, %v1621
        %v1626 = vadd.f32 %v1580, %v1621
        %v1627 = vadd.f32 %v1583, %v1621
        %v1628 = vadd.f32 %v1586, %v1621
        %v1629 = vadd.f32 %v1589, %v1621
        %v1630 = vadd.f32 %v1592, %v1621
        %v1631 = vadd.f32 %v1595, %v1621
        %v1632 = vadd.f32 %v1598, %v1621
        %v1633 = vadd.f32 %v1601, %v1621
        %v1634 = vadd.f32 %v1604, %v1621
        %v1635 = vadd.f32 %v1607, %v1621
        %v1636 = vadd.f32 %v1610, %v1621
        %v1637 = vadd.f32 %v1613, %v1621
        %v1638 = vadd.f32 %v1616, %v1621
        %v1639 = vmax.f32 %v1623, 0.0
        %v1640 = vmax.f32 %v1624, 0.0
        %v1641 = vmax.f32 %v1625, 0.0
        %v1642 = vmax.f32 %v1626, 0.0
        %v1643 = vmax.f32 %v1627, 0.0
        %v1644 = vmax.f32 %v1628, 0.0
        %v1645 = vmax.f32 %v1629, 0.0
        %v1646 = vmax.f32 %v1630, 0.0
        %v1647 = vmax.f32 %v1631, 0.0
        %v1648 = vmax.f32 %v1632, 0.0
        %v1649 = vmax.f32 %v1633, 0.0
        %v1650 = vmax.f32 %v1634, 0.0
        %v1651 = vmax.f32 %v1635, 0.0
        %v1652 = vmax.f32 %v1636, 0.0
        %v1653 = vmax.f32 %v1637, 0.0
        %v1654 = vmax.f32 %v1638, 0.0
        %s1655 = scalar_lea.vmem %s3, 320
        %v1656 = vld [vmem:[%s1655] sm:$0xff]
        %v1657 = vld [vmem:[%s1655 + $0x8] sm:$0xff]
        %v1658 = vld [vmem:[%s1655 + $0x10] sm:$0xff]
        %v1659 = vld [vmem:[%s1655 + $0x18] sm:$0xff]
        %v1660 = vld [vmem:[%s1655 + $0x20] sm:$0xff]
        %v1661 = vld [vmem:[%s1655 + $0x28] sm:$0xff]
        %v1662 = vld [vmem:[%s1655 + $0x30] sm:$0xff]
        %v1663 = vld [vmem:[%s1655 + $0x38] sm:$0xff]
        %s1664 = scalar_lea.vmem [#allocation2], 5
        %v1665 = vld [vmem:[%s1664] sm:$0x1]
        %v1667 = vperm.slane %v1665, 0
        %v1670 = vsel %vm868, %v1639, 0
        %v1673 = vsel %vm868, %v1640, 0
        %v1676 = vsel %vm868, %v1641, 0
        %v1679 = vsel %vm868, %v1642, 0
        %v1682 = vsel %vm868, %v1643, 0
        %v1685 = vsel %vm868, %v1644, 0
        %v1688 = vsel %vm868, %v1645, 0
        %v1691 = vsel %vm868, %v1646, 0
        %v1694 = vsel %vm868, %v1647, 0
        %v1697 = vsel %vm868, %v1648, 0
        %v1700 = vsel %vm868, %v1649, 0
        %v1703 = vsel %vm868, %v1650, 0
        %v1706 = vsel %vm868, %v1651, 0
        %v1709 = vsel %vm868, %v1652, 0
        %v1712 = vsel %vm868, %v1653, 0
        %v1715 = vsel %vm868, %v1654, 0
        %1717 = vmatpush.msra.mxu0 0.0
        %1718 = vmatpush.msra.mxu0 0.0
        %1719 = vmatpush.msra.mxu0 0.0
        %1720 = vmatpush.msra.mxu0 0.0
        %1721 = vmatpush.msra.mxu0 0.0
        %1722 = vmatpush.msra.mxu0 0.0
        %1723 = vmatpush.msra.mxu0 0.0
        %1724 = vmatpush.msra.mxu0 0.0
        %1725 = vmatpush.msra.mxu0 %v1663
        %1726 = vmatpush.msra.mxu0 %v1662
        %1727 = vmatpush.msra.mxu0 %v1661
        %1728 = vmatpush.msra.mxu0 %v1660
        %1729 = vmatpush.msra.mxu0 %v1659
        %1730 = vmatpush.msra.mxu0 %v1658
        %1731 = vmatpush.msra.mxu0 %v1657
        %1732 = vmatpush.msra.mxu0 %v1656
        %1733 = vmatmul.f32.gmra.mxu0 %v1670
        %v1734 = vpop.f32.mrf.mxu0
        %v1735 = vadd.f32 %v1667, %v1734
        %1736 = vmatmul.f32.gmra.mxu0 %v1673
        %v1737 = vpop.f32.mrf.mxu0
        %v1738 = vadd.f32 %v1667, %v1737
        %1739 = vmatmul.f32.gmra.mxu0 %v1676
        %v1740 = vpop.f32.mrf.mxu0
        %v1741 = vadd.f32 %v1667, %v1740
        %1742 = vmatmul.f32.gmra.mxu0 %v1679
        %v1743 = vpop.f32.mrf.mxu0
        %v1744 = vadd.f32 %v1667, %v1743
        %1745 = vmatmul.f32.gmra.mxu0 %v1682
        %v1746 = vpop.f32.mrf.mxu0
        %v1747 = vadd.f32 %v1667, %v1746
        %1748 = vmatmul.f32.gmra.mxu0 %v1685
        %v1749 = vpop.f32.mrf.mxu0
        %v1750 = vadd.f32 %v1667, %v1749
        %1751 = vmatmul.f32.gmra.mxu0 %v1688
        %v1752 = vpop.f32.mrf.mxu0
        %v1753 = vadd.f32 %v1667, %v1752
        %1754 = vmatmul.f32.gmra.mxu0 %v1691
        %v1755 = vpop.f32.mrf.mxu0
        %v1756 = vadd.f32 %v1667, %v1755
        %1757 = vmatmul.f32.gmra.mxu0 %v1694
        %v1758 = vpop.f32.mrf.mxu0
        %v1759 = vadd.f32 %v1667, %v1758
        %1760 = vmatmul.f32.gmra.mxu0 %v1697
        %v1761 = vpop.f32.mrf.mxu0
        %v1762 = vadd.f32 %v1667, %v1761
        %1763 = vmatmul.f32.gmra.mxu0 %v1700
        %v1764 = vpop.f32.mrf.mxu0
        %v1765 = vadd.f32 %v1667, %v1764
        %1766 = vmatmul.f32.gmra.mxu0 %v1703
        %v1767 = vpop.f32.mrf.mxu0
        %v1768 = vadd.f32 %v1667, %v1767
        %1769 = vmatmul.f32.gmra.mxu0 %v1706
        %v1770 = vpop.f32.mrf.mxu0
        %v1771 = vadd.f32 %v1667, %v1770
        %1772 = vmatmul.f32.gmra.mxu0 %v1709
        %v1773 = vpop.f32.mrf.mxu0
        %v1774 = vadd.f32 %v1667, %v1773
        %1775 = vmatmul.f32.gmra.mxu0 %v1712
        %v1776 = vpop.f32.mrf.mxu0
        %v1777 = vadd.f32 %v1667, %v1776
        %1778 = vmatmul.f32.gmra.mxu0 %v1715
        %v1779 = vpop.f32.mrf.mxu0
        %v1780 = vadd.f32 %v1667, %v1779
        %1781 = vdwg.mxu0
        %v1782 = vmax.f32 %v1735, 0.0
        %v1783 = vmax.f32 %v1738, 0.0
        %v1784 = vmax.f32 %v1741, 0.0
        %v1785 = vmax.f32 %v1744, 0.0
        %v1786 = vmax.f32 %v1747, 0.0
        %v1787 = vmax.f32 %v1750, 0.0
        %v1788 = vmax.f32 %v1753, 0.0
        %v1789 = vmax.f32 %v1756, 0.0
        %v1790 = vmax.f32 %v1759, 0.0
        %v1791 = vmax.f32 %v1762, 0.0
        %v1792 = vmax.f32 %v1765, 0.0
        %v1793 = vmax.f32 %v1768, 0.0
        %v1794 = vmax.f32 %v1771, 0.0
        %v1795 = vmax.f32 %v1774, 0.0
        %v1796 = vmax.f32 %v1777, 0.0
        %v1797 = vmax.f32 %v1780, 0.0
        %s1798 = scalar_lea.vmem %s3, 384
        %v1799 = vld [vmem:[%s1798] sm:$0xff]
        %v1800 = vld [vmem:[%s1798 + $0x8] sm:$0xff]
        %v1801 = vld [vmem:[%s1798 + $0x10] sm:$0xff]
        %v1802 = vld [vmem:[%s1798 + $0x18] sm:$0xff]
        %v1803 = vld [vmem:[%s1798 + $0x20] sm:$0xff]
        %v1804 = vld [vmem:[%s1798 + $0x28] sm:$0xff]
        %v1805 = vld [vmem:[%s1798 + $0x30] sm:$0xff]
        %v1806 = vld [vmem:[%s1798 + $0x38] sm:$0xff]
        %s1807 = scalar_lea.vmem [#allocation2], 6
        %v1808 = vld [vmem:[%s1807] sm:$0x1]
        %v1810 = vperm.slane %v1808, 0
        %v1813 = vsel %vm868, %v1782, 0
        %v1816 = vsel %vm868, %v1783, 0
        %v1819 = vsel %vm868, %v1784, 0
        %v1822 = vsel %vm868, %v1785, 0
        %v1825 = vsel %vm868, %v1786, 0
        %v1828 = vsel %vm868, %v1787, 0
        %v1831 = vsel %vm868, %v1788, 0
        %v1834 = vsel %vm868, %v1789, 0
        %v1837 = vsel %vm868, %v1790, 0
        %v1840 = vsel %vm868, %v1791, 0
        %v1843 = vsel %vm868, %v1792, 0
        %v1846 = vsel %vm868, %v1793, 0
        %v1849 = vsel %vm868, %v1794, 0
        %v1852 = vsel %vm868, %v1795, 0
        %v1855 = vsel %vm868, %v1796, 0
        %v1858 = vsel %vm868, %v1797, 0
        %1860 = vmatpush.msra.mxu0 0.0
        %1861 = vmatpush.msra.mxu0 0.0
        %1862 = vmatpush.msra.mxu0 0.0
        %1863 = vmatpush.msra.mxu0 0.0
        %1864 = vmatpush.msra.mxu0 0.0
        %1865 = vmatpush.msra.mxu0 0.0
        %1866 = vmatpush.msra.mxu0 0.0
        %1867 = vmatpush.msra.mxu0 0.0
        %1868 = vmatpush.msra.mxu0 %v1806
        %1869 = vmatpush.msra.mxu0 %v1805
        %1870 = vmatpush.msra.mxu0 %v1804
        %1871 = vmatpush.msra.mxu0 %v1803
        %1872 = vmatpush.msra.mxu0 %v1802
        %1873 = vmatpush.msra.mxu0 %v1801
        %1874 = vmatpush.msra.mxu0 %v1800
        %1875 = vmatpush.msra.mxu0 %v1799
        %1876 = vmatmul.f32.gmra.mxu0 %v1813
        %v1877 = vpop.f32.mrf.mxu0
        %v1878 = vadd.f32 %v1810, %v1877
        %1879 = vmatmul.f32.gmra.mxu0 %v1816
        %v1880 = vpop.f32.mrf.mxu0
        %v1881 = vadd.f32 %v1810, %v1880
        %1882 = vmatmul.f32.gmra.mxu0 %v1819
        %v1883 = vpop.f32.mrf.mxu0
        %v1884 = vadd.f32 %v1810, %v1883
        %1885 = vmatmul.f32.gmra.mxu0 %v1822
        %v1886 = vpop.f32.mrf.mxu0
        %v1887 = vadd.f32 %v1810, %v1886
        %1888 = vmatmul.f32.gmra.mxu0 %v1825
        %v1889 = vpop.f32.mrf.mxu0
        %v1890 = vadd.f32 %v1810, %v1889
        %1891 = vmatmul.f32.gmra.mxu0 %v1828
        %v1892 = vpop.f32.mrf.mxu0
        %v1893 = vadd.f32 %v1810, %v1892
        %1894 = vmatmul.f32.gmra.mxu0 %v1831
        %v1895 = vpop.f32.mrf.mxu0
        %v1896 = vadd.f32 %v1810, %v1895
        %1897 = vmatmul.f32.gmra.mxu0 %v1834
        %v1898 = vpop.f32.mrf.mxu0
        %v1899 = vadd.f32 %v1810, %v1898
        %1900 = vmatmul.f32.gmra.mxu0 %v1837
        %v1901 = vpop.f32.mrf.mxu0
        %v1902 = vadd.f32 %v1810, %v1901
        %1903 = vmatmul.f32.gmra.mxu0 %v1840
        %v1904 = vpop.f32.mrf.mxu0
        %v1905 = vadd.f32 %v1810, %v1904
        %1906 = vmatmul.f32.gmra.mxu0 %v1843
        %v1907 = vpop.f32.mrf.mxu0
        %v1908 = vadd.f32 %v1810, %v1907
        %1909 = vmatmul.f32.gmra.mxu0 %v1846
        %v1910 = vpop.f32.mrf.mxu0
        %v1911 = vadd.f32 %v1810, %v1910
        %1912 = vmatmul.f32.gmra.mxu0 %v1849
        %v1913 = vpop.f32.mrf.mxu0
        %v1914 = vadd.f32 %v1810, %v1913
        %1915 = vmatmul.f32.gmra.mxu0 %v1852
        %v1916 = vpop.f32.mrf.mxu0
        %v1917 = vadd.f32 %v1810, %v1916
        %1918 = vmatmul.f32.gmra.mxu0 %v1855
        %v1919 = vpop.f32.mrf.mxu0
        %v1920 = vadd.f32 %v1810, %v1919
        %1921 = vmatmul.f32.gmra.mxu0 %v1858
        %v1922 = vpop.f32.mrf.mxu0
        %v1923 = vadd.f32 %v1810, %v1922
        %1924 = vdwg.mxu0
        %v1925 = vmax.f32 %v1878, 0.0
        %v1926 = vmax.f32 %v1881, 0.0
        %v1927 = vmax.f32 %v1884, 0.0
        %v1928 = vmax.f32 %v1887, 0.0
        %v1929 = vmax.f32 %v1890, 0.0
        %v1930 = vmax.f32 %v1893, 0.0
        %v1931 = vmax.f32 %v1896, 0.0
        %v1932 = vmax.f32 %v1899, 0.0
        %v1933 = vmax.f32 %v1902, 0.0
        %v1934 = vmax.f32 %v1905, 0.0
        %v1935 = vmax.f32 %v1908, 0.0
        %v1936 = vmax.f32 %v1911, 0.0
        %v1937 = vmax.f32 %v1914, 0.0
        %v1938 = vmax.f32 %v1917, 0.0
        %v1939 = vmax.f32 %v1920, 0.0
        %v1940 = vmax.f32 %v1923, 0.0
        %v1941 = vld [vmem:[%s6] sm:$0xff]
        %v1942 = vld [vmem:[%s6 + $0x8] sm:$0xff]
        %v1943 = vld [vmem:[%s6 + $0x10] sm:$0xff]
        %v1944 = vld [vmem:[%s6 + $0x18] sm:$0xff]
        %v1945 = vld [vmem:[%s6 + $0x20] sm:$0xff]
        %v1946 = vld [vmem:[%s6 + $0x28] sm:$0xff]
        %v1947 = vld [vmem:[%s6 + $0x30] sm:$0xff]
        %v1948 = vld [vmem:[%s6 + $0x38] sm:$0xff]
        %v1949 = vld [vmem:[%s7] sm:$0x1]
        %v1951 = vperm.slane %v1949, 0
        %v1954 = vsel %vm868, %v1925, 0
        %v1957 = vsel %vm868, %v1926, 0
        %v1960 = vsel %vm868, %v1927, 0
        %v1963 = vsel %vm868, %v1928, 0
        %v1966 = vsel %vm868, %v1929, 0
        %v1969 = vsel %vm868, %v1930, 0
        %v1972 = vsel %vm868, %v1931, 0
        %v1975 = vsel %vm868, %v1932, 0
        %v1978 = vsel %vm868, %v1933, 0
        %v1981 = vsel %vm868, %v1934, 0
        %v1984 = vsel %vm868, %v1935, 0
        %v1987 = vsel %vm868, %v1936, 0
        %v1990 = vsel %vm868, %v1937, 0
        %v1993 = vsel %vm868, %v1938, 0
        %v1996 = vsel %vm868, %v1939, 0
        %v1999 = vsel %vm868, %v1940, 0
        %2001 = vmatpush.msra.mxu0 0.0
        %2002 = vmatpush.msra.mxu0 0.0
        %2003 = vmatpush.msra.mxu0 0.0
        %2004 = vmatpush.msra.mxu0 0.0
        %2005 = vmatpush.msra.mxu0 0.0
        %2006 = vmatpush.msra.mxu0 0.0
        %2007 = vmatpush.msra.mxu0 0.0
        %2008 = vmatpush.msra.mxu0 0.0
        %2009 = vmatpush.msra.mxu0 %v1948
        %2010 = vmatpush.msra.mxu0 %v1947
        %2011 = vmatpush.msra.mxu0 %v1946
        %2012 = vmatpush.msra.mxu0 %v1945
        %2013 = vmatpush.msra.mxu0 %v1944
        %2014 = vmatpush.msra.mxu0 %v1943
        %2015 = vmatpush.msra.mxu0 %v1942
        %2016 = vmatpush.msra.mxu0 %v1941
        %2017 = vmatmul.f32.gmra.mxu0 %v1954
        %v2018 = vpop.f32.mrf.mxu0
        %v2019 = vadd.f32 %v1951, %v2018
        %2020 = vmatmul.f32.gmra.mxu0 %v1957
        %v2021 = vpop.f32.mrf.mxu0
        %v2022 = vadd.f32 %v1951, %v2021
        %2023 = vmatmul.f32.gmra.mxu0 %v1960
        %v2024 = vpop.f32.mrf.mxu0
        %v2025 = vadd.f32 %v1951, %v2024
        %2026 = vmatmul.f32.gmra.mxu0 %v1963
        %v2027 = vpop.f32.mrf.mxu0
        %v2028 = vadd.f32 %v1951, %v2027
        %2029 = vmatmul.f32.gmra.mxu0 %v1966
        %v2030 = vpop.f32.mrf.mxu0
        %v2031 = vadd.f32 %v1951, %v2030
        %2032 = vmatmul.f32.gmra.mxu0 %v1969
        %v2033 = vpop.f32.mrf.mxu0
        %v2034 = vadd.f32 %v1951, %v2033
        %2035 = vmatmul.f32.gmra.mxu0 %v1972
        %v2036 = vpop.f32.mrf.mxu0
        %v2037 = vadd.f32 %v1951, %v2036
        %2038 = vmatmul.f32.gmra.mxu0 %v1975
        %v2039 = vpop.f32.mrf.mxu0
        %v2040 = vadd.f32 %v1951, %v2039
        %2041 = vmatmul.f32.gmra.mxu0 %v1978
        %v2042 = vpop.f32.mrf.mxu0
        %v2043 = vadd.f32 %v1951, %v2042
        %2044 = vmatmul.f32.gmra.mxu0 %v1981
        %v2045 = vpop.f32.mrf.mxu0
        %v2046 = vadd.f32 %v1951, %v2045
        %2047 = vmatmul.f32.gmra.mxu0 %v1984
        %v2048 = vpop.f32.mrf.mxu0
        %v2049 = vadd.f32 %v1951, %v2048
        %2050 = vmatmul.f32.gmra.mxu0 %v1987
        %v2051 = vpop.f32.mrf.mxu0
        %v2052 = vadd.f32 %v1951, %v2051
        %2053 = vmatmul.f32.gmra.mxu0 %v1990
        %v2054 = vpop.f32.mrf.mxu0
        %v2055 = vadd.f32 %v1951, %v2054
        %2056 = vmatmul.f32.gmra.mxu0 %v1993
        %v2057 = vpop.f32.mrf.mxu0
        %v2058 = vadd.f32 %v1951, %v2057
        %2059 = vmatmul.f32.gmra.mxu0 %v1996
        %v2060 = vpop.f32.mrf.mxu0
        %v2061 = vadd.f32 %v1951, %v2060
        %2062 = vmatmul.f32.gmra.mxu0 %v1999
        %v2063 = vpop.f32.mrf.mxu0
        %v2064 = vadd.f32 %v1951, %v2063
        %2065 = vdwg.mxu0
        %2066 = vst [vmem:[%s699] sm:$0xff] %v2019
        %2067 = vst [vmem:[%s699 + $0x8] sm:$0xff] %v2022
        %2068 = vst [vmem:[%s699 + $0x10] sm:$0xff] %v2025
        %2069 = vst [vmem:[%s699 + $0x18] sm:$0xff] %v2028
        %2070 = vst [vmem:[%s699 + $0x20] sm:$0xff] %v2031
        %2071 = vst [vmem:[%s699 + $0x28] sm:$0xff] %v2034
        %2072 = vst [vmem:[%s699 + $0x30] sm:$0xff] %v2037
        %2073 = vst [vmem:[%s699 + $0x38] sm:$0xff] %v2040
        %2074 = vst [vmem:[%s699 + $0x40] sm:$0xff] %v2043
        %2075 = vst [vmem:[%s699 + $0x48] sm:$0xff] %v2046
        %2076 = vst [vmem:[%s699 + $0x50] sm:$0xff] %v2049
        %2077 = vst [vmem:[%s699 + $0x58] sm:$0xff] %v2052
        %2078 = vst [vmem:[%s699 + $0x60] sm:$0xff] %v2055
        %2079 = vst [vmem:[%s699 + $0x68] sm:$0xff] %v2058
        %2080 = vst [vmem:[%s699 + $0x70] sm:$0xff] %v2061
        %2081 = vst [vmem:[%s699 + $0x78] sm:$0xff] %v2064
        %v2082 = vld [vmem:[#allocation4] sm:$0xf]
        %v2083 = vld [vmem:[%s9] sm:$0xff]
        %v2084 = vld [vmem:[%s9 + $0x8] sm:$0xff]
        %v2085 = vld [vmem:[%s9 + $0x10] sm:$0xff]
        %v2086 = vld [vmem:[%s9 + $0x18] sm:$0xff]
        %v2087 = vld [vmem:[%s9 + $0x20] sm:$0xff]
        %v2088 = vld [vmem:[%s9 + $0x28] sm:$0xff]
        %v2089 = vld [vmem:[%s9 + $0x30] sm:$0xff]
        %v2090 = vld [vmem:[%s9 + $0x38] sm:$0xff]
        %v2091 = vld [vmem:[%s9 + $0x40] sm:$0xff]
        %v2092 = vld [vmem:[%s9 + $0x48] sm:$0xff]
        %v2093 = vld [vmem:[%s9 + $0x50] sm:$0xff]
        %v2094 = vld [vmem:[%s9 + $0x58] sm:$0xff]
        %v2095 = vld [vmem:[%s9 + $0x60] sm:$0xff]
        %v2096 = vld [vmem:[%s9 + $0x68] sm:$0xff]
        %v2097 = vld [vmem:[%s9 + $0x70] sm:$0xff]
        %v2098 = vld [vmem:[%s9 + $0x78] sm:$0xff]
        %2099 = vmatpush.msra.mxu0 %v2098
        %2100 = vmatpush.msra.mxu0 %v2097
        %2101 = vmatpush.msra.mxu0 %v2096
        %2102 = vmatpush.msra.mxu0 %v2095
        %2103 = vmatpush.msra.mxu0 %v2094
        %2104 = vmatpush.msra.mxu0 %v2093
        %2105 = vmatpush.msra.mxu0 %v2092
        %2106 = vmatpush.msra.mxu0 %v2091
        %2107 = vmatpush.msra.mxu0 %v2090
        %2108 = vmatpush.msra.mxu0 %v2089
        %2109 = vmatpush.msra.mxu0 %v2088
        %2110 = vmatpush.msra.mxu0 %v2087
        %2111 = vmatpush.msra.mxu0 %v2086
        %2112 = vmatpush.msra.mxu0 %v2085
        %2113 = vmatpush.msra.mxu0 %v2084
        %2114 = vmatpush.msra.mxu0 %v2083
        %2115 = vmatmul.f32.gmra.mxu0 %v2019
        %v2116 = vpop.f32.mrf.mxu0
        %v2117 = vadd.f32 0.0, %v2116
        %2118 = vmatmul.f32.gmra.mxu0 %v2022
        %v2119 = vpop.f32.mrf.mxu0
        %v2120 = vadd.f32 0.0, %v2119
        %2121 = vmatmul.f32.gmra.mxu0 %v2025
        %v2122 = vpop.f32.mrf.mxu0
        %v2123 = vadd.f32 0.0, %v2122
        %2124 = vmatmul.f32.gmra.mxu0 %v2028
        %v2125 = vpop.f32.mrf.mxu0
        %v2126 = vadd.f32 0.0, %v2125
        %2127 = vmatmul.f32.gmra.mxu0 %v2031
        %v2128 = vpop.f32.mrf.mxu0
        %v2129 = vadd.f32 0.0, %v2128
        %2130 = vmatmul.f32.gmra.mxu0 %v2034
        %v2131 = vpop.f32.mrf.mxu0
        %v2132 = vadd.f32 0.0, %v2131
        %2133 = vmatmul.f32.gmra.mxu0 %v2037
        %v2134 = vpop.f32.mrf.mxu0
        %v2135 = vadd.f32 0.0, %v2134
        %2136 = vmatmul.f32.gmra.mxu0 %v2040
        %v2137 = vpop.f32.mrf.mxu0
        %v2138 = vadd.f32 0.0, %v2137
        %2139 = vmatmul.f32.gmra.mxu0 %v2043
        %v2140 = vpop.f32.mrf.mxu0
        %v2141 = vadd.f32 0.0, %v2140
        %2142 = vmatmul.f32.gmra.mxu0 %v2046
        %v2143 = vpop.f32.mrf.mxu0
        %v2144 = vadd.f32 0.0, %v2143
        %2145 = vmatmul.f32.gmra.mxu0 %v2049
        %v2146 = vpop.f32.mrf.mxu0
        %v2147 = vadd.f32 0.0, %v2146
        %2148 = vmatmul.f32.gmra.mxu0 %v2052
        %v2149 = vpop.f32.mrf.mxu0
        %v2150 = vadd.f32 0.0, %v2149
        %2151 = vmatmul.f32.gmra.mxu0 %v2055
        %v2152 = vpop.f32.mrf.mxu0
        %v2153 = vadd.f32 0.0, %v2152
        %2154 = vmatmul.f32.gmra.mxu0 %v2058
        %v2155 = vpop.f32.mrf.mxu0
        %v2156 = vadd.f32 0.0, %v2155
        %2157 = vmatmul.f32.gmra.mxu0 %v2061
        %v2158 = vpop.f32.mrf.mxu0
        %v2159 = vadd.f32 0.0, %v2158
        %2160 = vmatmul.f32.gmra.mxu0 %v2064
        %v2161 = vpop.f32.mrf.mxu0
        %v2162 = vadd.f32 0.0, %v2161
        %2163 = vdwg.mxu0
        %v2165 = vsel %vm771, %v2082, 0
        %2167 = vmatpush.msra.mxu0 0.0
        %2168 = vmatpush.msra.mxu0 0.0
        %2169 = vmatpush.msra.mxu0 0.0
        %2170 = vmatpush.msra.mxu0 0.0
        %2171 = vmatpush.msra.mxu0 0.0
        %2172 = vmatpush.msra.mxu0 0.0
        %2173 = vmatpush.msra.mxu0 0.0
        %2174 = vmatpush.msra.mxu0 0.0
        %2175 = vmatpush.msra.mxu0 0.0
        %2176 = vmatpush.msra.mxu0 0.0
        %2177 = vmatpush.msra.mxu0 0.0
        %2178 = vmatpush.msra.mxu0 0.0
        %2179 = vmatpush.msra.mxu0 0.0
        %2180 = vmatpush.msra.mxu0 0.0
        %2181 = vmatpush.msra.mxu0 0.0
        %2182 = vmatpush.msra.mxu0 %v2165
        %2183 = vmatmul.f32.gmra.mxu0 %v724
        %v2184 = vpop.f32.mrf.mxu0
        %v2185 = vadd.f32 %v2117, %v2184
        %2186 = vmatmul.f32.gmra.mxu0 %v727
        %v2187 = vpop.f32.mrf.mxu0
        %v2188 = vadd.f32 %v2120, %v2187
        %2189 = vmatmul.f32.gmra.mxu0 %v730
        %v2190 = vpop.f32.mrf.mxu0
        %v2191 = vadd.f32 %v2123, %v2190
        %2192 = vmatmul.f32.gmra.mxu0 %v733
        %v2193 = vpop.f32.mrf.mxu0
        %v2194 = vadd.f32 %v2126, %v2193
        %2195 = vmatmul.f32.gmra.mxu0 %v736
        %v2196 = vpop.f32.mrf.mxu0
        %v2197 = vadd.f32 %v2129, %v2196
        %2198 = vmatmul.f32.gmra.mxu0 %v739
        %v2199 = vpop.f32.mrf.mxu0
        %v2200 = vadd.f32 %v2132, %v2199
        %2201 = vmatmul.f32.gmra.mxu0 %v742
        %v2202 = vpop.f32.mrf.mxu0
        %v2203 = vadd.f32 %v2135, %v2202
        %2204 = vmatmul.f32.gmra.mxu0 %v745
        %v2205 = vpop.f32.mrf.mxu0
        %v2206 = vadd.f32 %v2138, %v2205
        %2207 = vmatmul.f32.gmra.mxu0 %v748
        %v2208 = vpop.f32.mrf.mxu0
        %v2209 = vadd.f32 %v2141, %v2208
        %2210 = vmatmul.f32.gmra.mxu0 %v751
        %v2211 = vpop.f32.mrf.mxu0
        %v2212 = vadd.f32 %v2144, %v2211
        %2213 = vmatmul.f32.gmra.mxu0 %v754
        %v2214 = vpop.f32.mrf.mxu0
        %v2215 = vadd.f32 %v2147, %v2214
        %2216 = vmatmul.f32.gmra.mxu0 %v757
        %v2217 = vpop.f32.mrf.mxu0
        %v2218 = vadd.f32 %v2150, %v2217
        %2219 = vmatmul.f32.gmra.mxu0 %v760
        %v2220 = vpop.f32.mrf.mxu0
        %v2221 = vadd.f32 %v2153, %v2220
        %2222 = vmatmul.f32.gmra.mxu0 %v763
        %v2223 = vpop.f32.mrf.mxu0
        %v2224 = vadd.f32 %v2156, %v2223
        %2225 = vmatmul.f32.gmra.mxu0 %v766
        %v2226 = vpop.f32.mrf.mxu0
        %v2227 = vadd.f32 %v2159, %v2226
        %2228 = vmatmul.f32.gmra.mxu0 %v769
        %v2229 = vpop.f32.mrf.mxu0
        %v2230 = vadd.f32 %v2162, %v2229
        %2231 = vdwg.mxu0
        %v2232 = vld [vmem:[#allocation6] sm:$0x1]
        %v2234 = vperm.slane %v2232, 0
        %v2236 = vadd.f32 %v2185, %v2234
        %v2237 = vadd.f32 %v2188, %v2234
        %v2238 = vadd.f32 %v2191, %v2234
        %v2239 = vadd.f32 %v2194, %v2234
        %v2240 = vadd.f32 %v2197, %v2234
        %v2241 = vadd.f32 %v2200, %v2234
        %v2242 = vadd.f32 %v2203, %v2234
        %v2243 = vadd.f32 %v2206, %v2234
        %v2244 = vadd.f32 %v2209, %v2234
        %v2245 = vadd.f32 %v2212, %v2234
        %v2246 = vadd.f32 %v2215, %v2234
        %v2247 = vadd.f32 %v2218, %v2234
        %v2248 = vadd.f32 %v2221, %v2234
        %v2249 = vadd.f32 %v2224, %v2234
        %v2250 = vadd.f32 %v2227, %v2234
        %v2251 = vadd.f32 %v2230, %v2234
        %v2252 = vmax.f32 %v2236, 0.0
        %v2253 = vmax.f32 %v2237, 0.0
        %v2254 = vmax.f32 %v2238, 0.0
        %v2255 = vmax.f32 %v2239, 0.0
        %v2256 = vmax.f32 %v2240, 0.0
        %v2257 = vmax.f32 %v2241, 0.0
        %v2258 = vmax.f32 %v2242, 0.0
        %v2259 = vmax.f32 %v2243, 0.0
        %v2260 = vmax.f32 %v2244, 0.0
        %v2261 = vmax.f32 %v2245, 0.0
        %v2262 = vmax.f32 %v2246, 0.0
        %v2263 = vmax.f32 %v2247, 0.0
        %v2264 = vmax.f32 %v2248, 0.0
        %v2265 = vmax.f32 %v2249, 0.0
        %v2266 = vmax.f32 %v2250, 0.0
        %v2267 = vmax.f32 %v2251, 0.0
        %v2268 = vld [vmem:[#allocation7] sm:$0xff]
        %v2269 = vld [vmem:[#allocation7 + $0x8] sm:$0xff]
        %v2270 = vld [vmem:[#allocation7 + $0x10] sm:$0xff]
        %v2271 = vld [vmem:[#allocation7 + $0x18] sm:$0xff]
        %v2272 = vld [vmem:[#allocation7 + $0x20] sm:$0xff]
        %v2273 = vld [vmem:[#allocation7 + $0x28] sm:$0xff]
        %v2274 = vld [vmem:[#allocation7 + $0x30] sm:$0xff]
        %v2275 = vld [vmem:[#allocation7 + $0x38] sm:$0xff]
        %v2276 = vld [vmem:[#allocation9] sm:$0x1]
        %v2278 = vperm.slane %v2276, 0
        %v2281 = vsel %vm868, %v2252, 0
        %v2284 = vsel %vm868, %v2253, 0
        %v2287 = vsel %vm868, %v2254, 0
        %v2290 = vsel %vm868, %v2255, 0
        %v2293 = vsel %vm868, %v2256, 0
        %v2296 = vsel %vm868, %v2257, 0
        %v2299 = vsel %vm868, %v2258, 0
        %v2302 = vsel %vm868, %v2259, 0
        %v2305 = vsel %vm868, %v2260, 0
        %v2308 = vsel %vm868, %v2261, 0
        %v2311 = vsel %vm868, %v2262, 0
        %v2314 = vsel %vm868, %v2263, 0
        %v2317 = vsel %vm868, %v2264, 0
        %v2320 = vsel %vm868, %v2265, 0
        %v2323 = vsel %vm868, %v2266, 0
        %v2326 = vsel %vm868, %v2267, 0
        %2328 = vmatpush.msra.mxu0 0.0
        %2329 = vmatpush.msra.mxu0 0.0
        %2330 = vmatpush.msra.mxu0 0.0
        %2331 = vmatpush.msra.mxu0 0.0
        %2332 = vmatpush.msra.mxu0 0.0
        %2333 = vmatpush.msra.mxu0 0.0
        %2334 = vmatpush.msra.mxu0 0.0
        %2335 = vmatpush.msra.mxu0 0.0
        %2336 = vmatpush.msra.mxu0 %v2275
        %2337 = vmatpush.msra.mxu0 %v2274
        %2338 = vmatpush.msra.mxu0 %v2273
        %2339 = vmatpush.msra.mxu0 %v2272
        %2340 = vmatpush.msra.mxu0 %v2271
        %2341 = vmatpush.msra.mxu0 %v2270
        %2342 = vmatpush.msra.mxu0 %v2269
        %2343 = vmatpush.msra.mxu0 %v2268
        %2344 = vmatmul.f32.gmra.mxu0 %v2281
        %v2345 = vpop.f32.mrf.mxu0
        %v2346 = vadd.f32 %v2278, %v2345
        %2347 = vmatmul.f32.gmra.mxu0 %v2284
        %v2348 = vpop.f32.mrf.mxu0
        %v2349 = vadd.f32 %v2278, %v2348
        %2350 = vmatmul.f32.gmra.mxu0 %v2287
        %v2351 = vpop.f32.mrf.mxu0
        %v2352 = vadd.f32 %v2278, %v2351
        %2353 = vmatmul.f32.gmra.mxu0 %v2290
        %v2354 = vpop.f32.mrf.mxu0
        %v2355 = vadd.f32 %v2278, %v2354
        %2356 = vmatmul.f32.gmra.mxu0 %v2293
        %v2357 = vpop.f32.mrf.mxu0
        %v2358 = vadd.f32 %v2278, %v2357
        %2359 = vmatmul.f32.gmra.mxu0 %v2296
        %v2360 = vpop.f32.mrf.mxu0
        %v2361 = vadd.f32 %v2278, %v2360
        %2362 = vmatmul.f32.gmra.mxu0 %v2299
        %v2363 = vpop.f32.mrf.mxu0
        %v2364 = vadd.f32 %v2278, %v2363
        %2365 = vmatmul.f32.gmra.mxu0 %v2302
        %v2366 = vpop.f32.mrf.mxu0
        %v2367 = vadd.f32 %v2278, %v2366
        %2368 = vmatmul.f32.gmra.mxu0 %v2305
        %v2369 = vpop.f32.mrf.mxu0
        %v2370 = vadd.f32 %v2278, %v2369
        %2371 = vmatmul.f32.gmra.mxu0 %v2308
        %v2372 = vpop.f32.mrf.mxu0
        %v2373 = vadd.f32 %v2278, %v2372
        %2374 = vmatmul.f32.gmra.mxu0 %v2311
        %v2375 = vpop.f32.mrf.mxu0
        %v2376 = vadd.f32 %v2278, %v2375
        %2377 = vmatmul.f32.gmra.mxu0 %v2314
        %v2378 = vpop.f32.mrf.mxu0
        %v2379 = vadd.f32 %v2278, %v2378
        %2380 = vmatmul.f32.gmra.mxu0 %v2317
        %v2381 = vpop.f32.mrf.mxu0
        %v2382 = vadd.f32 %v2278, %v2381
        %2383 = vmatmul.f32.gmra.mxu0 %v2320
        %v2384 = vpop.f32.mrf.mxu0
        %v2385 = vadd.f32 %v2278, %v2384
        %2386 = vmatmul.f32.gmra.mxu0 %v2323
        %v2387 = vpop.f32.mrf.mxu0
        %v2388 = vadd.f32 %v2278, %v2387
        %2389 = vmatmul.f32.gmra.mxu0 %v2326
        %v2390 = vpop.f32.mrf.mxu0
        %v2391 = vadd.f32 %v2278, %v2390
        %2392 = vdwg.mxu0
        %v2393 = vmax.f32 %v2346, 0.0
        %v2394 = vmax.f32 %v2349, 0.0
        %v2395 = vmax.f32 %v2352, 0.0
        %v2396 = vmax.f32 %v2355, 0.0
        %v2397 = vmax.f32 %v2358, 0.0
        %v2398 = vmax.f32 %v2361, 0.0
        %v2399 = vmax.f32 %v2364, 0.0
        %v2400 = vmax.f32 %v2367, 0.0
        %v2401 = vmax.f32 %v2370, 0.0
        %v2402 = vmax.f32 %v2373, 0.0
        %v2403 = vmax.f32 %v2376, 0.0
        %v2404 = vmax.f32 %v2379, 0.0
        %v2405 = vmax.f32 %v2382, 0.0
        %v2406 = vmax.f32 %v2385, 0.0
        %v2407 = vmax.f32 %v2388, 0.0
        %v2408 = vmax.f32 %v2391, 0.0
        %s2409 = scalar_lea.vmem [#allocation7], 64
        %v2410 = vld [vmem:[%s2409] sm:$0xff]
        %v2411 = vld [vmem:[%s2409 + $0x8] sm:$0xff]
        %v2412 = vld [vmem:[%s2409 + $0x10] sm:$0xff]
        %v2413 = vld [vmem:[%s2409 + $0x18] sm:$0xff]
        %v2414 = vld [vmem:[%s2409 + $0x20] sm:$0xff]
        %v2415 = vld [vmem:[%s2409 + $0x28] sm:$0xff]
        %v2416 = vld [vmem:[%s2409 + $0x30] sm:$0xff]
        %v2417 = vld [vmem:[%s2409 + $0x38] sm:$0xff]
        %s2418 = scalar_lea.vmem [#allocation9], 1
        %v2419 = vld [vmem:[%s2418] sm:$0x1]
        %v2421 = vperm.slane %v2419, 0
        %v2424 = vsel %vm868, %v2393, 0
        %v2427 = vsel %vm868, %v2394, 0
        %v2430 = vsel %vm868, %v2395, 0
        %v2433 = vsel %vm868, %v2396, 0
        %v2436 = vsel %vm868, %v2397, 0
        %v2439 = vsel %vm868, %v2398, 0
        %v2442 = vsel %vm868, %v2399, 0
        %v2445 = vsel %vm868, %v2400, 0
        %v2448 = vsel %vm868, %v2401, 0
        %v2451 = vsel %vm868, %v2402, 0
        %v2454 = vsel %vm868, %v2403, 0
        %v2457 = vsel %vm868, %v2404, 0
        %v2460 = vsel %vm868, %v2405, 0
        %v2463 = vsel %vm868, %v2406, 0
        %v2466 = vsel %vm868, %v2407, 0
        %v2469 = vsel %vm868, %v2408, 0
        %2471 = vmatpush.msra.mxu0 0.0
        %2472 = vmatpush.msra.mxu0 0.0
        %2473 = vmatpush.msra.mxu0 0.0
        %2474 = vmatpush.msra.mxu0 0.0
        %2475 = vmatpush.msra.mxu0 0.0
        %2476 = vmatpush.msra.mxu0 0.0
        %2477 = vmatpush.msra.mxu0 0.0
        %2478 = vmatpush.msra.mxu0 0.0
        %2479 = vmatpush.msra.mxu0 %v2417
        %2480 = vmatpush.msra.mxu0 %v2416
        %2481 = vmatpush.msra.mxu0 %v2415
        %2482 = vmatpush.msra.mxu0 %v2414
        %2483 = vmatpush.msra.mxu0 %v2413
        %2484 = vmatpush.msra.mxu0 %v2412
        %2485 = vmatpush.msra.mxu0 %v2411
        %2486 = vmatpush.msra.mxu0 %v2410
        %2487 = vmatmul.f32.gmra.mxu0 %v2424
        %v2488 = vpop.f32.mrf.mxu0
        %v2489 = vadd.f32 %v2421, %v2488
        %2490 = vmatmul.f32.gmra.mxu0 %v2427
        %v2491 = vpop.f32.mrf.mxu0
        %v2492 = vadd.f32 %v2421, %v2491
        %2493 = vmatmul.f32.gmra.mxu0 %v2430
        %v2494 = vpop.f32.mrf.mxu0
        %v2495 = vadd.f32 %v2421, %v2494
        %2496 = vmatmul.f32.gmra.mxu0 %v2433
        %v2497 = vpop.f32.mrf.mxu0
        %v2498 = vadd.f32 %v2421, %v2497
        %2499 = vmatmul.f32.gmra.mxu0 %v2436
        %v2500 = vpop.f32.mrf.mxu0
        %v2501 = vadd.f32 %v2421, %v2500
        %2502 = vmatmul.f32.gmra.mxu0 %v2439
        %v2503 = vpop.f32.mrf.mxu0
        %v2504 = vadd.f32 %v2421, %v2503
        %2505 = vmatmul.f32.gmra.mxu0 %v2442
        %v2506 = vpop.f32.mrf.mxu0
        %v2507 = vadd.f32 %v2421, %v2506
        %2508 = vmatmul.f32.gmra.mxu0 %v2445
        %v2509 = vpop.f32.mrf.mxu0
        %v2510 = vadd.f32 %v2421, %v2509
        %2511 = vmatmul.f32.gmra.mxu0 %v2448
        %v2512 = vpop.f32.mrf.mxu0
        %v2513 = vadd.f32 %v2421, %v2512
        %2514 = vmatmul.f32.gmra.mxu0 %v2451
        %v2515 = vpop.f32.mrf.mxu0
        %v2516 = vadd.f32 %v2421, %v2515
        %2517 = vmatmul.f32.gmra.mxu0 %v2454
        %v2518 = vpop.f32.mrf.mxu0
        %v2519 = vadd.f32 %v2421, %v2518
        %2520 = vmatmul.f32.gmra.mxu0 %v2457
        %v2521 = vpop.f32.mrf.mxu0
        %v2522 = vadd.f32 %v2421, %v2521
        %2523 = vmatmul.f32.gmra.mxu0 %v2460
        %v2524 = vpop.f32.mrf.mxu0
        %v2525 = vadd.f32 %v2421, %v2524
        %2526 = vmatmul.f32.gmra.mxu0 %v2463
        %v2527 = vpop.f32.mrf.mxu0
        %v2528 = vadd.f32 %v2421, %v2527
        %2529 = vmatmul.f32.gmra.mxu0 %v2466
        %v2530 = vpop.f32.mrf.mxu0
        %v2531 = vadd.f32 %v2421, %v2530
        %2532 = vmatmul.f32.gmra.mxu0 %v2469
        %v2533 = vpop.f32.mrf.mxu0
        %v2534 = vadd.f32 %v2421, %v2533
        %2535 = vdwg.mxu0
        %v2536 = vmax.f32 %v2489, 0.0
        %v2537 = vmax.f32 %v2492, 0.0
        %v2538 = vmax.f32 %v2495, 0.0
        %v2539 = vmax.f32 %v2498, 0.0
        %v2540 = vmax.f32 %v2501, 0.0
        %v2541 = vmax.f32 %v2504, 0.0
        %v2542 = vmax.f32 %v2507, 0.0
        %v2543 = vmax.f32 %v2510, 0.0
        %v2544 = vmax.f32 %v2513, 0.0
        %v2545 = vmax.f32 %v2516, 0.0
        %v2546 = vmax.f32 %v2519, 0.0
        %v2547 = vmax.f32 %v2522, 0.0
        %v2548 = vmax.f32 %v2525, 0.0
        %v2549 = vmax.f32 %v2528, 0.0
        %v2550 = vmax.f32 %v2531, 0.0
        %v2551 = vmax.f32 %v2534, 0.0
        %s2552 = scalar_lea.vmem [#allocation7], 128
        %v2553 = vld [vmem:[%s2552] sm:$0xff]
        %v2554 = vld [vmem:[%s2552 + $0x8] sm:$0xff]
        %v2555 = vld [vmem:[%s2552 + $0x10] sm:$0xff]
        %v2556 = vld [vmem:[%s2552 + $0x18] sm:$0xff]
        %v2557 = vld [vmem:[%s2552 + $0x20] sm:$0xff]
        %v2558 = vld [vmem:[%s2552 + $0x28] sm:$0xff]
        %v2559 = vld [vmem:[%s2552 + $0x30] sm:$0xff]
        %v2560 = vld [vmem:[%s2552 + $0x38] sm:$0xff]
        %s2561 = scalar_lea.vmem [#allocation9], 2
        %v2562 = vld [vmem:[%s2561] sm:$0x1]
        %v2564 = vperm.slane %v2562, 0
        %v2567 = vsel %vm868, %v2536, 0
        %v2570 = vsel %vm868, %v2537, 0
        %v2573 = vsel %vm868, %v2538, 0
        %v2576 = vsel %vm868, %v2539, 0
        %v2579 = vsel %vm868, %v2540, 0
        %v2582 = vsel %vm868, %v2541, 0
        %v2585 = vsel %vm868, %v2542, 0
        %v2588 = vsel %vm868, %v2543, 0
        %v2591 = vsel %vm868, %v2544, 0
        %v2594 = vsel %vm868, %v2545, 0
        %v2597 = vsel %vm868, %v2546, 0
        %v2600 = vsel %vm868, %v2547, 0
        %v2603 = vsel %vm868, %v2548, 0
        %v2606 = vsel %vm868, %v2549, 0
        %v2609 = vsel %vm868, %v2550, 0
        %v2612 = vsel %vm868, %v2551, 0
        %2614 = vmatpush.msra.mxu0 0.0
        %2615 = vmatpush.msra.mxu0 0.0
        %2616 = vmatpush.msra.mxu0 0.0
        %2617 = vmatpush.msra.mxu0 0.0
        %2618 = vmatpush.msra.mxu0 0.0
        %2619 = vmatpush.msra.mxu0 0.0
        %2620 = vmatpush.msra.mxu0 0.0
        %2621 = vmatpush.msra.mxu0 0.0
        %2622 = vmatpush.msra.mxu0 %v2560
        %2623 = vmatpush.msra.mxu0 %v2559
        %2624 = vmatpush.msra.mxu0 %v2558
        %2625 = vmatpush.msra.mxu0 %v2557
        %2626 = vmatpush.msra.mxu0 %v2556
        %2627 = vmatpush.msra.mxu0 %v2555
        %2628 = vmatpush.msra.mxu0 %v2554
        %2629 = vmatpush.msra.mxu0 %v2553
        %2630 = vmatmul.f32.gmra.mxu0 %v2567
        %v2631 = vpop.f32.mrf.mxu0
        %v2632 = vadd.f32 %v2564, %v2631
        %2633 = vmatmul.f32.gmra.mxu0 %v2570
        %v2634 = vpop.f32.mrf.mxu0
        %v2635 = vadd.f32 %v2564, %v2634
        %2636 = vmatmul.f32.gmra.mxu0 %v2573
        %v2637 = vpop.f32.mrf.mxu0
        %v2638 = vadd.f32 %v2564, %v2637
        %2639 = vmatmul.f32.gmra.mxu0 %v2576
        %v2640 = vpop.f32.mrf.mxu0
        %v2641 = vadd.f32 %v2564, %v2640
        %2642 = vmatmul.f32.gmra.mxu0 %v2579
        %v2643 = vpop.f32.mrf.mxu0
        %v2644 = vadd.f32 %v2564, %v2643
        %2645 = vmatmul.f32.gmra.mxu0 %v2582
        %v2646 = vpop.f32.mrf.mxu0
        %v2647 = vadd.f32 %v2564, %v2646
        %2648 = vmatmul.f32.gmra.mxu0 %v2585
        %v2649 = vpop.f32.mrf.mxu0
        %v2650 = vadd.f32 %v2564, %v2649
        %2651 = vmatmul.f32.gmra.mxu0 %v2588
        %v2652 = vpop.f32.mrf.mxu0
        %v2653 = vadd.f32 %v2564, %v2652
        %2654 = vmatmul.f32.gmra.mxu0 %v2591
        %v2655 = vpop.f32.mrf.mxu0
        %v2656 = vadd.f32 %v2564, %v2655
        %2657 = vmatmul.f32.gmra.mxu0 %v2594
        %v2658 = vpop.f32.mrf.mxu0
        %v2659 = vadd.f32 %v2564, %v2658
        %2660 = vmatmul.f32.gmra.mxu0 %v2597
        %v2661 = vpop.f32.mrf.mxu0
        %v2662 = vadd.f32 %v2564, %v2661
        %2663 = vmatmul.f32.gmra.mxu0 %v2600
        %v2664 = vpop.f32.mrf.mxu0
        %v2665 = vadd.f32 %v2564, %v2664
        %2666 = vmatmul.f32.gmra.mxu0 %v2603
        %v2667 = vpop.f32.mrf.mxu0
        %v2668 = vadd.f32 %v2564, %v2667
        %2669 = vmatmul.f32.gmra.mxu0 %v2606
        %v2670 = vpop.f32.mrf.mxu0
        %v2671 = vadd.f32 %v2564, %v2670
        %2672 = vmatmul.f32.gmra.mxu0 %v2609
        %v2673 = vpop.f32.mrf.mxu0
        %v2674 = vadd.f32 %v2564, %v2673
        %2675 = vmatmul.f32.gmra.mxu0 %v2612
        %v2676 = vpop.f32.mrf.mxu0
        %v2677 = vadd.f32 %v2564, %v2676
        %2678 = vdwg.mxu0
        %v2679 = vmax.f32 %v2632, 0.0
        %v2680 = vmax.f32 %v2635, 0.0
        %v2681 = vmax.f32 %v2638, 0.0
        %v2682 = vmax.f32 %v2641, 0.0
        %v2683 = vmax.f32 %v2644, 0.0
        %v2684 = vmax.f32 %v2647, 0.0
        %v2685 = vmax.f32 %v2650, 0.0
        %v2686 = vmax.f32 %v2653, 0.0
        %v2687 = vmax.f32 %v2656, 0.0
        %v2688 = vmax.f32 %v2659, 0.0
        %v2689 = vmax.f32 %v2662, 0.0
        %v2690 = vmax.f32 %v2665, 0.0
        %v2691 = vmax.f32 %v2668, 0.0
        %v2692 = vmax.f32 %v2671, 0.0
        %v2693 = vmax.f32 %v2674, 0.0
        %v2694 = vmax.f32 %v2677, 0.0
        %s2695 = scalar_lea.vmem [#allocation7], 192
        %v2696 = vld [vmem:[%s2695] sm:$0xff]
        %v2697 = vld [vmem:[%s2695 + $0x8] sm:$0xff]
        %v2698 = vld [vmem:[%s2695 + $0x10] sm:$0xff]
        %v2699 = vld [vmem:[%s2695 + $0x18] sm:$0xff]
        %v2700 = vld [vmem:[%s2695 + $0x20] sm:$0xff]
        %v2701 = vld [vmem:[%s2695 + $0x28] sm:$0xff]
        %v2702 = vld [vmem:[%s2695 + $0x30] sm:$0xff]
        %v2703 = vld [vmem:[%s2695 + $0x38] sm:$0xff]
        %s2704 = scalar_lea.vmem [#allocation9], 3
        %v2705 = vld [vmem:[%s2704] sm:$0x1]
        %v2707 = vperm.slane %v2705, 0
        %v2710 = vsel %vm868, %v2679, 0
        %v2713 = vsel %vm868, %v2680, 0
        %v2716 = vsel %vm868, %v2681, 0
        %v2719 = vsel %vm868, %v2682, 0
        %v2722 = vsel %vm868, %v2683, 0
        %v2725 = vsel %vm868, %v2684, 0
        %v2728 = vsel %vm868, %v2685, 0
        %v2731 = vsel %vm868, %v2686, 0
        %v2734 = vsel %vm868, %v2687, 0
        %v2737 = vsel %vm868, %v2688, 0
        %v2740 = vsel %vm868, %v2689, 0
        %v2743 = vsel %vm868, %v2690, 0
        %v2746 = vsel %vm868, %v2691, 0
        %v2749 = vsel %vm868, %v2692, 0
        %v2752 = vsel %vm868, %v2693, 0
        %v2755 = vsel %vm868, %v2694, 0
        %2757 = vmatpush.msra.mxu0 0.0
        %2758 = vmatpush.msra.mxu0 0.0
        %2759 = vmatpush.msra.mxu0 0.0
        %2760 = vmatpush.msra.mxu0 0.0
        %2761 = vmatpush.msra.mxu0 0.0
        %2762 = vmatpush.msra.mxu0 0.0
        %2763 = vmatpush.msra.mxu0 0.0
        %2764 = vmatpush.msra.mxu0 0.0
        %2765 = vmatpush.msra.mxu0 %v2703
        %2766 = vmatpush.msra.mxu0 %v2702
        %2767 = vmatpush.msra.mxu0 %v2701
        %2768 = vmatpush.msra.mxu0 %v2700
        %2769 = vmatpush.msra.mxu0 %v2699
        %2770 = vmatpush.msra.mxu0 %v2698
        %2771 = vmatpush.msra.mxu0 %v2697
        %2772 = vmatpush.msra.mxu0 %v2696
        %2773 = vmatmul.f32.gmra.mxu0 %v2710
        %v2774 = vpop.f32.mrf.mxu0
        %v2775 = vadd.f32 %v2707, %v2774
        %2776 = vmatmul.f32.gmra.mxu0 %v2713
        %v2777 = vpop.f32.mrf.mxu0
        %v2778 = vadd.f32 %v2707, %v2777
        %2779 = vmatmul.f32.gmra.mxu0 %v2716
        %v2780 = vpop.f32.mrf.mxu0
        %v2781 = vadd.f32 %v2707, %v2780
        %2782 = vmatmul.f32.gmra.mxu0 %v2719
        %v2783 = vpop.f32.mrf.mxu0
        %v2784 = vadd.f32 %v2707, %v2783
        %2785 = vmatmul.f32.gmra.mxu0 %v2722
        %v2786 = vpop.f32.mrf.mxu0
        %v2787 = vadd.f32 %v2707, %v2786
        %2788 = vmatmul.f32.gmra.mxu0 %v2725
        %v2789 = vpop.f32.mrf.mxu0
        %v2790 = vadd.f32 %v2707, %v2789
        %2791 = vmatmul.f32.gmra.mxu0 %v2728
        %v2792 = vpop.f32.mrf.mxu0
        %v2793 = vadd.f32 %v2707, %v2792
        %2794 = vmatmul.f32.gmra.mxu0 %v2731
        %v2795 = vpop.f32.mrf.mxu0
        %v2796 = vadd.f32 %v2707, %v2795
        %2797 = vmatmul.f32.gmra.mxu0 %v2734
        %v2798 = vpop.f32.mrf.mxu0
        %v2799 = vadd.f32 %v2707, %v2798
        %2800 = vmatmul.f32.gmra.mxu0 %v2737
        %v2801 = vpop.f32.mrf.mxu0
        %v2802 = vadd.f32 %v2707, %v2801
        %2803 = vmatmul.f32.gmra.mxu0 %v2740
        %v2804 = vpop.f32.mrf.mxu0
        %v2805 = vadd.f32 %v2707, %v2804
        %2806 = vmatmul.f32.gmra.mxu0 %v2743
        %v2807 = vpop.f32.mrf.mxu0
        %v2808 = vadd.f32 %v2707, %v2807
        %2809 = vmatmul.f32.gmra.mxu0 %v2746
        %v2810 = vpop.f32.mrf.mxu0
        %v2811 = vadd.f32 %v2707, %v2810
        %2812 = vmatmul.f32.gmra.mxu0 %v2749
        %v2813 = vpop.f32.mrf.mxu0
        %v2814 = vadd.f32 %v2707, %v2813
        %2815 = vmatmul.f32.gmra.mxu0 %v2752
        %v2816 = vpop.f32.mrf.mxu0
        %v2817 = vadd.f32 %v2707, %v2816
        %2818 = vmatmul.f32.gmra.mxu0 %v2755
        %v2819 = vpop.f32.mrf.mxu0
        %v2820 = vadd.f32 %v2707, %v2819
        %2821 = vdwg.mxu0
        %v2822 = vmax.f32 %v2775, 0.0
        %v2823 = vmax.f32 %v2778, 0.0
        %v2824 = vmax.f32 %v2781, 0.0
        %v2825 = vmax.f32 %v2784, 0.0
        %v2826 = vmax.f32 %v2787, 0.0
        %v2827 = vmax.f32 %v2790, 0.0
        %v2828 = vmax.f32 %v2793, 0.0
        %v2829 = vmax.f32 %v2796, 0.0
        %v2830 = vmax.f32 %v2799, 0.0
        %v2831 = vmax.f32 %v2802, 0.0
        %v2832 = vmax.f32 %v2805, 0.0
        %v2833 = vmax.f32 %v2808, 0.0
        %v2834 = vmax.f32 %v2811, 0.0
        %v2835 = vmax.f32 %v2814, 0.0
        %v2836 = vmax.f32 %v2817, 0.0
        %v2837 = vmax.f32 %v2820, 0.0
        %s2838 = scalar_lea.vmem [#allocation7], 256
        %v2839 = vld [vmem:[%s2838] sm:$0xff]
        %v2840 = vld [vmem:[%s2838 + $0x8] sm:$0xff]
        %v2841 = vld [vmem:[%s2838 + $0x10] sm:$0xff]
        %v2842 = vld [vmem:[%s2838 + $0x18] sm:$0xff]
        %v2843 = vld [vmem:[%s2838 + $0x20] sm:$0xff]
        %v2844 = vld [vmem:[%s2838 + $0x28] sm:$0xff]
        %v2845 = vld [vmem:[%s2838 + $0x30] sm:$0xff]
        %v2846 = vld [vmem:[%s2838 + $0x38] sm:$0xff]
        %v2847 = vld [vmem:[#allocation10] sm:$0xf]
        %v2848 = vld [vmem:[%s14] sm:$0xff]
        %v2849 = vld [vmem:[%s14 + $0x8] sm:$0xff]
        %v2850 = vld [vmem:[%s14 + $0x10] sm:$0xff]
        %v2851 = vld [vmem:[%s14 + $0x18] sm:$0xff]
        %v2852 = vld [vmem:[%s14 + $0x20] sm:$0xff]
        %v2853 = vld [vmem:[%s14 + $0x28] sm:$0xff]
        %v2854 = vld [vmem:[%s14 + $0x30] sm:$0xff]
        %v2855 = vld [vmem:[%s14 + $0x38] sm:$0xff]
        %v2856 = vld [vmem:[%s14 + $0x40] sm:$0xff]
        %v2857 = vld [vmem:[%s14 + $0x48] sm:$0xff]
        %v2858 = vld [vmem:[%s14 + $0x50] sm:$0xff]
        %v2859 = vld [vmem:[%s14 + $0x58] sm:$0xff]
        %v2860 = vld [vmem:[%s14 + $0x60] sm:$0xff]
        %v2861 = vld [vmem:[%s14 + $0x68] sm:$0xff]
        %v2862 = vld [vmem:[%s14 + $0x70] sm:$0xff]
        %v2863 = vld [vmem:[%s14 + $0x78] sm:$0xff]
        %2864 = vmatpush.msra.mxu0 %v2863
        %2865 = vmatpush.msra.mxu0 %v2862
        %2866 = vmatpush.msra.mxu0 %v2861
        %2867 = vmatpush.msra.mxu0 %v2860
        %2868 = vmatpush.msra.mxu0 %v2859
        %2869 = vmatpush.msra.mxu0 %v2858
        %2870 = vmatpush.msra.mxu0 %v2857
        %2871 = vmatpush.msra.mxu0 %v2856
        %2872 = vmatpush.msra.mxu0 %v2855
        %2873 = vmatpush.msra.mxu0 %v2854
        %2874 = vmatpush.msra.mxu0 %v2853
        %2875 = vmatpush.msra.mxu0 %v2852
        %2876 = vmatpush.msra.mxu0 %v2851
        %2877 = vmatpush.msra.mxu0 %v2850
        %2878 = vmatpush.msra.mxu0 %v2849
        %2879 = vmatpush.msra.mxu0 %v2848
        %2880 = vmatmul.f32.gmra.mxu0 %v2019
        %v2881 = vpop.f32.mrf.mxu0
        %v2882 = vadd.f32 0.0, %v2881
        %2883 = vmatmul.f32.gmra.mxu0 %v2022
        %v2884 = vpop.f32.mrf.mxu0
        %v2885 = vadd.f32 0.0, %v2884
        %2886 = vmatmul.f32.gmra.mxu0 %v2025
        %v2887 = vpop.f32.mrf.mxu0
        %v2888 = vadd.f32 0.0, %v2887
        %2889 = vmatmul.f32.gmra.mxu0 %v2028
        %v2890 = vpop.f32.mrf.mxu0
        %v2891 = vadd.f32 0.0, %v2890
        %2892 = vmatmul.f32.gmra.mxu0 %v2031
        %v2893 = vpop.f32.mrf.mxu0
        %v2894 = vadd.f32 0.0, %v2893
        %2895 = vmatmul.f32.gmra.mxu0 %v2034
        %v2896 = vpop.f32.mrf.mxu0
        %v2897 = vadd.f32 0.0, %v2896
        %2898 = vmatmul.f32.gmra.mxu0 %v2037
        %v2899 = vpop.f32.mrf.mxu0
        %v2900 = vadd.f32 0.0, %v2899
        %2901 = vmatmul.f32.gmra.mxu0 %v2040
        %v2902 = vpop.f32.mrf.mxu0
        %v2903 = vadd.f32 0.0, %v2902
        %2904 = vmatmul.f32.gmra.mxu0 %v2043
        %v2905 = vpop.f32.mrf.mxu0
        %v2906 = vadd.f32 0.0, %v2905
        %2907 = vmatmul.f32.gmra.mxu0 %v2046
        %v2908 = vpop.f32.mrf.mxu0
        %v2909 = vadd.f32 0.0, %v2908
        %2910 = vmatmul.f32.gmra.mxu0 %v2049
        %v2911 = vpop.f32.mrf.mxu0
        %v2912 = vadd.f32 0.0, %v2911
        %2913 = vmatmul.f32.gmra.mxu0 %v2052
        %v2914 = vpop.f32.mrf.mxu0
        %v2915 = vadd.f32 0.0, %v2914
        %2916 = vmatmul.f32.gmra.mxu0 %v2055
        %v2917 = vpop.f32.mrf.mxu0
        %v2918 = vadd.f32 0.0, %v2917
        %2919 = vmatmul.f32.gmra.mxu0 %v2058
        %v2920 = vpop.f32.mrf.mxu0
        %v2921 = vadd.f32 0.0, %v2920
        %2922 = vmatmul.f32.gmra.mxu0 %v2061
        %v2923 = vpop.f32.mrf.mxu0
        %v2924 = vadd.f32 0.0, %v2923
        %2925 = vmatmul.f32.gmra.mxu0 %v2064
        %v2926 = vpop.f32.mrf.mxu0
        %v2927 = vadd.f32 0.0, %v2926
        %2928 = vdwg.mxu0
        %v2930 = vsel %vm771, %v2847, 0
        %2932 = vmatpush.msra.mxu0 0.0
        %2933 = vmatpush.msra.mxu0 0.0
        %2934 = vmatpush.msra.mxu0 0.0
        %2935 = vmatpush.msra.mxu0 0.0
        %2936 = vmatpush.msra.mxu0 0.0
        %2937 = vmatpush.msra.mxu0 0.0
        %2938 = vmatpush.msra.mxu0 0.0
        %2939 = vmatpush.msra.mxu0 0.0
        %2940 = vmatpush.msra.mxu0 0.0
        %2941 = vmatpush.msra.mxu0 0.0
        %2942 = vmatpush.msra.mxu0 0.0
        %2943 = vmatpush.msra.mxu0 0.0
        %2944 = vmatpush.msra.mxu0 0.0
        %2945 = vmatpush.msra.mxu0 0.0
        %2946 = vmatpush.msra.mxu0 0.0
        %2947 = vmatpush.msra.mxu0 %v2930
        %2948 = vmatmul.f32.gmra.mxu0 %v724
        %v2949 = vpop.f32.mrf.mxu0
        %v2950 = vadd.f32 %v2882, %v2949
        %2951 = vmatmul.f32.gmra.mxu0 %v727
        %v2952 = vpop.f32.mrf.mxu0
        %v2953 = vadd.f32 %v2885, %v2952
        %2954 = vmatmul.f32.gmra.mxu0 %v730
        %v2955 = vpop.f32.mrf.mxu0
        %v2956 = vadd.f32 %v2888, %v2955
        %2957 = vmatmul.f32.gmra.mxu0 %v733
        %v2958 = vpop.f32.mrf.mxu0
        %v2959 = vadd.f32 %v2891, %v2958
        %2960 = vmatmul.f32.gmra.mxu0 %v736
        %v2961 = vpop.f32.mrf.mxu0
        %v2962 = vadd.f32 %v2894, %v2961
        %2963 = vmatmul.f32.gmra.mxu0 %v739
        %v2964 = vpop.f32.mrf.mxu0
        %v2965 = vadd.f32 %v2897, %v2964
        %2966 = vmatmul.f32.gmra.mxu0 %v742
        %v2967 = vpop.f32.mrf.mxu0
        %v2968 = vadd.f32 %v2900, %v2967
        %2969 = vmatmul.f32.gmra.mxu0 %v745
        %v2970 = vpop.f32.mrf.mxu0
        %v2971 = vadd.f32 %v2903, %v2970
        %2972 = vmatmul.f32.gmra.mxu0 %v748
        %v2973 = vpop.f32.mrf.mxu0
        %v2974 = vadd.f32 %v2906, %v2973
        %2975 = vmatmul.f32.gmra.mxu0 %v751
        %v2976 = vpop.f32.mrf.mxu0
        %v2977 = vadd.f32 %v2909, %v2976
        %2978 = vmatmul.f32.gmra.mxu0 %v754
        %v2979 = vpop.f32.mrf.mxu0
        %v2980 = vadd.f32 %v2912, %v2979
        %2981 = vmatmul.f32.gmra.mxu0 %v757
        %v2982 = vpop.f32.mrf.mxu0
        %v2983 = vadd.f32 %v2915, %v2982
        %2984 = vmatmul.f32.gmra.mxu0 %v760
        %v2985 = vpop.f32.mrf.mxu0
        %v2986 = vadd.f32 %v2918, %v2985
        %2987 = vmatmul.f32.gmra.mxu0 %v763
        %v2988 = vpop.f32.mrf.mxu0
        %v2989 = vadd.f32 %v2921, %v2988
        %2990 = vmatmul.f32.gmra.mxu0 %v766
        %v2991 = vpop.f32.mrf.mxu0
        %v2992 = vadd.f32 %v2924, %v2991
        %2993 = vmatmul.f32.gmra.mxu0 %v769
        %v2994 = vpop.f32.mrf.mxu0
        %v2995 = vadd.f32 %v2927, %v2994
        %2996 = vdwg.mxu0
        %v2998 = vsel %vm868, %v2822, 0
        %v3001 = vsel %vm868, %v2823, 0
        %v3004 = vsel %vm868, %v2824, 0
        %v3007 = vsel %vm868, %v2825, 0
        %v3010 = vsel %vm868, %v2826, 0
        %v3013 = vsel %vm868, %v2827, 0
        %v3016 = vsel %vm868, %v2828, 0
        %v3019 = vsel %vm868, %v2829, 0
        %v3022 = vsel %vm868, %v2830, 0
        %v3025 = vsel %vm868, %v2831, 0
        %v3028 = vsel %vm868, %v2832, 0
        %v3031 = vsel %vm868, %v2833, 0
        %v3034 = vsel %vm868, %v2834, 0
        %v3037 = vsel %vm868, %v2835, 0
        %v3040 = vsel %vm868, %v2836, 0
        %v3043 = vsel %vm868, %v2837, 0
        %3045 = vmatpush.msra.mxu0 0.0
        %3046 = vmatpush.msra.mxu0 0.0
        %3047 = vmatpush.msra.mxu0 0.0
        %3048 = vmatpush.msra.mxu0 0.0
        %3049 = vmatpush.msra.mxu0 0.0
        %3050 = vmatpush.msra.mxu0 0.0
        %3051 = vmatpush.msra.mxu0 0.0
        %3052 = vmatpush.msra.mxu0 0.0
        %3053 = vmatpush.msra.mxu0 %v2846
        %3054 = vmatpush.msra.mxu0 %v2845
        %3055 = vmatpush.msra.mxu0 %v2844
        %3056 = vmatpush.msra.mxu0 %v2843
        %3057 = vmatpush.msra.mxu0 %v2842
        %3058 = vmatpush.msra.mxu0 %v2841
        %3059 = vmatpush.msra.mxu0 %v2840
        %3060 = vmatpush.msra.mxu0 %v2839
        %3061 = vmatmul.f32.gmra.mxu0 %v2998
        %v3062 = vpop.f32.mrf.mxu0
        %v3063 = vadd.f32 %v2950, %v3062
        %3064 = vmatmul.f32.gmra.mxu0 %v3001
        %v3065 = vpop.f32.mrf.mxu0
        %v3066 = vadd.f32 %v2953, %v3065
        %3067 = vmatmul.f32.gmra.mxu0 %v3004
        %v3068 = vpop.f32.mrf.mxu0
        %v3069 = vadd.f32 %v2956, %v3068
        %3070 = vmatmul.f32.gmra.mxu0 %v3007
        %v3071 = vpop.f32.mrf.mxu0
        %v3072 = vadd.f32 %v2959, %v3071
        %3073 = vmatmul.f32.gmra.mxu0 %v3010
        %v3074 = vpop.f32.mrf.mxu0
        %v3075 = vadd.f32 %v2962, %v3074
        %3076 = vmatmul.f32.gmra.mxu0 %v3013
        %v3077 = vpop.f32.mrf.mxu0
        %v3078 = vadd.f32 %v2965, %v3077
        %3079 = vmatmul.f32.gmra.mxu0 %v3016
        %v3080 = vpop.f32.mrf.mxu0
        %v3081 = vadd.f32 %v2968, %v3080
        %3082 = vmatmul.f32.gmra.mxu0 %v3019
        %v3083 = vpop.f32.mrf.mxu0
        %v3084 = vadd.f32 %v2971, %v3083
        %3085 = vmatmul.f32.gmra.mxu0 %v3022
        %v3086 = vpop.f32.mrf.mxu0
        %v3087 = vadd.f32 %v2974, %v3086
        %3088 = vmatmul.f32.gmra.mxu0 %v3025
        %v3089 = vpop.f32.mrf.mxu0
        %v3090 = vadd.f32 %v2977, %v3089
        %3091 = vmatmul.f32.gmra.mxu0 %v3028
        %v3092 = vpop.f32.mrf.mxu0
        %v3093 = vadd.f32 %v2980, %v3092
        %3094 = vmatmul.f32.gmra.mxu0 %v3031
        %v3095 = vpop.f32.mrf.mxu0
        %v3096 = vadd.f32 %v2983, %v3095
        %3097 = vmatmul.f32.gmra.mxu0 %v3034
        %v3098 = vpop.f32.mrf.mxu0
        %v3099 = vadd.f32 %v2986, %v3098
        %3100 = vmatmul.f32.gmra.mxu0 %v3037
        %v3101 = vpop.f32.mrf.mxu0
        %v3102 = vadd.f32 %v2989, %v3101
        %3103 = vmatmul.f32.gmra.mxu0 %v3040
        %v3104 = vpop.f32.mrf.mxu0
        %v3105 = vadd.f32 %v2992, %v3104
        %3106 = vmatmul.f32.gmra.mxu0 %v3043
        %v3107 = vpop.f32.mrf.mxu0
        %v3108 = vadd.f32 %v2995, %v3107
        %3109 = vdwg.mxu0
        %s3110 = scalar_lea.vmem [#allocation9], 4
        %v3111 = vld [vmem:[%s3110] sm:$0x1]
        %v3113 = vperm.slane %v3111, 0
        %v3115 = vadd.f32 %v3063, %v3113
        %v3116 = vadd.f32 %v3066, %v3113
        %v3117 = vadd.f32 %v3069, %v3113
        %v3118 = vadd.f32 %v3072, %v3113
        %v3119 = vadd.f32 %v3075, %v3113
        %v3120 = vadd.f32 %v3078, %v3113
        %v3121 = vadd.f32 %v3081, %v3113
        %v3122 = vadd.f32 %v3084, %v3113
        %v3123 = vadd.f32 %v3087, %v3113
        %v3124 = vadd.f32 %v3090, %v3113
        %v3125 = vadd.f32 %v3093, %v3113
        %v3126 = vadd.f32 %v3096, %v3113
        %v3127 = vadd.f32 %v3099, %v3113
        %v3128 = vadd.f32 %v3102, %v3113
        %v3129 = vadd.f32 %v3105, %v3113
        %v3130 = vadd.f32 %v3108, %v3113
        %v3131 = vmax.f32 %v3115, 0.0
        %v3132 = vmax.f32 %v3116, 0.0
        %v3133 = vmax.f32 %v3117, 0.0
        %v3134 = vmax.f32 %v3118, 0.0
        %v3135 = vmax.f32 %v3119, 0.0
        %v3136 = vmax.f32 %v3120, 0.0
        %v3137 = vmax.f32 %v3121, 0.0
        %v3138 = vmax.f32 %v3122, 0.0
        %v3139 = vmax.f32 %v3123, 0.0
        %v3140 = vmax.f32 %v3124, 0.0
        %v3141 = vmax.f32 %v3125, 0.0
        %v3142 = vmax.f32 %v3126, 0.0
        %v3143 = vmax.f32 %v3127, 0.0
        %v3144 = vmax.f32 %v3128, 0.0
        %v3145 = vmax.f32 %v3129, 0.0
        %v3146 = vmax.f32 %v3130, 0.0
        %s3147 = scalar_lea.vmem [#allocation7], 320
        %v3148 = vld [vmem:[%s3147] sm:$0xff]
        %v3149 = vld [vmem:[%s3147 + $0x8] sm:$0xff]
        %v3150 = vld [vmem:[%s3147 + $0x10] sm:$0xff]
        %v3151 = vld [vmem:[%s3147 + $0x18] sm:$0xff]
        %v3152 = vld [vmem:[%s3147 + $0x20] sm:$0xff]
        %v3153 = vld [vmem:[%s3147 + $0x28] sm:$0xff]
        %v3154 = vld [vmem:[%s3147 + $0x30] sm:$0xff]
        %v3155 = vld [vmem:[%s3147 + $0x38] sm:$0xff]
        %s3156 = scalar_lea.vmem [#allocation9], 5
        %v3157 = vld [vmem:[%s3156] sm:$0x1]
        %v3159 = vperm.slane %v3157, 0
        %v3162 = vsel %vm868, %v3131, 0
        %v3165 = vsel %vm868, %v3132, 0
        %v3168 = vsel %vm868, %v3133, 0
        %v3171 = vsel %vm868, %v3134, 0
        %v3174 = vsel %vm868, %v3135, 0
        %v3177 = vsel %vm868, %v3136, 0
        %v3180 = vsel %vm868, %v3137, 0
        %v3183 = vsel %vm868, %v3138, 0
        %v3186 = vsel %vm868, %v3139, 0
        %v3189 = vsel %vm868, %v3140, 0
        %v3192 = vsel %vm868, %v3141, 0
        %v3195 = vsel %vm868, %v3142, 0
        %v3198 = vsel %vm868, %v3143, 0
        %v3201 = vsel %vm868, %v3144, 0
        %v3204 = vsel %vm868, %v3145, 0
        %v3207 = vsel %vm868, %v3146, 0
        %3209 = vmatpush.msra.mxu0 0.0
        %3210 = vmatpush.msra.mxu0 0.0
        %3211 = vmatpush.msra.mxu0 0.0
        %3212 = vmatpush.msra.mxu0 0.0
        %3213 = vmatpush.msra.mxu0 0.0
        %3214 = vmatpush.msra.mxu0 0.0
        %3215 = vmatpush.msra.mxu0 0.0
        %3216 = vmatpush.msra.mxu0 0.0
        %3217 = vmatpush.msra.mxu0 %v3155
        %3218 = vmatpush.msra.mxu0 %v3154
        %3219 = vmatpush.msra.mxu0 %v3153
        %3220 = vmatpush.msra.mxu0 %v3152
        %3221 = vmatpush.msra.mxu0 %v3151
        %3222 = vmatpush.msra.mxu0 %v3150
        %3223 = vmatpush.msra.mxu0 %v3149
        %3224 = vmatpush.msra.mxu0 %v3148
        %3225 = vmatmul.f32.gmra.mxu0 %v3162
        %v3226 = vpop.f32.mrf.mxu0
        %v3227 = vadd.f32 %v3159, %v3226
        %3228 = vmatmul.f32.gmra.mxu0 %v3165
        %v3229 = vpop.f32.mrf.mxu0
        %v3230 = vadd.f32 %v3159, %v3229
        %3231 = vmatmul.f32.gmra.mxu0 %v3168
        %v3232 = vpop.f32.mrf.mxu0
        %v3233 = vadd.f32 %v3159, %v3232
        %3234 = vmatmul.f32.gmra.mxu0 %v3171
        %v3235 = vpop.f32.mrf.mxu0
        %v3236 = vadd.f32 %v3159, %v3235
        %3237 = vmatmul.f32.gmra.mxu0 %v3174
        %v3238 = vpop.f32.mrf.mxu0
        %v3239 = vadd.f32 %v3159, %v3238
        %3240 = vmatmul.f32.gmra.mxu0 %v3177
        %v3241 = vpop.f32.mrf.mxu0
        %v3242 = vadd.f32 %v3159, %v3241
        %3243 = vmatmul.f32.gmra.mxu0 %v3180
        %v3244 = vpop.f32.mrf.mxu0
        %v3245 = vadd.f32 %v3159, %v3244
        %3246 = vmatmul.f32.gmra.mxu0 %v3183
        %v3247 = vpop.f32.mrf.mxu0
        %v3248 = vadd.f32 %v3159, %v3247
        %3249 = vmatmul.f32.gmra.mxu0 %v3186
        %v3250 = vpop.f32.mrf.mxu0
        %v3251 = vadd.f32 %v3159, %v3250
        %3252 = vmatmul.f32.gmra.mxu0 %v3189
        %v3253 = vpop.f32.mrf.mxu0
        %v3254 = vadd.f32 %v3159, %v3253
        %3255 = vmatmul.f32.gmra.mxu0 %v3192
        %v3256 = vpop.f32.mrf.mxu0
        %v3257 = vadd.f32 %v3159, %v3256
        %3258 = vmatmul.f32.gmra.mxu0 %v3195
        %v3259 = vpop.f32.mrf.mxu0
        %v3260 = vadd.f32 %v3159, %v3259
        %3261 = vmatmul.f32.gmra.mxu0 %v3198
        %v3262 = vpop.f32.mrf.mxu0
        %v3263 = vadd.f32 %v3159, %v3262
        %3264 = vmatmul.f32.gmra.mxu0 %v3201
        %v3265 = vpop.f32.mrf.mxu0
        %v3266 = vadd.f32 %v3159, %v3265
        %3267 = vmatmul.f32.gmra.mxu0 %v3204
        %v3268 = vpop.f32.mrf.mxu0
        %v3269 = vadd.f32 %v3159, %v3268
        %3270 = vmatmul.f32.gmra.mxu0 %v3207
        %v3271 = vpop.f32.mrf.mxu0
        %v3272 = vadd.f32 %v3159, %v3271
        %3273 = vdwg.mxu0
        %v3274 = vmax.f32 %v3227, 0.0
        %v3275 = vmax.f32 %v3230, 0.0
        %v3276 = vmax.f32 %v3233, 0.0
        %v3277 = vmax.f32 %v3236, 0.0
        %v3278 = vmax.f32 %v3239, 0.0
        %v3279 = vmax.f32 %v3242, 0.0
        %v3280 = vmax.f32 %v3245, 0.0
        %v3281 = vmax.f32 %v3248, 0.0
        %v3282 = vmax.f32 %v3251, 0.0
        %v3283 = vmax.f32 %v3254, 0.0
        %v3284 = vmax.f32 %v3257, 0.0
        %v3285 = vmax.f32 %v3260, 0.0
        %v3286 = vmax.f32 %v3263, 0.0
        %v3287 = vmax.f32 %v3266, 0.0
        %v3288 = vmax.f32 %v3269, 0.0
        %v3289 = vmax.f32 %v3272, 0.0
        %s3290 = scalar_lea.vmem [#allocation7], 384
        %v3291 = vld [vmem:[%s3290] sm:$0xff]
        %v3292 = vld [vmem:[%s3290 + $0x8] sm:$0xff]
        %v3293 = vld [vmem:[%s3290 + $0x10] sm:$0xff]
        %v3294 = vld [vmem:[%s3290 + $0x18] sm:$0xff]
        %v3295 = vld [vmem:[%s3290 + $0x20] sm:$0xff]
        %v3296 = vld [vmem:[%s3290 + $0x28] sm:$0xff]
        %v3297 = vld [vmem:[%s3290 + $0x30] sm:$0xff]
        %v3298 = vld [vmem:[%s3290 + $0x38] sm:$0xff]
        %s3299 = scalar_lea.vmem [#allocation9], 6
        %v3300 = vld [vmem:[%s3299] sm:$0x1]
        %v3302 = vperm.slane %v3300, 0
        %v3305 = vsel %vm868, %v3274, 0
        %v3308 = vsel %vm868, %v3275, 0
        %v3311 = vsel %vm868, %v3276, 0
        %v3314 = vsel %vm868, %v3277, 0
        %v3317 = vsel %vm868, %v3278, 0
        %v3320 = vsel %vm868, %v3279, 0
        %v3323 = vsel %vm868, %v3280, 0
        %v3326 = vsel %vm868, %v3281, 0
        %v3329 = vsel %vm868, %v3282, 0
        %v3332 = vsel %vm868, %v3283, 0
        %v3335 = vsel %vm868, %v3284, 0
        %v3338 = vsel %vm868, %v3285, 0
        %v3341 = vsel %vm868, %v3286, 0
        %v3344 = vsel %vm868, %v3287, 0
        %v3347 = vsel %vm868, %v3288, 0
        %v3350 = vsel %vm868, %v3289, 0
        %3352 = vmatpush.msra.mxu0 0.0
        %3353 = vmatpush.msra.mxu0 0.0
        %3354 = vmatpush.msra.mxu0 0.0
        %3355 = vmatpush.msra.mxu0 0.0
        %3356 = vmatpush.msra.mxu0 0.0
        %3357 = vmatpush.msra.mxu0 0.0
        %3358 = vmatpush.msra.mxu0 0.0
        %3359 = vmatpush.msra.mxu0 0.0
        %3360 = vmatpush.msra.mxu0 %v3298
        %3361 = vmatpush.msra.mxu0 %v3297
        %3362 = vmatpush.msra.mxu0 %v3296
        %3363 = vmatpush.msra.mxu0 %v3295
        %3364 = vmatpush.msra.mxu0 %v3294
        %3365 = vmatpush.msra.mxu0 %v3293
        %3366 = vmatpush.msra.mxu0 %v3292
        %3367 = vmatpush.msra.mxu0 %v3291
        %3368 = vmatmul.f32.gmra.mxu0 %v3305
        %v3369 = vpop.f32.mrf.mxu0
        %v3370 = vadd.f32 %v3302, %v3369
        %3371 = vmatmul.f32.gmra.mxu0 %v3308
        %v3372 = vpop.f32.mrf.mxu0
        %v3373 = vadd.f32 %v3302, %v3372
        %3374 = vmatmul.f32.gmra.mxu0 %v3311
        %v3375 = vpop.f32.mrf.mxu0
        %v3376 = vadd.f32 %v3302, %v3375
        %3377 = vmatmul.f32.gmra.mxu0 %v3314
        %v3378 = vpop.f32.mrf.mxu0
        %v3379 = vadd.f32 %v3302, %v3378
        %3380 = vmatmul.f32.gmra.mxu0 %v3317
        %v3381 = vpop.f32.mrf.mxu0
        %v3382 = vadd.f32 %v3302, %v3381
        %3383 = vmatmul.f32.gmra.mxu0 %v3320
        %v3384 = vpop.f32.mrf.mxu0
        %v3385 = vadd.f32 %v3302, %v3384
        %3386 = vmatmul.f32.gmra.mxu0 %v3323
        %v3387 = vpop.f32.mrf.mxu0
        %v3388 = vadd.f32 %v3302, %v3387
        %3389 = vmatmul.f32.gmra.mxu0 %v3326
        %v3390 = vpop.f32.mrf.mxu0
        %v3391 = vadd.f32 %v3302, %v3390
        %3392 = vmatmul.f32.gmra.mxu0 %v3329
        %v3393 = vpop.f32.mrf.mxu0
        %v3394 = vadd.f32 %v3302, %v3393
        %3395 = vmatmul.f32.gmra.mxu0 %v3332
        %v3396 = vpop.f32.mrf.mxu0
        %v3397 = vadd.f32 %v3302, %v3396
        %3398 = vmatmul.f32.gmra.mxu0 %v3335
        %v3399 = vpop.f32.mrf.mxu0
        %v3400 = vadd.f32 %v3302, %v3399
        %3401 = vmatmul.f32.gmra.mxu0 %v3338
        %v3402 = vpop.f32.mrf.mxu0
        %v3403 = vadd.f32 %v3302, %v3402
        %3404 = vmatmul.f32.gmra.mxu0 %v3341
        %v3405 = vpop.f32.mrf.mxu0
        %v3406 = vadd.f32 %v3302, %v3405
        %3407 = vmatmul.f32.gmra.mxu0 %v3344
        %v3408 = vpop.f32.mrf.mxu0
        %v3409 = vadd.f32 %v3302, %v3408
        %3410 = vmatmul.f32.gmra.mxu0 %v3347
        %v3411 = vpop.f32.mrf.mxu0
        %v3412 = vadd.f32 %v3302, %v3411
        %3413 = vmatmul.f32.gmra.mxu0 %v3350
        %v3414 = vpop.f32.mrf.mxu0
        %v3415 = vadd.f32 %v3302, %v3414
        %3416 = vdwg.mxu0
        %v3417 = vmax.f32 %v3370, 0.0
        %v3418 = vmax.f32 %v3373, 0.0
        %v3419 = vmax.f32 %v3376, 0.0
        %v3420 = vmax.f32 %v3379, 0.0
        %v3421 = vmax.f32 %v3382, 0.0
        %v3422 = vmax.f32 %v3385, 0.0
        %v3423 = vmax.f32 %v3388, 0.0
        %v3424 = vmax.f32 %v3391, 0.0
        %v3425 = vmax.f32 %v3394, 0.0
        %v3426 = vmax.f32 %v3397, 0.0
        %v3427 = vmax.f32 %v3400, 0.0
        %v3428 = vmax.f32 %v3403, 0.0
        %v3429 = vmax.f32 %v3406, 0.0
        %v3430 = vmax.f32 %v3409, 0.0
        %v3431 = vmax.f32 %v3412, 0.0
        %v3432 = vmax.f32 %v3415, 0.0
        %v3433 = vld [vmem:[%s15] sm:$0xff]
        %v3434 = vld [vmem:[%s15 + $0x8] sm:$0xff]
        %v3435 = vld [vmem:[%s15 + $0x10] sm:$0xff]
        %v3436 = vld [vmem:[%s15 + $0x18] sm:$0xff]
        %v3437 = vld [vmem:[%s15 + $0x20] sm:$0xff]
        %v3438 = vld [vmem:[%s15 + $0x28] sm:$0xff]
        %v3439 = vld [vmem:[%s15 + $0x30] sm:$0xff]
        %v3440 = vld [vmem:[%s15 + $0x38] sm:$0xff]
        %v3441 = vld [vmem:[#allocation12] sm:$0x1]
        %v3443 = vperm.slane %v3441, 0
        %v3446 = vsel %vm868, %v3417, 0
        %v3449 = vsel %vm868, %v3418, 0
        %v3452 = vsel %vm868, %v3419, 0
        %v3455 = vsel %vm868, %v3420, 0
        %v3458 = vsel %vm868, %v3421, 0
        %v3461 = vsel %vm868, %v3422, 0
        %v3464 = vsel %vm868, %v3423, 0
        %v3467 = vsel %vm868, %v3424, 0
        %v3470 = vsel %vm868, %v3425, 0
        %v3473 = vsel %vm868, %v3426, 0
        %v3476 = vsel %vm868, %v3427, 0
        %v3479 = vsel %vm868, %v3428, 0
        %v3482 = vsel %vm868, %v3429, 0
        %v3485 = vsel %vm868, %v3430, 0
        %v3488 = vsel %vm868, %v3431, 0
        %v3491 = vsel %vm868, %v3432, 0
        %3493 = vmatpush.msra.mxu0 0.0
        %3494 = vmatpush.msra.mxu0 0.0
        %3495 = vmatpush.msra.mxu0 0.0
        %3496 = vmatpush.msra.mxu0 0.0
        %3497 = vmatpush.msra.mxu0 0.0
        %3498 = vmatpush.msra.mxu0 0.0
        %3499 = vmatpush.msra.mxu0 0.0
        %3500 = vmatpush.msra.mxu0 0.0
        %3501 = vmatpush.msra.mxu0 %v3440
        %3502 = vmatpush.msra.mxu0 %v3439
        %3503 = vmatpush.msra.mxu0 %v3438
        %3504 = vmatpush.msra.mxu0 %v3437
        %3505 = vmatpush.msra.mxu0 %v3436
        %3506 = vmatpush.msra.mxu0 %v3435
        %3507 = vmatpush.msra.mxu0 %v3434
        %3508 = vmatpush.msra.mxu0 %v3433
        %3509 = vmatmul.f32.gmra.mxu0 %v3446
        %v3510 = vpop.f32.mrf.mxu0
        %v3511 = vadd.f32 %v3443, %v3510
        %3512 = vmatmul.f32.gmra.mxu0 %v3449
        %v3513 = vpop.f32.mrf.mxu0
        %v3514 = vadd.f32 %v3443, %v3513
        %3515 = vmatmul.f32.gmra.mxu0 %v3452
        %v3516 = vpop.f32.mrf.mxu0
        %v3517 = vadd.f32 %v3443, %v3516
        %3518 = vmatmul.f32.gmra.mxu0 %v3455
        %v3519 = vpop.f32.mrf.mxu0
        %v3520 = vadd.f32 %v3443, %v3519
        %3521 = vmatmul.f32.gmra.mxu0 %v3458
        %v3522 = vpop.f32.mrf.mxu0
        %v3523 = vadd.f32 %v3443, %v3522
        %3524 = vmatmul.f32.gmra.mxu0 %v3461
        %v3525 = vpop.f32.mrf.mxu0
        %v3526 = vadd.f32 %v3443, %v3525
        %3527 = vmatmul.f32.gmra.mxu0 %v3464
        %v3528 = vpop.f32.mrf.mxu0
        %v3529 = vadd.f32 %v3443, %v3528
        %3530 = vmatmul.f32.gmra.mxu0 %v3467
        %v3531 = vpop.f32.mrf.mxu0
        %v3532 = vadd.f32 %v3443, %v3531
        %3533 = vmatmul.f32.gmra.mxu0 %v3470
        %v3534 = vpop.f32.mrf.mxu0
        %v3535 = vadd.f32 %v3443, %v3534
        %3536 = vmatmul.f32.gmra.mxu0 %v3473
        %v3537 = vpop.f32.mrf.mxu0
        %v3538 = vadd.f32 %v3443, %v3537
        %3539 = vmatmul.f32.gmra.mxu0 %v3476
        %v3540 = vpop.f32.mrf.mxu0
        %v3541 = vadd.f32 %v3443, %v3540
        %3542 = vmatmul.f32.gmra.mxu0 %v3479
        %v3543 = vpop.f32.mrf.mxu0
        %v3544 = vadd.f32 %v3443, %v3543
        %3545 = vmatmul.f32.gmra.mxu0 %v3482
        %v3546 = vpop.f32.mrf.mxu0
        %v3547 = vadd.f32 %v3443, %v3546
        %3548 = vmatmul.f32.gmra.mxu0 %v3485
        %v3549 = vpop.f32.mrf.mxu0
        %v3550 = vadd.f32 %v3443, %v3549
        %3551 = vmatmul.f32.gmra.mxu0 %v3488
        %v3552 = vpop.f32.mrf.mxu0
        %v3553 = vadd.f32 %v3443, %v3552
        %3554 = vmatmul.f32.gmra.mxu0 %v3491
        %v3555 = vpop.f32.mrf.mxu0
        %v3556 = vadd.f32 %v3443, %v3555
        %3557 = vdwg.mxu0
        %3558 = vst [vmem:[%s693] sm:$0xff] %v3511
        %3559 = vst [vmem:[%s693 + $0x8] sm:$0xff] %v3514
        %3560 = vst [vmem:[%s693 + $0x10] sm:$0xff] %v3517
        %3561 = vst [vmem:[%s693 + $0x18] sm:$0xff] %v3520
        %3562 = vst [vmem:[%s693 + $0x20] sm:$0xff] %v3523
        %3563 = vst [vmem:[%s693 + $0x28] sm:$0xff] %v3526
        %3564 = vst [vmem:[%s693 + $0x30] sm:$0xff] %v3529
        %3565 = vst [vmem:[%s693 + $0x38] sm:$0xff] %v3532
        %3566 = vst [vmem:[%s693 + $0x40] sm:$0xff] %v3535
        %3567 = vst [vmem:[%s693 + $0x48] sm:$0xff] %v3538
        %3568 = vst [vmem:[%s693 + $0x50] sm:$0xff] %v3541
        %3569 = vst [vmem:[%s693 + $0x58] sm:$0xff] %v3544
        %3570 = vst [vmem:[%s693 + $0x60] sm:$0xff] %v3547
        %3571 = vst [vmem:[%s693 + $0x68] sm:$0xff] %v3550
        %3572 = vst [vmem:[%s693 + $0x70] sm:$0xff] %v3553
        %3573 = vst [vmem:[%s693 + $0x78] sm:$0xff] %v3556
        %s3574 = smul.u32 16, %s34
        %p3575 = scmp.lt.s32.totalorder %s3574, 31
        %s3576 = scalar_select %p3575, %s3574, 31
        %s3577 = smul.addr %s3576, 8
        %s3578 = scalar_lea.vmem %s17, %s3577
        %s3579 = smul.u32 16, %s34
        %p3580 = scmp.lt.s32.totalorder %s3579, 31
        %s3581 = scalar_select %p3580, %s3579, 31
        %s3582 = smul.addr %s3581, 8
        %s3583 = scalar_lea.vmem %s18, %s3582
        // Predicated region
        $region117: #{run_fused.1} parent=87 // pred_check
          %p3584 = pneg %p414
        $region118: #{run_fused.1} parent=87 // pred_check_branch
          %3586 = sbr.rel (%p3584) target = $region120
        $region119: #{run_fused.1} parent=87 // pred_region
          %s3587 = smul.u32 16, %s34
        $region120: #{run_fused.1} parent=87 // pred_fallthru
          _
        // Predicated region
        $region121: #{run_fused.1} parent=87 // pred_check
          %p3588 = pneg %p440
        $region122: #{run_fused.1} parent=87 // pred_check_branch
          %3590 = sbr.rel (%p3588) target = $region124
        $region123: #{run_fused.1} parent=87 // pred_region
          %s3591 = smul.u32 16, %s34
        $region124: #{run_fused.1} parent=87 // pred_fallthru
          _
      $region88: #{run_fused.1} parent=5 // pred_fallthru
        _
      %p3592 = scmp.le.s32.totalorder 2, %s29
      // Predicated region
      $region125: #{run_fused.1} parent=5 // pred_check
        %p3593 = pneg %p3592
      $region126: #{run_fused.1} parent=5 // pred_check_branch
        %3595 = sbr.rel (%p3593) target = $region128
      $region127: #{run_fused.1} parent=5 // pred_region
        %s3596 = ssub.s32 %s29, 2
        // Predicated region
        $region129: #{run_fused.1} parent=127 // pred_check
          %p3597 = pneg %p420
        $region130: #{run_fused.1} parent=127 // pred_check_branch
          %3599 = sbr.rel (%p3597) target = $region132
        $region131: #{run_fused.1} parent=127 // pred_region
          %s3600 = smul.u32 16, %s35
          %p3601 = scmp.lt.s32.totalorder %s3600, 31
          %s3602 = scalar_select %p3601, %s3600, 31
          %s3603 = smul.addr %s3602, 8
          %s3604 = scalar_lea.vmem %s17, %s3603
        $region132: #{run_fused.1} parent=127 // pred_fallthru
          _
        // Predicated region
        $region133: #{run_fused.1} parent=127 // pred_check
          %p3605 = pneg %p446
        $region134: #{run_fused.1} parent=127 // pred_check_branch
          %3607 = sbr.rel (%p3605) target = $region136
        $region135: #{run_fused.1} parent=127 // pred_region
          %s3608 = smul.u32 16, %s35
          %p3609 = scmp.lt.s32.totalorder %s3608, 31
          %s3610 = scalar_select %p3609, %s3608, 31
          %s3611 = smul.addr %s3610, 8
          %s3612 = scalar_lea.vmem %s18, %s3611
        $region136: #{run_fused.1} parent=127 // pred_fallthru
          _
      $region128: #{run_fused.1} parent=5 // pred_fallthru
        _
    $region6: #{run_fused.1} parent=1 // loop_footer
      %s33 = sadd.s32 1, %s29
    $region7: #{run_fused.1} parent=1 // loop_footer_branch
      %28 = sbr.rel target = $region3
    $region8: #{run_fused.1} parent=1 // loop_exit
      _
    %3613 = vsyncpa [#allocation3], 1
    %s3614 = scalar_lea.sflag [#allocation3], 1
    %3615 = vsyncpa %s3614, 1
    %3616 = vsyncpa [#allocation5], 1
    %3617 = vsyncpa [#allocation8], 1
    %3618 = vsyncpa [#allocation11], 1

</llo_original>
